<compile_context>
chip_gen: v6e
topology: v6e:2x2x1
jax: 0.10.0
libtpu: 0.0.40
codegen_flags: <defaults>
</compile_context>

<pallas_src>
import jax
import jax.numpy as jnp
import numpy as np
from jax.experimental import pallas as pl
from jax.experimental.pallas import tpu as pltpu

EPS = 1e-5  # torch GroupNorm default eps
N_DYN_PARAMS = 64 + 64 + 8 + 8 + 8 + 1  # sum(weight_nums + bias_nums) = 153


def _tpu_vmem_capacity_bytes():
    try:
        return int(pltpu.get_tpu_info().vmem_capacity_bytes)
    except Exception:
        return 128 * 1024 * 1024


def _choose_tiling(V, target):
    """Return (TV, V_pad): TV a multiple of 128, V_pad a multiple of TV (>= V)."""
    target = max(128, (target // 128) * 128)
    if V % 128 == 0 and V <= target:
        return V, V                       # single tile, no padding
    t = min(target, (V // 128) * 128)
    while t >= 128:
        if V % t == 0:
            return t, V                   # exact 128-multiple divisor of V
        t -= 128
    # no 128-multiple tile divides V: pad the voxel axis instead of blowing up VMEM
    tv = min(target, -(-V // 128) * 128)
    v_pad = -(-V // tv) * tv
    return tv, v_pad


# --------------------------------------------------------------------------
# Kernel 1: GAP head + controller (V-independent, per-batch grid step)
# Column-oriented: voxels lane-dense, no in-kernel transposes / concats.
# --------------------------------------------------------------------------
def _gap_ctrl_kernel(x_ds_ref, wb_dec_ref, bb_dec_ref,
                     gap_gamma_ref, gap_beta_ref, gap_w_ref, gap_b_ref,
                     gmap_ref, gmap_t_ref,
                     emb_t_ref, ctrl_wa_ref, ctrl_wb_ref, ctrl_b_ref,
                     params_ref):
    # backbone stub: pooled image -> dec4 (512 ch) via 1x1x1 conv + ReLU
    xd = x_ds_ref[0]                                                    # [Cin, V2]
    dec4 = jnp.maximum(
        jnp.dot(wb_dec_ref[...], xd, preferred_element_type=jnp.float32)
        + bb_dec_ref[...], 0.0)                                         # [512, V2]

    # GAP: GroupNorm(16,512) -> ReLU -> AdaptiveAvgPool(1) -> Conv3d(512,256,1)
    v2 = dec4.shape[1]
    denom = 32.0 * float(v2)                                            # 512/16 * V2
    s1 = jnp.sum(dec4, axis=1, keepdims=True)                           # [512, 1]
    s2 = jnp.sum(dec4 * dec4, axis=1, keepdims=True)
    gm = jnp.dot(gmap_ref[...], s1, preferred_element_type=jnp.float32) / denom     # [16,1]
    gm2 = jnp.dot(gmap_ref[...], s2, preferred_element_type=jnp.float32) / denom
    gvar = jnp.maximum(gm2 - gm * gm, 0.0)
    ginv = jax.lax.rsqrt(gvar + EPS)
    mean_c = jnp.dot(gmap_t_ref[...], gm, preferred_element_type=jnp.float32)       # [512,1]
    inv_c = jnp.dot(gmap_t_ref[...], ginv, preferred_element_type=jnp.float32)
    gn = jnp.maximum((dec4 - mean_c) * inv_c * gap_gamma_ref[...] + gap_beta_ref[...], 0.0)
    pooled = jnp.mean(gn, axis=1, keepdims=True)                        # [512, 1]
    x_feat = jnp.dot(gap_w_ref[...], pooled,
                     preferred_element_type=jnp.float32) + gap_b_ref[...]            # [256, 1]

    # controller Conv3d(512,153,1), split into x_feat part + embedding part
    part_a = jnp.dot(ctrl_wa_ref[...], x_feat, preferred_element_type=jnp.float32)   # [153, 1]
    part_b = jnp.dot(ctrl_wb_ref[...], emb_t_ref[...],
                     preferred_element_type=jnp.float32)                              # [153, cls]
    params_ref[0] = part_a + part_b + ctrl_b_ref[...]                                 # [153, cls]


# --------------------------------------------------------------------------
# Kernel 2: GroupNorm(16,64) statistics (pass 1) — grid (B, V_tiles)
# Recomputes feat per tile from x, accumulates per-channel sum / sum^2.
# --------------------------------------------------------------------------
def _make_stats_kernel(tv, v_valid, masked):
    def _stats_kernel(x_ref, wb_ref, bb_ref, s1_ref, s2_ref):
        @pl.when(pl.program_id(1) == 0)
        def _():
            s1_ref[...] = jnp.zeros_like(s1_ref)
            s2_ref[...] = jnp.zeros_like(s2_ref)

        x = x_ref[0]                                                    # [Cin, TV] (bf16/f32)
        feat = jnp.maximum(
            jnp.dot(wb_ref[...], x, preferred_element_type=jnp.float32) + bb_ref[...],
            0.0)                                                        # [64, TV] f32
        if masked:  # zero out padded voxels (only ever the tail tile)
            idx = (jax.lax.broadcasted_iota(jnp.int32, (1, tv), 1)
                   + pl.program_id(1) * tv)
            feat = feat * (idx < v_valid).astype(jnp.float32)
        s1_ref[0] += jnp.sum(feat, axis=1, keepdims=True)               # [64, 1]
        s2_ref[0] += jnp.sum(feat * feat, axis=1, keepdims=True)        # [64, 1]
    return _stats_kernel


# --------------------------------------------------------------------------
# Kernel 3: folded precls_conv + block-diagonal dynamic heads (pass 2)
# grid (B, V_tiles); 3 MXU stages (K = 64 / 32 / 32), bf16 operands.
# --------------------------------------------------------------------------
def _heads_kernel(x_ref, wb_ref, bb_ref, scale_ref, shift_ref,
                  wd0_ref, wd1_ref, wd2_ref, bd0_ref, bd1_ref, bd2_ref,
                  seg_ref):
    x = x_ref[0]                                                        # [Cin, TV]
    cd = x.dtype                                                        # MXU compute dtype
    feat = jnp.maximum(
        jnp.dot(wb_ref[...], x, preferred_element_type=jnp.float32) + bb_ref[...],
        0.0)                                                            # [64, TV] f32

    # GroupNorm(16,64) via precomputed per-channel scale/shift, then ReLU (f32 VPU)
    gn = jnp.maximum(feat * scale_ref[0] + shift_ref[0], 0.0)

    # layer 0 (precls_conv folded in), layer 1, layer 2 of the dynamic heads
    h = jnp.maximum(
        jnp.dot(wd0_ref[0], gn.astype(cd), preferred_element_type=jnp.float32)
        + bd0_ref[0], 0.0)                                              # [cls*8, TV]
    h = jnp.maximum(
        jnp.dot(wd1_ref[0], h.astype(cd), preferred_element_type=jnp.float32)
        + bd1_ref[0], 0.0)                                              # [cls*8, TV]
    seg_ref[0] = (jnp.dot(wd2_ref[0], h.astype(cd), preferred_element_type=jnp.float32)
                  + bd2_ref[0])                                         # [cls, TV]


# --------------------------------------------------------------------------
# Parameter init (deterministic, mirrors module __init__ shapes)
# --------------------------------------------------------------------------
def init_params(key, in_channels, class_num=4):
    ks = jax.random.split(key, 10)
    p = {}
    # backbone stub: image -> out (64 ch), pooled image -> dec4 (512 ch)
    p['wb_out'] = jax.random.normal(ks[0], (64, in_channels), jnp.float32) * 0.1
    p['bb_out'] = jnp.zeros((64, 1), jnp.float32)
    p['wb_dec'] = jax.random.normal(ks[1], (512, in_channels), jnp.float32) * 0.1
    p['bb_dec'] = jnp.zeros((512, 1), jnp.float32)
    # GAP = GroupNorm(16,512) + ReLU + AdaptiveAvgPool3d(1) + Conv3d(512,256,1)
    p['gap_gamma'] = jnp.ones((512, 1), jnp.float32)
    p['gap_beta'] = jnp.zeros((512, 1), jnp.float32)
    p['gap_w'] = jax.random.normal(ks[2], (256, 512), jnp.float32) * 0.05
    p['gap_b'] = jax.random.normal(ks[3], (256, 1), jnp.float32) * 0.05
    # precls_conv = GroupNorm(16,64) + ReLU + Conv3d(64,8,1)
    p['pre_gamma'] = jnp.ones((64, 1), jnp.float32)
    p['pre_beta'] = jnp.zeros((64, 1), jnp.float32)
    p['pre_w'] = jax.random.normal(ks[4], (8, 64), jnp.float32) * 0.1
    p['pre_b'] = jax.random.normal(ks[5], (8, 1), jnp.float32) * 0.1
    # controller = Conv3d(512, 153, 1)
    p['ctrl_w'] = jax.random.normal(ks[6], (N_DYN_PARAMS, 512), jnp.float32) * 0.05
    p['ctrl_b'] = jax.random.normal(ks[7], (N_DYN_PARAMS, 1), jnp.float32) * 0.05
    # organ_embedding = nn.Embedding(out_channels=class_num, 256)
    p['emb'] = jax.random.normal(ks[8], (class_num, 256), jnp.float32) * 0.5
    # group-assignment matrices for GroupNorm(16,512) reductions via matmul
    g512 = np.zeros((16, 512), np.float32)
    for g in range(16):
        g512[g, g * 32:(g + 1) * 32] = 1.0
    p['gmap512'] = jnp.asarray(g512)
    p['gmap512t'] = jnp.asarray(g512.T)
    return p


# --------------------------------------------------------------------------
# Forward wrapper (glue in plain JAX, hot paths in the three Pallas kernels)
# --------------------------------------------------------------------------
def forward(p, image, class_num=4, ds=8, tv_target=None, use_bf16=True):
    B, Cin, D, H, W = image.shape
    V = D * H * W
    cls = class_num
    image = image.astype(jnp.float32)

    # backbone stub inputs: downsampled image feeds the dec4 (512-ch) path
    dsd = ds if D % ds == 0 else 1
    dsh = ds if H % ds == 0 else 1
    dsw = ds if W % ds == 0 else 1
    x_ds = image.reshape(B, Cin, D // dsd, dsd, H // dsh, dsh,
                         W // dsw, dsw).mean(axis=(3, 5, 7))
    V2 = (D // dsd) * (H // dsh) * (W // dsw)
    x_ds = x_ds.reshape(B, Cin, V2)                       # voxels on the lane axis

    # ---- voxel tiling: big tiles + explicit VMEM budget --------------------
    vmem_cap = _tpu_vmem_capacity_bytes()
    if tv_target is None:
        # large tiles amortize the ~0.35us per-grid-step cost; cap lower on
        # v7x (64 MiB VMEM) than on v5e/v6e (128 MiB).
        tv_target = 16384 if vmem_cap >= 100 * 1024 * 1024 else 8192
    vmem_limit = int(min(vmem_cap * 3 // 4, 100 * 1024 * 1024))
    TV, V_pad = _choose_tiling(V, tv_target)
    nV = V_pad // TV
    pad = V_pad - V

    compute_dtype = jnp.bfloat16 if use_bf16 else jnp.float32
    x_flat = image.reshape(B, Cin, V)
    if pad:
        x_flat = jnp.pad(x_flat, ((0, 0), (0, 0), (0, pad)))
    x_flat_c = x_flat.astype(compute_dtype)               # halves the (double) HBM read of x
    wb_out_c = p['wb_out'].astype(compute_dtype)

    def const(shape):
        return pl.BlockSpec(shape, lambda *args, _n=len(shape): (0,) * _n)

    # ---- Kernel 1: GAP + controller (tiny, per batch) ----------------------
    # TODO(synk): for very large volumes V2 should be tiled inside this kernel
    # (dec4/gn are [512, V2] f32 slabs); fine for V2 = V/512 at these sizes.
    ctrl_wa = p['ctrl_w'][:, :256]
    ctrl_wb = p['ctrl_w'][:, 256:]
    emb_t = p['emb'].T
    params_col = pl.pallas_call(
        _gap_ctrl_kernel,
        out_shape=jax.ShapeDtypeStruct((B, N_DYN_PARAMS, cls), jnp.float32),
        grid=(B,),
        in_specs=[
            pl.BlockSpec((1, Cin, V2), lambda b: (b, 0, 0)),
            const((512, Cin)), const((512, 1)),
            const((512, 1)), const((512, 1)),
            const((256, 512)), const((256, 1)),
            const((16, 512)), const((512, 16)),
            const((256, cls)),
            const((N_DYN_PARAMS, 256)), const((N_DYN_PARAMS, 256)),
            const((N_DYN_PARAMS, 1)),
        ],
        out_specs=pl.BlockSpec((1, N_DYN_PARAMS, cls), lambda b: (b, 0, 0)),
        compiler_params=pltpu.CompilerParams(dimension_semantics=("parallel",)),
    )(x_ds, p['wb_dec'], p['bb_dec'],
      p['gap_gamma'], p['gap_beta'], p['gap_w'], p['gap_b'],
      p['gmap512'], p['gmap512t'],
      emb_t, ctrl_wa, ctrl_wb, p['ctrl_b'])
    params = params_col.transpose(0, 2, 1)                               # [B, cls, 153]

    # ---- Kernel 2: GroupNorm(16,64) stats over V tiles (pass 1) ------------
    # TODO(synk): for B=1 on v7x (2 TensorCores) add a leading 'parallel' V-split
    # axis so both cores participate in this reduction.
    s1_acc, s2_acc = pl.pallas_call(
        _make_stats_kernel(TV, V, pad > 0),
        out_shape=(jax.ShapeDtypeStruct((B, 64, 1), jnp.float32),
                   jax.ShapeDtypeStruct((B, 64, 1), jnp.float32)),
        grid=(B, nV),
        in_specs=[
            pl.BlockSpec((1, Cin, TV), lambda b, v: (b, 0, v)),
            const((64, Cin)), const((64, 1)),
        ],
        out_specs=(pl.BlockSpec((1, 64, 1), lambda b, v: (b, 0, 0)),
                   pl.BlockSpec((1, 64, 1), lambda b, v: (b, 0, 0))),
        compiler_params=pltpu.CompilerParams(
            dimension_semantics=("parallel", "arbitrary"),
            vmem_limit_bytes=vmem_limit),
    )(x_flat_c, wb_out_c, p['bb_out'])

    # ---- tiny O(B*64) JAX glue: per-channel GN scale/shift ------------------
    s1 = s1_acc[:, :, 0]                                                 # [B, 64]
    s2 = s2_acc[:, :, 0]
    cnt = float((64 // 16) * V)                                          # real elems per group
    gmean = s1.reshape(B, 16, 4).sum(-1) / cnt
    gsq = s2.reshape(B, 16, 4).sum(-1) / cnt
    gvar = jnp.maximum(gsq - gmean * gmean, 0.0)
    ginv = jax.lax.rsqrt(gvar + EPS)
    mean_c = jnp.repeat(gmean, 4, axis=1)                                # [B, 64]
    inv_c = jnp.repeat(ginv, 4, axis=1)
    gamma = p['pre_gamma'].reshape(1, 64)
    beta = p['pre_beta'].reshape(1, 64)
    scale = (inv_c * gamma).reshape(B, 64, 1)
    shift = (beta - mean_c * inv_c * gamma).reshape(B, 64, 1)

    # ---- dynamic heads: fold precls_conv into layer 0, build block-diagonals
    # parse_dynamic_params: weight_nums=[64,64,8], bias_nums=[8,8,1]
    hp = dict(precision=jax.lax.Precision.HIGHEST)
    eye = jnp.eye(cls, dtype=jnp.float32)
    w0 = params[:, :, 0:64].reshape(B, cls * 8, 8)                       # stacked layer 0
    b0 = params[:, :, 136:144].reshape(B, cls * 8, 1)
    # exact fold (no nonlinearity between precls_conv and head layer 0):
    wd0 = jnp.einsum('bik,kj->bij', w0, p['pre_w'], **hp)                # [B, cls*8, 64]
    bd0 = jnp.einsum('bik,kl->bil', w0, p['pre_b'], **hp) + b0           # [B, cls*8, 1]
    w1b = params[:, :, 64:128].reshape(B, cls, 8, 8)
    wd1 = jnp.einsum('bgji,gh->bgjhi', w1b, eye).reshape(B, cls * 8, cls * 8)  # block-diag
    w2b = params[:, :, 128:136]                                          # [B, cls, 8]
    wd2 = jnp.einsum('bgi,gh->bghi', w2b, eye).reshape(B, cls, cls * 8)  # block-diag rows
    bd1 = params[:, :, 144:152].reshape(B, cls * 8, 1)
    bd2 = params[:, :, 152:153].reshape(B, cls, 1)
    wd0_c = wd0.astype(compute_dtype)
    wd1_c = wd1.astype(compute_dtype)
    wd2_c = wd2.astype(compute_dtype)

    # ---- Kernel 3: folded heads over V tiles (pass 2) -----------------------
    seg = pl.pallas_call(
        _heads_kernel,
        out_shape=jax.ShapeDtypeStruct((B, cls, V_pad), jnp.float32),
        grid=(B, nV),
        in_specs=[
            pl.BlockSpec((1, Cin, TV), lambda b, v: (b, 0, v)),
            const((64, Cin)), const((64, 1)),
            pl.BlockSpec((1, 64, 1), lambda b, v: (b, 0, 0)),
            pl.BlockSpec((1, 64, 1), lambda b, v: (b, 0, 0)),
            pl.BlockSpec((1, cls * 8, 64), lambda b, v: (b, 0, 0)),
            pl.BlockSpec((1, cls * 8, cls * 8), lambda b, v: (b, 0, 0)),
            pl.BlockSpec((1, cls, cls * 8), lambda b, v: (b, 0, 0)),
            pl.BlockSpec((1, cls * 8, 1), lambda b, v: (b, 0, 0)),
            pl.BlockSpec((1, cls * 8, 1), lambda b, v: (b, 0, 0)),
            pl.BlockSpec((1, cls, 1), lambda b, v: (b, 0, 0)),
        ],
        out_specs=pl.BlockSpec((1, cls, TV), lambda b, v: (b, 0, v)),
        compiler_params=pltpu.CompilerParams(
            dimension_semantics=("parallel", "parallel"),
            vmem_limit_bytes=vmem_limit),
    )(x_flat_c, wb_out_c, p['bb_out'], scale, shift,
      wd0_c, wd1_c, wd2_c, bd0, bd1, bd2)

    if pad:
        seg = seg[:, :, :V]
    return seg.reshape(B, cls, D, H, W)


# --------------------------------------------------------------------------
# Pure-JAX reference of the same math (for correctness check)
# --------------------------------------------------------------------------
def reference_forward(p, image, class_num=4, ds=8):
    hp = dict(precision=jax.lax.Precision.HIGHEST)
    B, Cin, D, H, W = image.shape
    V = D * H * W
    image = image.astype(jnp.float32)
    x_flat = image.reshape(B, Cin, V)
    dsd = ds if D % ds == 0 else 1
    dsh = ds if H % ds == 0 else 1
    dsw = ds if W % ds == 0 else 1
    x_ds = image.reshape(B, Cin, D // dsd, dsd, H // dsh, dsh,
                         W // dsw, dsw).mean(axis=(3, 5, 7)).reshape(B, Cin, -1)

    def groupnorm(x, gamma, beta, groups):
        C, S = x.shape
        xg = x.reshape(groups, -1)
        mean = xg.mean(axis=1, keepdims=True)
        var = ((xg - mean) ** 2).mean(axis=1, keepdims=True)
        xn = ((xg - mean) / jnp.sqrt(var + EPS)).reshape(C, S)
        return xn * gamma + beta

    segs = []
    for b in range(B):
        feat = jnp.maximum(jnp.dot(p['wb_out'], x_flat[b], **hp) + p['bb_out'], 0.0)
        dec4 = jnp.maximum(jnp.dot(p['wb_dec'], x_ds[b], **hp) + p['bb_dec'], 0.0)
        gn = jnp.maximum(groupnorm(dec4, p['gap_gamma'], p['gap_beta'], 16), 0.0)
        pooled = gn.mean(axis=1, keepdims=True)
        x_feat = jnp.dot(p['gap_w'], pooled, **hp) + p['gap_b']           # [256, 1]
        x_cond = jnp.concatenate(
            [jnp.broadcast_to(x_feat.T, (class_num, 256)), p['emb']], axis=1)  # [cls, 512]
        params = jnp.dot(x_cond, p['ctrl_w'].T, **hp) + p['ctrl_b'].T     # [cls, 153]
        gn_out = jnp.maximum(groupnorm(feat, p['pre_gamma'], p['pre_beta'], 16), 0.0)
        head = jnp.dot(p['pre_w'], gn_out, **hp) + p['pre_b']             # [8, V]
        cls_out = []
        for c in range(class_num):
            w0 = params[c, 0:64].reshape(8, 8)
            w1 = params[c, 64:128].reshape(8, 8)
            w2 = params[c, 128:136].reshape(1, 8)
            b0 = params[c, 136:144].reshape(8, 1)
            b1 = params[c, 144:152].reshape(8, 1)
            b2 = params[c, 152:153].reshape(1, 1)
            h = jnp.maximum(jnp.dot(w0, head, **hp) + b0, 0.0)
            h = jnp.maximum(jnp.dot(w1, h, **hp) + b1, 0.0)
            cls_out.append(jnp.dot(w2, h, **hp) + b2)
        segs.append(jnp.concatenate(cls_out, axis=0))
    return jnp.stack(segs, axis=0).reshape(B, class_num, D, H, W)


if __name__ == "__main__":
    key = jax.random.PRNGKey(0)
    kp, kx = jax.random.split(key)
    B, in_channels, D, H, W = 2, 4, 16, 16, 16
    class_num = 4  # == out_channels for rand_embedding

    params = init_params(kp, in_channels, class_num)
    image = jax.random.normal(kx, (B, in_channels, D, H, W), dtype=jnp.float32)

    # Fast path: bf16 MXU operands (default).
    seg = jax.block_until_ready(forward(params, image, class_num=class_num))
    assert seg.shape == (B, class_num, D, H, W)
    assert bool(jnp.all(jnp.isfinite(seg)))

    # Correctness path: f32 operands, checked tightly against an f32-HIGHEST reference.
    seg_f32 = jax.block_until_ready(
        forward(params, image, class_num=class_num, use_bf16=False))
    ref = reference_forward(params, image, class_num=class_num)
    np.testing.assert_allclose(np.asarray(seg_f32), np.asarray(ref), rtol=3e-2, atol=3e-2)

    # The bf16 fast path should track the f32 kernel to within bf16 matmul rounding.
    seg_np = np.asarray(seg)
    seg_f32_np = np.asarray(seg_f32)
    scale_ref = float(np.max(np.abs(seg_f32_np))) + 1.0
    assert float(np.max(np.abs(seg_np - seg_f32_np))) < 5e-2 * scale_ref

    print("KERNEL_OK")
</pallas_src>

<mosaic_0001>
module attributes {stable_mosaic.version = 11 : i64} {
  func.func @_gap_ctrl_kernel(%arg0: i32, %arg1: memref<1x4x8xf32, #tpu.memory_space<vmem>>, %arg2: memref<512x4xf32, #tpu.memory_space<vmem>>, %arg3: memref<512x1xf32, #tpu.memory_space<vmem>>, %arg4: memref<512x1xf32, #tpu.memory_space<vmem>>, %arg5: memref<512x1xf32, #tpu.memory_space<vmem>>, %arg6: memref<256x512xf32, #tpu.memory_space<vmem>>, %arg7: memref<256x1xf32, #tpu.memory_space<vmem>>, %arg8: memref<16x512xf32, #tpu.memory_space<vmem>>, %arg9: memref<512x16xf32, #tpu.memory_space<vmem>>, %arg10: memref<256x4xf32, #tpu.memory_space<vmem>>, %arg11: memref<153x256xf32, #tpu.memory_space<vmem>>, %arg12: memref<153x256xf32, #tpu.memory_space<vmem>>, %arg13: memref<153x1xf32, #tpu.memory_space<vmem>>, %arg14: memref<1x153x4xf32, #tpu.memory_space<vmem>>) attributes {dimension_semantics = [#tpu.dimension_semantics<parallel>], iteration_bounds = array<i64: 2>, scalar_prefetch = 0 : i64, scratch_operands = 0 : i64, tpu.core_type = #tpu.core_type<tc>, window_params = [{transform_indices = @transform_0, window_bounds = array<i64: 1, 4, 8>}, {pipeline_mode = #tpu.pipeline_mode<synchronous>, transform_indices = @transform_1, window_bounds = array<i64: 512, 4>}, {pipeline_mode = #tpu.pipeline_mode<synchronous>, transform_indices = @transform_2, window_bounds = array<i64: 512, 1>}, {pipeline_mode = #tpu.pipeline_mode<synchronous>, transform_indices = @transform_3, window_bounds = array<i64: 512, 1>}, {pipeline_mode = #tpu.pipeline_mode<synchronous>, transform_indices = @transform_4, window_bounds = array<i64: 512, 1>}, {pipeline_mode = #tpu.pipeline_mode<synchronous>, transform_indices = @transform_5, window_bounds = array<i64: 256, 512>}, {pipeline_mode = #tpu.pipeline_mode<synchronous>, transform_indices = @transform_6, window_bounds = array<i64: 256, 1>}, {pipeline_mode = #tpu.pipeline_mode<synchronous>, transform_indices = @transform_7, window_bounds = array<i64: 16, 512>}, {pipeline_mode = #tpu.pipeline_mode<synchronous>, transform_indices = @transform_8, window_bounds = array<i64: 512, 16>}, {pipeline_mode = #tpu.pipeline_mode<synchronous>, transform_indices = @transform_9, window_bounds = array<i64: 256, 4>}, {pipeline_mode = #tpu.pipeline_mode<synchronous>, transform_indices = @transform_10, window_bounds = array<i64: 153, 256>}, {pipeline_mode = #tpu.pipeline_mode<synchronous>, transform_indices = @transform_11, window_bounds = array<i64: 153, 256>}, {pipeline_mode = #tpu.pipeline_mode<synchronous>, transform_indices = @transform_12, window_bounds = array<i64: 153, 1>}, {transform_indices = @transform_13, window_bounds = array<i64: 1, 153, 4>}]} {
    %c0 = arith.constant 0 : index
    %c0_0 = arith.constant 0 : index
    %c0_1 = arith.constant 0 : index
    %0 = vector.load %arg1[%c0, %c0_0, %c0_1] : memref<1x4x8xf32, #tpu.memory_space<vmem>>, vector<1x4x8xf32>
    %1 = vector.shape_cast %0 : vector<1x4x8xf32> to vector<4x8xf32>
    %c0_2 = arith.constant 0 : index
    %c0_3 = arith.constant 0 : index
    %2 = vector.load %arg2[%c0_2, %c0_3] : memref<512x4xf32, #tpu.memory_space<vmem>>, vector<512x4xf32>
    %cst = arith.constant dense<0.000000e+00> : vector<512x8xf32>
    %3 = tpu.matmul %2, %1, %cst {dimension_numbers = #tpu.dot_dimension_numbers<[1], [0], [0], [1], [0, 0, 1, 1], [], []>} : vector<512x4xf32>, vector<4x8xf32>, vector<512x8xf32> -> vector<512x8xf32>
    %c0_4 = arith.constant 0 : index
    %c0_5 = arith.constant 0 : index
    %4 = vector.load %arg3[%c0_4, %c0_5] : memref<512x1xf32, #tpu.memory_space<vmem>>, vector<512x1xf32>
    %5 = vector.broadcast %4 : vector<512x1xf32> to vector<512x8xf32>
    %6 = arith.addf %3, %5 : vector<512x8xf32>
    %cst_6 = arith.constant 0.000000e+00 : f32
    %7 = vector.broadcast %cst_6 : f32 to vector<512x8xf32>
    %8 = arith.maximumf %6, %7 : vector<512x8xf32>
    %cst_7 = arith.constant dense<0.000000e+00> : vector<512xf32>
    %9 = vector.multi_reduction <add>, %8, %cst_7 [1] : vector<512x8xf32> to vector<512xf32>
    %10 = vector.shape_cast %9 : vector<512xf32> to vector<512x1xf32>
    %11 = arith.mulf %8, %8 : vector<512x8xf32>
    %cst_8 = arith.constant dense<0.000000e+00> : vector<512xf32>
    %12 = vector.multi_reduction <add>, %11, %cst_8 [1] : vector<512x8xf32> to vector<512xf32>
    %13 = vector.shape_cast %12 : vector<512xf32> to vector<512x1xf32>
    %c0_9 = arith.constant 0 : index
    %c0_10 = arith.constant 0 : index
    %14 = vector.load %arg8[%c0_9, %c0_10] : memref<16x512xf32, #tpu.memory_space<vmem>>, vector<16x512xf32>
    %cst_11 = arith.constant dense<0.000000e+00> : vector<16x1xf32>
    %15 = tpu.matmul %14, %10, %cst_11 {dimension_numbers = #tpu.dot_dimension_numbers<[1], [0], [0], [1], [0, 0, 1, 1], [], []>} : vector<16x512xf32>, vector<512x1xf32>, vector<16x1xf32> -> vector<16x1xf32>
    %cst_12 = arith.constant 2.560000e+02 : f32
    %16 = vector.broadcast %cst_12 : f32 to vector<16x1xf32>
    %17 = arith.divf %15, %16 : vector<16x1xf32>
    %c0_13 = arith.constant 0 : index
    %c0_14 = arith.constant 0 : index
    %18 = vector.load %arg8[%c0_13, %c0_14] : memref<16x512xf32, #tpu.memory_space<vmem>>, vector<16x512xf32>
    %cst_15 = arith.constant dense<0.000000e+00> : vector<16x1xf32>
    %19 = tpu.matmul %18, %13, %cst_15 {dimension_numbers = #tpu.dot_dimension_numbers<[1], [0], [0], [1], [0, 0, 1, 1], [], []>} : vector<16x512xf32>, vector<512x1xf32>, vector<16x1xf32> -> vector<16x1xf32>
    %cst_16 = arith.constant 2.560000e+02 : f32
    %20 = vector.broadcast %cst_16 : f32 to vector<16x1xf32>
    %21 = arith.divf %19, %20 : vector<16x1xf32>
    %22 = arith.mulf %17, %17 : vector<16x1xf32>
    %23 = arith.subf %21, %22 : vector<16x1xf32>
    %cst_17 = arith.constant 0.000000e+00 : f32
    %24 = vector.broadcast %cst_17 : f32 to vector<16x1xf32>
    %25 = arith.maximumf %23, %24 : vector<16x1xf32>
    %cst_18 = arith.constant 9.99999974E-6 : f32
    %26 = vector.broadcast %cst_18 : f32 to vector<16x1xf32>
    %27 = arith.addf %25, %26 : vector<16x1xf32>
    %28 = math.rsqrt %27 : vector<16x1xf32>
    %c0_19 = arith.constant 0 : index
    %c0_20 = arith.constant 0 : index
    %29 = vector.load %arg9[%c0_19, %c0_20] : memref<512x16xf32, #tpu.memory_space<vmem>>, vector<512x16xf32>
    %cst_21 = arith.constant dense<0.000000e+00> : vector<512x1xf32>
    %30 = tpu.matmul %29, %17, %cst_21 {dimension_numbers = #tpu.dot_dimension_numbers<[1], [0], [0], [1], [0, 0, 1, 1], [], []>} : vector<512x16xf32>, vector<16x1xf32>, vector<512x1xf32> -> vector<512x1xf32>
    %c0_22 = arith.constant 0 : index
    %c0_23 = arith.constant 0 : index
    %31 = vector.load %arg9[%c0_22, %c0_23] : memref<512x16xf32, #tpu.memory_space<vmem>>, vector<512x16xf32>
    %cst_24 = arith.constant dense<0.000000e+00> : vector<512x1xf32>
    %32 = tpu.matmul %31, %28, %cst_24 {dimension_numbers = #tpu.dot_dimension_numbers<[1], [0], [0], [1], [0, 0, 1, 1], [], []>} : vector<512x16xf32>, vector<16x1xf32>, vector<512x1xf32> -> vector<512x1xf32>
    %33 = vector.broadcast %30 : vector<512x1xf32> to vector<512x8xf32>
    %34 = arith.subf %8, %33 : vector<512x8xf32>
    %35 = vector.broadcast %32 : vector<512x1xf32> to vector<512x8xf32>
    %36 = arith.mulf %34, %35 : vector<512x8xf32>
    %c0_25 = arith.constant 0 : index
    %c0_26 = arith.constant 0 : index
    %37 = vector.load %arg4[%c0_25, %c0_26] : memref<512x1xf32, #tpu.memory_space<vmem>>, vector<512x1xf32>
    %38 = vector.broadcast %37 : vector<512x1xf32> to vector<512x8xf32>
    %39 = arith.mulf %36, %38 : vector<512x8xf32>
    %c0_27 = arith.constant 0 : index
    %c0_28 = arith.constant 0 : index
    %40 = vector.load %arg5[%c0_27, %c0_28] : memref<512x1xf32, #tpu.memory_space<vmem>>, vector<512x1xf32>
    %41 = vector.broadcast %40 : vector<512x1xf32> to vector<512x8xf32>
    %42 = arith.addf %39, %41 : vector<512x8xf32>
    %cst_29 = arith.constant 0.000000e+00 : f32
    %43 = vector.broadcast %cst_29 : f32 to vector<512x8xf32>
    %44 = arith.maximumf %42, %43 : vector<512x8xf32>
    %cst_30 = arith.constant dense<0.000000e+00> : vector<512xf32>
    %45 = vector.multi_reduction <add>, %44, %cst_30 [1] : vector<512x8xf32> to vector<512xf32>
    %46 = vector.shape_cast %45 : vector<512xf32> to vector<512x1xf32>
    %cst_31 = arith.constant 8.000000e+00 : f32
    %47 = vector.broadcast %cst_31 : f32 to vector<512x1xf32>
    %48 = arith.divf %46, %47 : vector<512x1xf32>
    %c0_32 = arith.constant 0 : index
    %c0_33 = arith.constant 0 : index
    %49 = vector.load %arg6[%c0_32, %c0_33] : memref<256x512xf32, #tpu.memory_space<vmem>>, vector<256x512xf32>
    %cst_34 = arith.constant dense<0.000000e+00> : vector<256x1xf32>
    %50 = tpu.matmul %49, %48, %cst_34 {dimension_numbers = #tpu.dot_dimension_numbers<[1], [0], [0], [1], [0, 0, 1, 1], [], []>} : vector<256x512xf32>, vector<512x1xf32>, vector<256x1xf32> -> vector<256x1xf32>
    %c0_35 = arith.constant 0 : index
    %c0_36 = arith.constant 0 : index
    %51 = vector.load %arg7[%c0_35, %c0_36] : memref<256x1xf32, #tpu.memory_space<vmem>>, vector<256x1xf32>
    %52 = arith.addf %50, %51 : vector<256x1xf32>
    %c0_37 = arith.constant 0 : index
    %c0_38 = arith.constant 0 : index
    %53 = vector.load %arg11[%c0_37, %c0_38] : memref<153x256xf32, #tpu.memory_space<vmem>>, vector<153x256xf32>
    %cst_39 = arith.constant dense<0.000000e+00> : vector<153x1xf32>
    %54 = tpu.matmul %53, %52, %cst_39 {dimension_numbers = #tpu.dot_dimension_numbers<[1], [0], [0], [1], [0, 0, 1, 1], [], []>} : vector<153x256xf32>, vector<256x1xf32>, vector<153x1xf32> -> vector<153x1xf32>
    %c0_40 = arith.constant 0 : index
    %c0_41 = arith.constant 0 : index
    %55 = vector.load %arg12[%c0_40, %c0_41] : memref<153x256xf32, #tpu.memory_space<vmem>>, vector<153x256xf32>
    %c0_42 = arith.constant 0 : index
    %c0_43 = arith.constant 0 : index
    %56 = vector.load %arg10[%c0_42, %c0_43] : memref<256x4xf32, #tpu.memory_space<vmem>>, vector<256x4xf32>
    %cst_44 = arith.constant dense<0.000000e+00> : vector<153x4xf32>
    %57 = tpu.matmul %55, %56, %cst_44 {dimension_numbers = #tpu.dot_dimension_numbers<[1], [0], [0], [1], [0, 0, 1, 1], [], []>} : vector<153x256xf32>, vector<256x4xf32>, vector<153x4xf32> -> vector<153x4xf32>
    %58 = vector.broadcast %54 : vector<153x1xf32> to vector<153x4xf32>
    %59 = arith.addf %58, %57 : vector<153x4xf32>
    %c0_45 = arith.constant 0 : index
    %c0_46 = arith.constant 0 : index
    %60 = vector.load %arg13[%c0_45, %c0_46] : memref<153x1xf32, #tpu.memory_space<vmem>>, vector<153x1xf32>
    %61 = vector.broadcast %60 : vector<153x1xf32> to vector<153x4xf32>
    %62 = arith.addf %59, %61 : vector<153x4xf32>
    %c0_47 = arith.constant 0 : index
    %c0_48 = arith.constant 0 : index
    %c0_49 = arith.constant 0 : index
    %63 = vector.load %arg14[%c0_47, %c0_48, %c0_49] : memref<1x153x4xf32, #tpu.memory_space<vmem>>, vector<1x153x4xf32>
    %64 = vector.shape_cast %63 : vector<1x153x4xf32> to vector<153x4xf32>
    %65 = vector.shape_cast %62 : vector<153x4xf32> to vector<1x153x4xf32>
    tpu.vector_store %arg14[%c0_47, %c0_48, %c0_49], %65 {strides = array<i32>} : memref<1x153x4xf32, #tpu.memory_space<vmem>>, vector<1x153x4xf32>,
    return
  }
  func.func @transform_0(%arg0: i32) -> (i32, i32, i32) {
    %c0_i32 = arith.constant 0 : i32
    %c0_i32_0 = arith.constant 0 : i32
    %c0_i32_1 = arith.constant 0 : i32
    return %arg0, %c0_i32, %c0_i32_0 : i32, i32, i32
  }
  func.func @transform_1(%arg0: i32) -> (i32, i32) {
    %c0_i32 = arith.constant 0 : i32
    %c0_i32_0 = arith.constant 0 : i32
    %c0_i32_1 = arith.constant 0 : i32
    return %c0_i32, %c0_i32_0 : i32, i32
  }
  func.func @transform_2(%arg0: i32) -> (i32, i32) {
    %c0_i32 = arith.constant 0 : i32
    %c0_i32_0 = arith.constant 0 : i32
    %c0_i32_1 = arith.constant 0 : i32
    return %c0_i32, %c0_i32_0 : i32, i32
  }
  func.func @transform_3(%arg0: i32) -> (i32, i32) {
    %c0_i32 = arith.constant 0 : i32
    %c0_i32_0 = arith.constant 0 : i32
    %c0_i32_1 = arith.constant 0 : i32
    return %c0_i32, %c0_i32_0 : i32, i32
  }
  func.func @transform_4(%arg0: i32) -> (i32, i32) {
    %c0_i32 = arith.constant 0 : i32
    %c0_i32_0 = arith.constant 0 : i32
    %c0_i32_1 = arith.constant 0 : i32
    return %c0_i32, %c0_i32_0 : i32, i32
  }
  func.func @transform_5(%arg0: i32) -> (i32, i32) {
    %c0_i32 = arith.constant 0 : i32
    %c0_i32_0 = arith.constant 0 : i32
    %c0_i32_1 = arith.constant 0 : i32
    return %c0_i32, %c0_i32_0 : i32, i32
  }
  func.func @transform_6(%arg0: i32) -> (i32, i32) {
    %c0_i32 = arith.constant 0 : i32
    %c0_i32_0 = arith.constant 0 : i32
    %c0_i32_1 = arith.constant 0 : i32
    return %c0_i32, %c0_i32_0 : i32, i32
  }
  func.func @transform_7(%arg0: i32) -> (i32, i32) {
    %c0_i32 = arith.constant 0 : i32
    %c0_i32_0 = arith.constant 0 : i32
    %c0_i32_1 = arith.constant 0 : i32
    return %c0_i32, %c0_i32_0 : i32, i32
  }
  func.func @transform_8(%arg0: i32) -> (i32, i32) {
    %c0_i32 = arith.constant 0 : i32
    %c0_i32_0 = arith.constant 0 : i32
    %c0_i32_1 = arith.constant 0 : i32
    return %c0_i32, %c0_i32_0 : i32, i32
  }
  func.func @transform_9(%arg0: i32) -> (i32, i32) {
    %c0_i32 = arith.constant 0 : i32
    %c0_i32_0 = arith.constant 0 : i32
    %c0_i32_1 = arith.constant 0 : i32
    return %c0_i32, %c0_i32_0 : i32, i32
  }
  func.func @transform_10(%arg0: i32) -> (i32, i32) {
    %c0_i32 = arith.constant 0 : i32
    %c0_i32_0 = arith.constant 0 : i32
    %c0_i32_1 = arith.constant 0 : i32
    return %c0_i32, %c0_i32_0 : i32, i32
  }
  func.func @transform_11(%arg0: i32) -> (i32, i32) {
    %c0_i32 = arith.constant 0 : i32
    %c0_i32_0 = arith.constant 0 : i32
    %c0_i32_1 = arith.constant 0 : i32
    return %c0_i32, %c0_i32_0 : i32, i32
  }
  func.func @transform_12(%arg0: i32) -> (i32, i32) {
    %c0_i32 = arith.constant 0 : i32
    %c0_i32_0 = arith.constant 0 : i32
    %c0_i32_1 = arith.constant 0 : i32
    return %c0_i32, %c0_i32_0 : i32, i32
  }
  func.func @transform_13(%arg0: i32) -> (i32, i32, i32) {
    %c0_i32 = arith.constant 0 : i32
    %c0_i32_0 = arith.constant 0 : i32
    %c0_i32_1 = arith.constant 0 : i32
    return %arg0, %c0_i32, %c0_i32_0 : i32, i32, i32
  }
}

</mosaic_0001>

<llo_original>
// kernel: tpu_custom_call.1
$region0: #{tpu_custom_call.1}
  #allocation0 [shape = 'u32[]', space=smem, size = 0x4, offset = 0x4, fixed_abs, tag = 'smem constant byte address 0x4 - core index']
  #allocation1 [shape = 'u32[144,128]{1,0:T(1,128)}', space=vmem, size = 0x12000, scoped, tag = 'internal scratch']
  %s0 = inlined_call_operand.vmem [shape: f32[2,4,8], index: 0, kind: input, shape index: {}]
  %s1 = inlined_call_operand.vmem [shape: f32[512,4], index: 1, kind: input, shape index: {}]
  %s2 = inlined_call_operand.vmem [shape: f32[512,1], index: 2, kind: input, shape index: {}]
  %s3 = inlined_call_operand.vmem [shape: f32[512,1], index: 3, kind: input, shape index: {}]
  %s4 = inlined_call_operand.vmem [shape: f32[512,1], index: 4, kind: input, shape index: {}]
  %s5 = inlined_call_operand.vmem [shape: f32[256,512], index: 5, kind: input, shape index: {}]
  %s6 = inlined_call_operand.vmem [shape: f32[256,1], index: 6, kind: input, shape index: {}]
  %s7 = inlined_call_operand.vmem [shape: f32[16,512], index: 7, kind: input, shape index: {}]
  %s8 = inlined_call_operand.vmem [shape: f32[512,16], index: 8, kind: input, shape index: {}]
  %s9 = inlined_call_operand.vmem [shape: f32[256,4], index: 9, kind: input, shape index: {}]
  %s10 = inlined_call_operand.vmem [shape: f32[153,256], index: 10, kind: input, shape index: {}]
  %s11 = inlined_call_operand.vmem [shape: f32[153,256], index: 11, kind: input, shape index: {}]
  %s12 = inlined_call_operand.vmem [shape: f32[153,1], index: 12, kind: input, shape index: {}]
  %s13 = inlined_call_operand.vmem [shape: f32[2,153,4], index: 13, kind: output, shape index: {}]
  %s14 = sld [smem:[#allocation0]]
  $region85: #{tpu_custom_call.1} parent=0
    _
  %s16 = ssub.s32 1, %s14
  %s17 = scalar_select 0, %s16, %s14
  loop: start=0, step=1, limit=4
  $region2: #{tpu_custom_call.1} parent=0 // loop_pre_header
    _
  $region3: #{tpu_custom_call.1} parent=0 // loop_header
    %s19 = sphi 0, %s23
    %p20 = scmp.ge.s32.totalorder %s19, 4
    %s29 = sphi 0, %s31
    %s32 = sphi 0, %s29
    %s33 = sphi 0, %s32
    %s49 = sphi 0, %s33
    %s53 = sphi 0, %s53
    %s55 = sphi 0, %s53
    %s56 = sphi 0, %s55
    %s70 = sphi 0, %s56
    %s74 = sphi 0, %s74
    %s76 = sphi 0, %s74
    %s77 = sphi 0, %s76
    %s91 = sphi 0, %s77
    %s95 = sphi 0, %s95
    %s97 = sphi 0, %s95
    %s98 = sphi 0, %s97
    %s112 = sphi 0, %s98
    %s116 = sphi 0, %s116
    %s118 = sphi 0, %s116
    %s119 = sphi 0, %s118
    %s133 = sphi 0, %s119
    %s137 = sphi 0, %s137
    %s139 = sphi 0, %s137
    %s140 = sphi 0, %s139
    %s154 = sphi 0, %s140
    %s158 = sphi 0, %s158
    %s160 = sphi 0, %s158
    %s161 = sphi 0, %s160
    %s175 = sphi 0, %s161
    %s179 = sphi 0, %s179
    %s181 = sphi 0, %s179
    %s182 = sphi 0, %s181
    %s196 = sphi 0, %s182
    %s200 = sphi 0, %s200
    %s202 = sphi 0, %s200
    %s203 = sphi 0, %s202
    %s217 = sphi 0, %s203
    %s221 = sphi 0, %s221
    %s223 = sphi 0, %s221
    %s224 = sphi 0, %s223
    %s238 = sphi 0, %s224
    %s242 = sphi 0, %s242
    %s244 = sphi 0, %s242
    %s245 = sphi 0, %s244
    %s259 = sphi 0, %s245
    %s263 = sphi 0, %s263
    %s265 = sphi 0, %s263
    %s266 = sphi 0, %s265
    %s280 = sphi 0, %s266
    %s284 = sphi 0, %s284
    %s286 = sphi 0, %s284
    %s287 = sphi 0, %s286
    %s301 = sphi 0, %s287
    %s307 = sphi 0, %s309
    %s310 = sphi 0, %s307
    %s311 = sphi 0, %s310
    %s327 = sphi 0, %s311
  $region4: #{tpu_custom_call.1} parent=0 // loop_header_branch
    %22 = sbr.rel (%p20) target = $region8
  $region5: #{tpu_custom_call.1} parent=0 // loop_body
    %s24 = ssub.s32 %s19, 1
    %s25 = ssub.s32 %s19, 2
    %s26 = sadd.s32 %s19, 1
    %s27 = ssub.s32 %s19, %s26
    %p28 = scmp.eq.s32.totalorder %s27, 0
    %s30 = sadd.s32 %s29, 1
    %s31 = scalar_select %p28, %s29, %s30
    %p34 = pneg %p28
    %p35 = scmp.eq.s32.totalorder %s19, 1
    %p36 = por %p34, %p35
    %p37 = scmp.ne.s32.totalorder %s29, %s32
    %p38 = scmp.eq.s32.totalorder %s19, 0
    %p39 = por %p37, %p38
    %p40 = scmp.ne.s32.totalorder %s29, %s32
    %p41 = scmp.eq.s32.totalorder %s24, 1
    %p42 = por %p40, %p41
    %p43 = scmp.ne.s32.totalorder %s32, %s33
    %p44 = scmp.eq.s32.totalorder %s24, 0
    %p45 = por %p43, %p44
    %p46 = scmp.ne.s32.totalorder %s32, %s33
    %p47 = scmp.eq.s32.totalorder %s25, 1
    %p48 = por %p46, %p47
    %p50 = scmp.ne.s32.totalorder %s33, %s49
    %p51 = scmp.eq.s32.totalorder %s25, 0
    %p52 = por %p50, %p51
    %s54 = sadd.s32 %s53, 1
    %p57 = scmp.eq.s32.totalorder %s19, 1
    %p58 = scmp.ne.s32.totalorder %s53, %s55
    %p59 = scmp.eq.s32.totalorder %s19, 0
    %p60 = por %p58, %p59
    %p61 = scmp.ne.s32.totalorder %s53, %s55
    %p62 = scmp.eq.s32.totalorder %s24, 1
    %p63 = por %p61, %p62
    %p64 = scmp.ne.s32.totalorder %s55, %s56
    %p65 = scmp.eq.s32.totalorder %s24, 0
    %p66 = por %p64, %p65
    %p67 = scmp.ne.s32.totalorder %s55, %s56
    %p68 = scmp.eq.s32.totalorder %s25, 1
    %p69 = por %p67, %p68
    %p71 = scmp.ne.s32.totalorder %s56, %s70
    %p72 = scmp.eq.s32.totalorder %s25, 0
    %p73 = por %p71, %p72
    %s75 = sadd.s32 %s74, 1
    %p78 = scmp.eq.s32.totalorder %s19, 1
    %p79 = scmp.ne.s32.totalorder %s74, %s76
    %p80 = scmp.eq.s32.totalorder %s19, 0
    %p81 = por %p79, %p80
    %p82 = scmp.ne.s32.totalorder %s74, %s76
    %p83 = scmp.eq.s32.totalorder %s24, 1
    %p84 = por %p82, %p83
    %p85 = scmp.ne.s32.totalorder %s76, %s77
    %p86 = scmp.eq.s32.totalorder %s24, 0
    %p87 = por %p85, %p86
    %p88 = scmp.ne.s32.totalorder %s76, %s77
    %p89 = scmp.eq.s32.totalorder %s25, 1
    %p90 = por %p88, %p89
    %p92 = scmp.ne.s32.totalorder %s77, %s91
    %p93 = scmp.eq.s32.totalorder %s25, 0
    %p94 = por %p92, %p93
    %s96 = sadd.s32 %s95, 1
    %p99 = scmp.eq.s32.totalorder %s19, 1
    %p100 = scmp.ne.s32.totalorder %s95, %s97
    %p101 = scmp.eq.s32.totalorder %s19, 0
    %p102 = por %p100, %p101
    %p103 = scmp.ne.s32.totalorder %s95, %s97
    %p104 = scmp.eq.s32.totalorder %s24, 1
    %p105 = por %p103, %p104
    %p106 = scmp.ne.s32.totalorder %s97, %s98
    %p107 = scmp.eq.s32.totalorder %s24, 0
    %p108 = por %p106, %p107
    %p109 = scmp.ne.s32.totalorder %s97, %s98
    %p110 = scmp.eq.s32.totalorder %s25, 1
    %p111 = por %p109, %p110
    %p113 = scmp.ne.s32.totalorder %s98, %s112
    %p114 = scmp.eq.s32.totalorder %s25, 0
    %p115 = por %p113, %p114
    %s117 = sadd.s32 %s116, 1
    %p120 = scmp.eq.s32.totalorder %s19, 1
    %p121 = scmp.ne.s32.totalorder %s116, %s118
    %p122 = scmp.eq.s32.totalorder %s19, 0
    %p123 = por %p121, %p122
    %p124 = scmp.ne.s32.totalorder %s116, %s118
    %p125 = scmp.eq.s32.totalorder %s24, 1
    %p126 = por %p124, %p125
    %p127 = scmp.ne.s32.totalorder %s118, %s119
    %p128 = scmp.eq.s32.totalorder %s24, 0
    %p129 = por %p127, %p128
    %p130 = scmp.ne.s32.totalorder %s118, %s119
    %p131 = scmp.eq.s32.totalorder %s25, 1
    %p132 = por %p130, %p131
    %p134 = scmp.ne.s32.totalorder %s119, %s133
    %p135 = scmp.eq.s32.totalorder %s25, 0
    %p136 = por %p134, %p135
    %s138 = sadd.s32 %s137, 1
    %p141 = scmp.eq.s32.totalorder %s19, 1
    %p142 = scmp.ne.s32.totalorder %s137, %s139
    %p143 = scmp.eq.s32.totalorder %s19, 0
    %p144 = por %p142, %p143
    %p145 = scmp.ne.s32.totalorder %s137, %s139
    %p146 = scmp.eq.s32.totalorder %s24, 1
    %p147 = por %p145, %p146
    %p148 = scmp.ne.s32.totalorder %s139, %s140
    %p149 = scmp.eq.s32.totalorder %s24, 0
    %p150 = por %p148, %p149
    %p151 = scmp.ne.s32.totalorder %s139, %s140
    %p152 = scmp.eq.s32.totalorder %s25, 1
    %p153 = por %p151, %p152
    %p155 = scmp.ne.s32.totalorder %s140, %s154
    %p156 = scmp.eq.s32.totalorder %s25, 0
    %p157 = por %p155, %p156
    %s159 = sadd.s32 %s158, 1
    %p162 = scmp.eq.s32.totalorder %s19, 1
    %p163 = scmp.ne.s32.totalorder %s158, %s160
    %p164 = scmp.eq.s32.totalorder %s19, 0
    %p165 = por %p163, %p164
    %p166 = scmp.ne.s32.totalorder %s158, %s160
    %p167 = scmp.eq.s32.totalorder %s24, 1
    %p168 = por %p166, %p167
    %p169 = scmp.ne.s32.totalorder %s160, %s161
    %p170 = scmp.eq.s32.totalorder %s24, 0
    %p171 = por %p169, %p170
    %p172 = scmp.ne.s32.totalorder %s160, %s161
    %p173 = scmp.eq.s32.totalorder %s25, 1
    %p174 = por %p172, %p173
    %p176 = scmp.ne.s32.totalorder %s161, %s175
    %p177 = scmp.eq.s32.totalorder %s25, 0
    %p178 = por %p176, %p177
    %s180 = sadd.s32 %s179, 1
    %p183 = scmp.eq.s32.totalorder %s19, 1
    %p184 = scmp.ne.s32.totalorder %s179, %s181
    %p185 = scmp.eq.s32.totalorder %s19, 0
    %p186 = por %p184, %p185
    %p187 = scmp.ne.s32.totalorder %s179, %s181
    %p188 = scmp.eq.s32.totalorder %s24, 1
    %p189 = por %p187, %p188
    %p190 = scmp.ne.s32.totalorder %s181, %s182
    %p191 = scmp.eq.s32.totalorder %s24, 0
    %p192 = por %p190, %p191
    %p193 = scmp.ne.s32.totalorder %s181, %s182
    %p194 = scmp.eq.s32.totalorder %s25, 1
    %p195 = por %p193, %p194
    %p197 = scmp.ne.s32.totalorder %s182, %s196
    %p198 = scmp.eq.s32.totalorder %s25, 0
    %p199 = por %p197, %p198
    %s201 = sadd.s32 %s200, 1
    %p204 = scmp.eq.s32.totalorder %s19, 1
    %p205 = scmp.ne.s32.totalorder %s200, %s202
    %p206 = scmp.eq.s32.totalorder %s19, 0
    %p207 = por %p205, %p206
    %p208 = scmp.ne.s32.totalorder %s200, %s202
    %p209 = scmp.eq.s32.totalorder %s24, 1
    %p210 = por %p208, %p209
    %p211 = scmp.ne.s32.totalorder %s202, %s203
    %p212 = scmp.eq.s32.totalorder %s24, 0
    %p213 = por %p211, %p212
    %p214 = scmp.ne.s32.totalorder %s202, %s203
    %p215 = scmp.eq.s32.totalorder %s25, 1
    %p216 = por %p214, %p215
    %p218 = scmp.ne.s32.totalorder %s203, %s217
    %p219 = scmp.eq.s32.totalorder %s25, 0
    %p220 = por %p218, %p219
    %s222 = sadd.s32 %s221, 1
    %p225 = scmp.eq.s32.totalorder %s19, 1
    %p226 = scmp.ne.s32.totalorder %s221, %s223
    %p227 = scmp.eq.s32.totalorder %s19, 0
    %p228 = por %p226, %p227
    %p229 = scmp.ne.s32.totalorder %s221, %s223
    %p230 = scmp.eq.s32.totalorder %s24, 1
    %p231 = por %p229, %p230
    %p232 = scmp.ne.s32.totalorder %s223, %s224
    %p233 = scmp.eq.s32.totalorder %s24, 0
    %p234 = por %p232, %p233
    %p235 = scmp.ne.s32.totalorder %s223, %s224
    %p236 = scmp.eq.s32.totalorder %s25, 1
    %p237 = por %p235, %p236
    %p239 = scmp.ne.s32.totalorder %s224, %s238
    %p240 = scmp.eq.s32.totalorder %s25, 0
    %p241 = por %p239, %p240
    %s243 = sadd.s32 %s242, 1
    %p246 = scmp.eq.s32.totalorder %s19, 1
    %p247 = scmp.ne.s32.totalorder %s242, %s244
    %p248 = scmp.eq.s32.totalorder %s19, 0
    %p249 = por %p247, %p248
    %p250 = scmp.ne.s32.totalorder %s242, %s244
    %p251 = scmp.eq.s32.totalorder %s24, 1
    %p252 = por %p250, %p251
    %p253 = scmp.ne.s32.totalorder %s244, %s245
    %p254 = scmp.eq.s32.totalorder %s24, 0
    %p255 = por %p253, %p254
    %p256 = scmp.ne.s32.totalorder %s244, %s245
    %p257 = scmp.eq.s32.totalorder %s25, 1
    %p258 = por %p256, %p257
    %p260 = scmp.ne.s32.totalorder %s245, %s259
    %p261 = scmp.eq.s32.totalorder %s25, 0
    %p262 = por %p260, %p261
    %s264 = sadd.s32 %s263, 1
    %p267 = scmp.eq.s32.totalorder %s19, 1
    %p268 = scmp.ne.s32.totalorder %s263, %s265
    %p269 = scmp.eq.s32.totalorder %s19, 0
    %p270 = por %p268, %p269
    %p271 = scmp.ne.s32.totalorder %s263, %s265
    %p272 = scmp.eq.s32.totalorder %s24, 1
    %p273 = por %p271, %p272
    %p274 = scmp.ne.s32.totalorder %s265, %s266
    %p275 = scmp.eq.s32.totalorder %s24, 0
    %p276 = por %p274, %p275
    %p277 = scmp.ne.s32.totalorder %s265, %s266
    %p278 = scmp.eq.s32.totalorder %s25, 1
    %p279 = por %p277, %p278
    %p281 = scmp.ne.s32.totalorder %s266, %s280
    %p282 = scmp.eq.s32.totalorder %s25, 0
    %p283 = por %p281, %p282
    %s285 = sadd.s32 %s284, 1
    %p288 = scmp.eq.s32.totalorder %s19, 1
    %p289 = scmp.ne.s32.totalorder %s284, %s286
    %p290 = scmp.eq.s32.totalorder %s19, 0
    %p291 = por %p289, %p290
    %p292 = scmp.ne.s32.totalorder %s284, %s286
    %p293 = scmp.eq.s32.totalorder %s24, 1
    %p294 = por %p292, %p293
    %p295 = scmp.ne.s32.totalorder %s286, %s287
    %p296 = scmp.eq.s32.totalorder %s24, 0
    %p297 = por %p295, %p296
    %p298 = scmp.ne.s32.totalorder %s286, %s287
    %p299 = scmp.eq.s32.totalorder %s25, 1
    %p300 = por %p298, %p299
    %p302 = scmp.ne.s32.totalorder %s287, %s301
    %p303 = scmp.eq.s32.totalorder %s25, 0
    %p304 = por %p302, %p303
    %s305 = ssub.s32 %s19, %s26
    %p306 = scmp.eq.s32.totalorder %s305, 0
    %s308 = sadd.s32 %s307, 1
    %s309 = scalar_select %p306, %s307, %s308
    %p312 = pneg %p306
    %p313 = scmp.eq.s32.totalorder %s19, 1
    %p314 = por %p312, %p313
    %p315 = scmp.ne.s32.totalorder %s307, %s310
    %p316 = scmp.eq.s32.totalorder %s19, 0
    %p317 = por %p315, %p316
    %p318 = scmp.ne.s32.totalorder %s307, %s310
    %p319 = scmp.eq.s32.totalorder %s24, 1
    %p320 = por %p318, %p319
    %p321 = scmp.ne.s32.totalorder %s310, %s311
    %p322 = scmp.eq.s32.totalorder %s24, 0
    %p323 = por %p321, %p322
    %p324 = scmp.ne.s32.totalorder %s310, %s311
    %p325 = scmp.eq.s32.totalorder %s25, 1
    %p326 = por %p324, %p325
    %p328 = scmp.ne.s32.totalorder %s311, %s327
    %p329 = scmp.eq.s32.totalorder %s25, 0
    %p330 = por %p328, %p329
    %p331 = scmp.le.s32.totalorder 1, %s19
    %p332 = scmp.lt.s32.totalorder %s19, 3
    %p333 = pnand %p331, %p332
    %p334 = pneg %p333
    // Predicated region
    $region9: #{tpu_custom_call.1} parent=5 // pred_check
      _
    $region10: #{tpu_custom_call.1} parent=5 // pred_check_branch
      %336 = sbr.rel (%p333) target = $region12
    $region11: #{tpu_custom_call.1} parent=5 // pred_region
      %s337 = ssub.s32 %s19, 1
      // Predicated region
      $region13: #{tpu_custom_call.1} parent=11 // pred_check
        %p338 = pneg %p66
      $region14: #{tpu_custom_call.1} parent=11 // pred_check_branch
        %340 = sbr.rel (%p338) target = $region16
      $region15: #{tpu_custom_call.1} parent=11 // pred_region
        _
      $region16: #{tpu_custom_call.1} parent=11 // pred_fallthru
        _
      // Predicated region
      $region17: #{tpu_custom_call.1} parent=11 // pred_check
        %p341 = pneg %p87
      $region18: #{tpu_custom_call.1} parent=11 // pred_check_branch
        %343 = sbr.rel (%p341) target = $region20
      $region19: #{tpu_custom_call.1} parent=11 // pred_region
        _
      $region20: #{tpu_custom_call.1} parent=11 // pred_fallthru
        _
      // Predicated region
      $region21: #{tpu_custom_call.1} parent=11 // pred_check
        %p344 = pneg %p108
      $region22: #{tpu_custom_call.1} parent=11 // pred_check_branch
        %346 = sbr.rel (%p344) target = $region24
      $region23: #{tpu_custom_call.1} parent=11 // pred_region
        _
      $region24: #{tpu_custom_call.1} parent=11 // pred_fallthru
        _
      // Predicated region
      $region25: #{tpu_custom_call.1} parent=11 // pred_check
        %p347 = pneg %p129
      $region26: #{tpu_custom_call.1} parent=11 // pred_check_branch
        %349 = sbr.rel (%p347) target = $region28
      $region27: #{tpu_custom_call.1} parent=11 // pred_region
        _
      $region28: #{tpu_custom_call.1} parent=11 // pred_fallthru
        _
      // Predicated region
      $region29: #{tpu_custom_call.1} parent=11 // pred_check
        %p350 = pneg %p150
      $region30: #{tpu_custom_call.1} parent=11 // pred_check_branch
        %352 = sbr.rel (%p350) target = $region32
      $region31: #{tpu_custom_call.1} parent=11 // pred_region
        _
      $region32: #{tpu_custom_call.1} parent=11 // pred_fallthru
        _
      // Predicated region
      $region33: #{tpu_custom_call.1} parent=11 // pred_check
        %p353 = pneg %p171
      $region34: #{tpu_custom_call.1} parent=11 // pred_check_branch
        %355 = sbr.rel (%p353) target = $region36
      $region35: #{tpu_custom_call.1} parent=11 // pred_region
        _
      $region36: #{tpu_custom_call.1} parent=11 // pred_fallthru
        _
      // Predicated region
      $region37: #{tpu_custom_call.1} parent=11 // pred_check
        %p356 = pneg %p192
      $region38: #{tpu_custom_call.1} parent=11 // pred_check_branch
        %358 = sbr.rel (%p356) target = $region40
      $region39: #{tpu_custom_call.1} parent=11 // pred_region
        _
      $region40: #{tpu_custom_call.1} parent=11 // pred_fallthru
        _
      // Predicated region
      $region41: #{tpu_custom_call.1} parent=11 // pred_check
        %p359 = pneg %p213
      $region42: #{tpu_custom_call.1} parent=11 // pred_check_branch
        %361 = sbr.rel (%p359) target = $region44
      $region43: #{tpu_custom_call.1} parent=11 // pred_region
        _
      $region44: #{tpu_custom_call.1} parent=11 // pred_fallthru
        _
      // Predicated region
      $region45: #{tpu_custom_call.1} parent=11 // pred_check
        %p362 = pneg %p234
      $region46: #{tpu_custom_call.1} parent=11 // pred_check_branch
        %364 = sbr.rel (%p362) target = $region48
      $region47: #{tpu_custom_call.1} parent=11 // pred_region
        _
      $region48: #{tpu_custom_call.1} parent=11 // pred_fallthru
        _
      // Predicated region
      $region49: #{tpu_custom_call.1} parent=11 // pred_check
        %p365 = pneg %p255
      $region50: #{tpu_custom_call.1} parent=11 // pred_check_branch
        %367 = sbr.rel (%p365) target = $region52
      $region51: #{tpu_custom_call.1} parent=11 // pred_region
        _
      $region52: #{tpu_custom_call.1} parent=11 // pred_fallthru
        _
      // Predicated region
      $region53: #{tpu_custom_call.1} parent=11 // pred_check
        %p368 = pneg %p276
      $region54: #{tpu_custom_call.1} parent=11 // pred_check_branch
        %370 = sbr.rel (%p368) target = $region56
      $region55: #{tpu_custom_call.1} parent=11 // pred_region
        _
      $region56: #{tpu_custom_call.1} parent=11 // pred_fallthru
        _
      // Predicated region
      $region57: #{tpu_custom_call.1} parent=11 // pred_check
        %p371 = pneg %p297
      $region58: #{tpu_custom_call.1} parent=11 // pred_check_branch
        %373 = sbr.rel (%p371) target = $region60
      $region59: #{tpu_custom_call.1} parent=11 // pred_region
        _
      $region60: #{tpu_custom_call.1} parent=11 // pred_fallthru
        _
    $region12: #{tpu_custom_call.1} parent=5 // pred_fallthru
      _
    %p374 = scmp.lt.s32.totalorder %s19, 2
    // Predicated region
    $region61: #{tpu_custom_call.1} parent=5 // pred_check
      %p375 = pneg %p374
    $region62: #{tpu_custom_call.1} parent=5 // pred_check_branch
      %377 = sbr.rel (%p375) target = $region64
    $region63: #{tpu_custom_call.1} parent=5 // pred_region
      // Predicated region
      $region65: #{tpu_custom_call.1} parent=63 // pred_check
        %p378 = pneg %p39
      $region66: #{tpu_custom_call.1} parent=63 // pred_check_branch
        %380 = sbr.rel (%p378) target = $region68
      $region67: #{tpu_custom_call.1} parent=63 // pred_region
        %p381 = scmp.lt.s32.totalorder %s19, 1
        %s382 = scalar_select %p381, %s19, 1
        %s383 = smul.addr %s382, 4
        %s384 = scalar_lea.vmem %s0, %s383
      $region68: #{tpu_custom_call.1} parent=63 // pred_fallthru
        _
    $region64: #{tpu_custom_call.1} parent=5 // pred_fallthru
      _
    %p385 = scmp.le.s32.totalorder 1, %s19
    %p386 = scmp.lt.s32.totalorder %s19, 3
    %p387 = pnand %p385, %p386
    %p388 = pneg %p387
    // Predicated region
    $region69: #{tpu_custom_call.1} parent=5 // pred_check
      _
    $region70: #{tpu_custom_call.1} parent=5 // pred_check_branch
      %390 = sbr.rel (%p387) target = $region72
    $region71: #{tpu_custom_call.1} parent=5 // pred_region
      %s391 = ssub.s32 %s19, 1
      %p392 = scmp.lt.s32.totalorder %s24, 1
      %s393 = scalar_select %p392, %s24, 1
      %s394 = smul.addr %s393, 4
      %s395 = scalar_lea.vmem %s0, %s394
      %p396 = pneg %p45
      %p397 = pneg %p42
      %p398 = pneg %p66
      %p399 = pneg %p63
      %p400 = pneg %p87
      %p401 = pneg %p84
      %p402 = pneg %p108
      %p403 = pneg %p105
      %p404 = pneg %p129
      %p405 = pneg %p126
      %p406 = pneg %p150
      %p407 = pneg %p147
      %p408 = pneg %p171
      %p409 = pneg %p168
      %p410 = pneg %p192
      %p411 = pneg %p189
      %p412 = pneg %p213
      %p413 = pneg %p210
      %p414 = pneg %p234
      %p415 = pneg %p231
      %p416 = pneg %p255
      %p417 = pneg %p252
      %p418 = pneg %p276
      %p419 = pneg %p273
      %p420 = pneg %p297
      %p421 = pneg %p294
      %p422 = pneg %p323
      %p423 = pneg %p320
      %p424 = scmp.lt.s32.totalorder %s24, 1
      %s425 = scalar_select %p424, %s24, 1
      %s426 = smul.addr %s425, 20
      %s427 = smul.addr %s426, 8
      %s428 = scalar_lea.vmem %s13, %s427
      %p429 = scmp.lt.s32.totalorder %s24, 1
      %s430 = scalar_select %p429, %s24, 1
      %s431 = smul.addr %s430, 4
      %s432 = scalar_lea.vmem %s0, %s431
      %p433 = scmp.lt.s32.totalorder %s24, 1
      %s434 = scalar_select %p433, %s24, 1
      %s435 = smul.addr %s434, 20
      %s436 = smul.addr %s435, 8
      %s437 = scalar_lea.vmem %s13, %s436
      %v438 = vld [vmem:[%s432] sm:$0xf]
      %v439 = vld [vmem:[%s1] sm:$0xff]
      %v440 = vld [vmem:[%s1 + $0x8] sm:$0xff]
      %v441 = vld [vmem:[%s1 + $0x10] sm:$0xff]
      %v442 = vld [vmem:[%s1 + $0x18] sm:$0xff]
      %v443 = vld [vmem:[%s1 + $0x20] sm:$0xff]
      %v444 = vld [vmem:[%s1 + $0x28] sm:$0xff]
      %v445 = vld [vmem:[%s1 + $0x30] sm:$0xff]
      %v446 = vld [vmem:[%s1 + $0x38] sm:$0xff]
      %v447 = vld [vmem:[%s1 + $0x40] sm:$0xff]
      %v448 = vld [vmem:[%s1 + $0x48] sm:$0xff]
      %v449 = vld [vmem:[%s1 + $0x50] sm:$0xff]
      %v450 = vld [vmem:[%s1 + $0x58] sm:$0xff]
      %v451 = vld [vmem:[%s1 + $0x60] sm:$0xff]
      %v452 = vld [vmem:[%s1 + $0x68] sm:$0xff]
      %v453 = vld [vmem:[%s1 + $0x70] sm:$0xff]
      %v454 = vld [vmem:[%s1 + $0x78] sm:$0xff]
      %v455 = vld [vmem:[%s1 + $0x80] sm:$0xff]
      %v456 = vld [vmem:[%s1 + $0x88] sm:$0xff]
      %v457 = vld [vmem:[%s1 + $0x90] sm:$0xff]
      %v458 = vld [vmem:[%s1 + $0x98] sm:$0xff]
      %v459 = vld [vmem:[%s1 + $0xa0] sm:$0xff]
      %v460 = vld [vmem:[%s1 + $0xa8] sm:$0xff]
      %v461 = vld [vmem:[%s1 + $0xb0] sm:$0xff]
      %v462 = vld [vmem:[%s1 + $0xb8] sm:$0xff]
      %v463 = vld [vmem:[%s1 + $0xc0] sm:$0xff]
      %v464 = vld [vmem:[%s1 + $0xc8] sm:$0xff]
      %v465 = vld [vmem:[%s1 + $0xd0] sm:$0xff]
      %v466 = vld [vmem:[%s1 + $0xd8] sm:$0xff]
      %v467 = vld [vmem:[%s1 + $0xe0] sm:$0xff]
      %v468 = vld [vmem:[%s1 + $0xe8] sm:$0xff]
      %v469 = vld [vmem:[%s1 + $0xf0] sm:$0xff]
      %v470 = vld [vmem:[%s1 + $0xf8] sm:$0xff]
      %v471 = vld [vmem:[%s1 + $0x100] sm:$0xff]
      %v472 = vld [vmem:[%s1 + $0x108] sm:$0xff]
      %v473 = vld [vmem:[%s1 + $0x110] sm:$0xff]
      %v474 = vld [vmem:[%s1 + $0x118] sm:$0xff]
      %v475 = vld [vmem:[%s1 + $0x120] sm:$0xff]
      %v476 = vld [vmem:[%s1 + $0x128] sm:$0xff]
      %v477 = vld [vmem:[%s1 + $0x130] sm:$0xff]
      %v478 = vld [vmem:[%s1 + $0x138] sm:$0xff]
      %v479 = vld [vmem:[%s1 + $0x140] sm:$0xff]
      %v480 = vld [vmem:[%s1 + $0x148] sm:$0xff]
      %v481 = vld [vmem:[%s1 + $0x150] sm:$0xff]
      %v482 = vld [vmem:[%s1 + $0x158] sm:$0xff]
      %v483 = vld [vmem:[%s1 + $0x160] sm:$0xff]
      %v484 = vld [vmem:[%s1 + $0x168] sm:$0xff]
      %v485 = vld [vmem:[%s1 + $0x170] sm:$0xff]
      %v486 = vld [vmem:[%s1 + $0x178] sm:$0xff]
      %v487 = vld [vmem:[%s1 + $0x180] sm:$0xff]
      %v488 = vld [vmem:[%s1 + $0x188] sm:$0xff]
      %v489 = vld [vmem:[%s1 + $0x190] sm:$0xff]
      %v490 = vld [vmem:[%s1 + $0x198] sm:$0xff]
      %v491 = vld [vmem:[%s1 + $0x1a0] sm:$0xff]
      %v492 = vld [vmem:[%s1 + $0x1a8] sm:$0xff]
      %v493 = vld [vmem:[%s1 + $0x1b0] sm:$0xff]
      %v494 = vld [vmem:[%s1 + $0x1b8] sm:$0xff]
      %v495 = vld [vmem:[%s1 + $0x1c0] sm:$0xff]
      %v496 = vld [vmem:[%s1 + $0x1c8] sm:$0xff]
      %v497 = vld [vmem:[%s1 + $0x1d0] sm:$0xff]
      %v498 = vld [vmem:[%s1 + $0x1d8] sm:$0xff]
      %v499 = vld [vmem:[%s1 + $0x1e0] sm:$0xff]
      %v500 = vld [vmem:[%s1 + $0x1e8] sm:$0xff]
      %v501 = vld [vmem:[%s1 + $0x1f0] sm:$0xff]
      %v502 = vld [vmem:[%s1 + $0x1f8] sm:$0xff]
      %v503 = vld [vmem:[%s2] sm:$0xff]
      %v504 = vld [vmem:[%s2 + $0x8] sm:$0xff]
      %v505 = vld [vmem:[%s2 + $0x10] sm:$0xff]
      %v506 = vld [vmem:[%s2 + $0x18] sm:$0xff]
      %v507 = vld [vmem:[%s2 + $0x20] sm:$0xff]
      %v508 = vld [vmem:[%s2 + $0x28] sm:$0xff]
      %v509 = vld [vmem:[%s2 + $0x30] sm:$0xff]
      %v510 = vld [vmem:[%s2 + $0x38] sm:$0xff]
      %v511 = vld [vmem:[%s2 + $0x40] sm:$0xff]
      %v512 = vld [vmem:[%s2 + $0x48] sm:$0xff]
      %v513 = vld [vmem:[%s2 + $0x50] sm:$0xff]
      %v514 = vld [vmem:[%s2 + $0x58] sm:$0xff]
      %v515 = vld [vmem:[%s2 + $0x60] sm:$0xff]
      %v516 = vld [vmem:[%s2 + $0x68] sm:$0xff]
      %v517 = vld [vmem:[%s2 + $0x70] sm:$0xff]
      %v518 = vld [vmem:[%s2 + $0x78] sm:$0xff]
      %v519 = vld [vmem:[%s2 + $0x80] sm:$0xff]
      %v520 = vld [vmem:[%s2 + $0x88] sm:$0xff]
      %v521 = vld [vmem:[%s2 + $0x90] sm:$0xff]
      %v522 = vld [vmem:[%s2 + $0x98] sm:$0xff]
      %v523 = vld [vmem:[%s2 + $0xa0] sm:$0xff]
      %v524 = vld [vmem:[%s2 + $0xa8] sm:$0xff]
      %v525 = vld [vmem:[%s2 + $0xb0] sm:$0xff]
      %v526 = vld [vmem:[%s2 + $0xb8] sm:$0xff]
      %v527 = vld [vmem:[%s2 + $0xc0] sm:$0xff]
      %v528 = vld [vmem:[%s2 + $0xc8] sm:$0xff]
      %v529 = vld [vmem:[%s2 + $0xd0] sm:$0xff]
      %v530 = vld [vmem:[%s2 + $0xd8] sm:$0xff]
      %v531 = vld [vmem:[%s2 + $0xe0] sm:$0xff]
      %v532 = vld [vmem:[%s2 + $0xe8] sm:$0xff]
      %v533 = vld [vmem:[%s2 + $0xf0] sm:$0xff]
      %v534 = vld [vmem:[%s2 + $0xf8] sm:$0xff]
      %v535 = vld [vmem:[%s2 + $0x100] sm:$0xff]
      %v536 = vld [vmem:[%s2 + $0x108] sm:$0xff]
      %v537 = vld [vmem:[%s2 + $0x110] sm:$0xff]
      %v538 = vld [vmem:[%s2 + $0x118] sm:$0xff]
      %v539 = vld [vmem:[%s2 + $0x120] sm:$0xff]
      %v540 = vld [vmem:[%s2 + $0x128] sm:$0xff]
      %v541 = vld [vmem:[%s2 + $0x130] sm:$0xff]
      %v542 = vld [vmem:[%s2 + $0x138] sm:$0xff]
      %v543 = vld [vmem:[%s2 + $0x140] sm:$0xff]
      %v544 = vld [vmem:[%s2 + $0x148] sm:$0xff]
      %v545 = vld [vmem:[%s2 + $0x150] sm:$0xff]
      %v546 = vld [vmem:[%s2 + $0x158] sm:$0xff]
      %v547 = vld [vmem:[%s2 + $0x160] sm:$0xff]
      %v548 = vld [vmem:[%s2 + $0x168] sm:$0xff]
      %v549 = vld [vmem:[%s2 + $0x170] sm:$0xff]
      %v550 = vld [vmem:[%s2 + $0x178] sm:$0xff]
      %v551 = vld [vmem:[%s2 + $0x180] sm:$0xff]
      %v552 = vld [vmem:[%s2 + $0x188] sm:$0xff]
      %v553 = vld [vmem:[%s2 + $0x190] sm:$0xff]
      %v554 = vld [vmem:[%s2 + $0x198] sm:$0xff]
      %v555 = vld [vmem:[%s2 + $0x1a0] sm:$0xff]
      %v556 = vld [vmem:[%s2 + $0x1a8] sm:$0xff]
      %v557 = vld [vmem:[%s2 + $0x1b0] sm:$0xff]
      %v558 = vld [vmem:[%s2 + $0x1b8] sm:$0xff]
      %v559 = vld [vmem:[%s2 + $0x1c0] sm:$0xff]
      %v560 = vld [vmem:[%s2 + $0x1c8] sm:$0xff]
      %v561 = vld [vmem:[%s2 + $0x1d0] sm:$0xff]
      %v562 = vld [vmem:[%s2 + $0x1d8] sm:$0xff]
      %v563 = vld [vmem:[%s2 + $0x1e0] sm:$0xff]
      %v564 = vld [vmem:[%s2 + $0x1e8] sm:$0xff]
      %v565 = vld [vmem:[%s2 + $0x1f0] sm:$0xff]
      %v566 = vld [vmem:[%s2 + $0x1f8] sm:$0xff]
      %568 = vset.pattern.permute.xlu0 0
      %569 = vperm.xlu0 %568, %v503
      %v570 = vpop.permute.xlu0 %569
      %573 = vset.pattern.permute.xlu0 0
      %574 = vperm.xlu0 %573, %v504
      %v575 = vpop.permute.xlu0 %574
      %578 = vset.pattern.permute.xlu0 0
      %579 = vperm.xlu0 %578, %v505
      %v580 = vpop.permute.xlu0 %579
      %583 = vset.pattern.permute.xlu0 0
      %584 = vperm.xlu0 %583, %v506
      %v585 = vpop.permute.xlu0 %584
      %588 = vset.pattern.permute.xlu0 0
      %589 = vperm.xlu0 %588, %v507
      %v590 = vpop.permute.xlu0 %589
      %593 = vset.pattern.permute.xlu0 0
      %594 = vperm.xlu0 %593, %v508
      %v595 = vpop.permute.xlu0 %594
      %598 = vset.pattern.permute.xlu0 0
      %599 = vperm.xlu0 %598, %v509
      %v600 = vpop.permute.xlu0 %599
      %603 = vset.pattern.permute.xlu0 0
      %604 = vperm.xlu0 %603, %v510
      %v605 = vpop.permute.xlu0 %604
      %608 = vset.pattern.permute.xlu0 0
      %609 = vperm.xlu0 %608, %v511
      %v610 = vpop.permute.xlu0 %609
      %613 = vset.pattern.permute.xlu0 0
      %614 = vperm.xlu0 %613, %v512
      %v615 = vpop.permute.xlu0 %614
      %618 = vset.pattern.permute.xlu0 0
      %619 = vperm.xlu0 %618, %v513
      %v620 = vpop.permute.xlu0 %619
      %623 = vset.pattern.permute.xlu0 0
      %624 = vperm.xlu0 %623, %v514
      %v625 = vpop.permute.xlu0 %624
      %628 = vset.pattern.permute.xlu0 0
      %629 = vperm.xlu0 %628, %v515
      %v630 = vpop.permute.xlu0 %629
      %633 = vset.pattern.permute.xlu0 0
      %634 = vperm.xlu0 %633, %v516
      %v635 = vpop.permute.xlu0 %634
      %638 = vset.pattern.permute.xlu0 0
      %639 = vperm.xlu0 %638, %v517
      %v640 = vpop.permute.xlu0 %639
      %643 = vset.pattern.permute.xlu0 0
      %644 = vperm.xlu0 %643, %v518
      %v645 = vpop.permute.xlu0 %644
      %648 = vset.pattern.permute.xlu0 0
      %649 = vperm.xlu0 %648, %v519
      %v650 = vpop.permute.xlu0 %649
      %653 = vset.pattern.permute.xlu0 0
      %654 = vperm.xlu0 %653, %v520
      %v655 = vpop.permute.xlu0 %654
      %658 = vset.pattern.permute.xlu0 0
      %659 = vperm.xlu0 %658, %v521
      %v660 = vpop.permute.xlu0 %659
      %663 = vset.pattern.permute.xlu0 0
      %664 = vperm.xlu0 %663, %v522
      %v665 = vpop.permute.xlu0 %664
      %668 = vset.pattern.permute.xlu0 0
      %669 = vperm.xlu0 %668, %v523
      %v670 = vpop.permute.xlu0 %669
      %673 = vset.pattern.permute.xlu0 0
      %674 = vperm.xlu0 %673, %v524
      %v675 = vpop.permute.xlu0 %674
      %678 = vset.pattern.permute.xlu0 0
      %679 = vperm.xlu0 %678, %v525
      %v680 = vpop.permute.xlu0 %679
      %683 = vset.pattern.permute.xlu0 0
      %684 = vperm.xlu0 %683, %v526
      %v685 = vpop.permute.xlu0 %684
      %688 = vset.pattern.permute.xlu0 0
      %689 = vperm.xlu0 %688, %v527
      %v690 = vpop.permute.xlu0 %689
      %693 = vset.pattern.permute.xlu0 0
      %694 = vperm.xlu0 %693, %v528
      %v695 = vpop.permute.xlu0 %694
      %698 = vset.pattern.permute.xlu0 0
      %699 = vperm.xlu0 %698, %v529
      %v700 = vpop.permute.xlu0 %699
      %703 = vset.pattern.permute.xlu0 0
      %704 = vperm.xlu0 %703, %v530
      %v705 = vpop.permute.xlu0 %704
      %708 = vset.pattern.permute.xlu0 0
      %709 = vperm.xlu0 %708, %v531
      %v710 = vpop.permute.xlu0 %709
      %713 = vset.pattern.permute.xlu0 0
      %714 = vperm.xlu0 %713, %v532
      %v715 = vpop.permute.xlu0 %714
      %718 = vset.pattern.permute.xlu0 0
      %719 = vperm.xlu0 %718, %v533
      %v720 = vpop.permute.xlu0 %719
      %723 = vset.pattern.permute.xlu0 0
      %724 = vperm.xlu0 %723, %v534
      %v725 = vpop.permute.xlu0 %724
      %728 = vset.pattern.permute.xlu0 0
      %729 = vperm.xlu0 %728, %v535
      %v730 = vpop.permute.xlu0 %729
      %733 = vset.pattern.permute.xlu0 0
      %734 = vperm.xlu0 %733, %v536
      %v735 = vpop.permute.xlu0 %734
      %738 = vset.pattern.permute.xlu0 0
      %739 = vperm.xlu0 %738, %v537
      %v740 = vpop.permute.xlu0 %739
      %743 = vset.pattern.permute.xlu0 0
      %744 = vperm.xlu0 %743, %v538
      %v745 = vpop.permute.xlu0 %744
      %748 = vset.pattern.permute.xlu0 0
      %749 = vperm.xlu0 %748, %v539
      %v750 = vpop.permute.xlu0 %749
      %753 = vset.pattern.permute.xlu0 0
      %754 = vperm.xlu0 %753, %v540
      %v755 = vpop.permute.xlu0 %754
      %758 = vset.pattern.permute.xlu0 0
      %759 = vperm.xlu0 %758, %v541
      %v760 = vpop.permute.xlu0 %759
      %763 = vset.pattern.permute.xlu0 0
      %764 = vperm.xlu0 %763, %v542
      %v765 = vpop.permute.xlu0 %764
      %768 = vset.pattern.permute.xlu0 0
      %769 = vperm.xlu0 %768, %v543
      %v770 = vpop.permute.xlu0 %769
      %773 = vset.pattern.permute.xlu0 0
      %774 = vperm.xlu0 %773, %v544
      %v775 = vpop.permute.xlu0 %774
      %778 = vset.pattern.permute.xlu0 0
      %779 = vperm.xlu0 %778, %v545
      %v780 = vpop.permute.xlu0 %779
      %783 = vset.pattern.permute.xlu0 0
      %784 = vperm.xlu0 %783, %v546
      %v785 = vpop.permute.xlu0 %784
      %788 = vset.pattern.permute.xlu0 0
      %789 = vperm.xlu0 %788, %v547
      %v790 = vpop.permute.xlu0 %789
      %793 = vset.pattern.permute.xlu0 0
      %794 = vperm.xlu0 %793, %v548
      %v795 = vpop.permute.xlu0 %794
      %798 = vset.pattern.permute.xlu0 0
      %799 = vperm.xlu0 %798, %v549
      %v800 = vpop.permute.xlu0 %799
      %803 = vset.pattern.permute.xlu0 0
      %804 = vperm.xlu0 %803, %v550
      %v805 = vpop.permute.xlu0 %804
      %808 = vset.pattern.permute.xlu0 0
      %809 = vperm.xlu0 %808, %v551
      %v810 = vpop.permute.xlu0 %809
      %813 = vset.pattern.permute.xlu0 0
      %814 = vperm.xlu0 %813, %v552
      %v815 = vpop.permute.xlu0 %814
      %818 = vset.pattern.permute.xlu0 0
      %819 = vperm.xlu0 %818, %v553
      %v820 = vpop.permute.xlu0 %819
      %823 = vset.pattern.permute.xlu0 0
      %824 = vperm.xlu0 %823, %v554
      %v825 = vpop.permute.xlu0 %824
      %828 = vset.pattern.permute.xlu0 0
      %829 = vperm.xlu0 %828, %v555
      %v830 = vpop.permute.xlu0 %829
      %833 = vset.pattern.permute.xlu0 0
      %834 = vperm.xlu0 %833, %v556
      %v835 = vpop.permute.xlu0 %834
      %838 = vset.pattern.permute.xlu0 0
      %839 = vperm.xlu0 %838, %v557
      %v840 = vpop.permute.xlu0 %839
      %843 = vset.pattern.permute.xlu0 0
      %844 = vperm.xlu0 %843, %v558
      %v845 = vpop.permute.xlu0 %844
      %848 = vset.pattern.permute.xlu0 0
      %849 = vperm.xlu0 %848, %v559
      %v850 = vpop.permute.xlu0 %849
      %853 = vset.pattern.permute.xlu0 0
      %854 = vperm.xlu0 %853, %v560
      %v855 = vpop.permute.xlu0 %854
      %858 = vset.pattern.permute.xlu0 0
      %859 = vperm.xlu0 %858, %v561
      %v860 = vpop.permute.xlu0 %859
      %863 = vset.pattern.permute.xlu0 0
      %864 = vperm.xlu0 %863, %v562
      %v865 = vpop.permute.xlu0 %864
      %868 = vset.pattern.permute.xlu0 0
      %869 = vperm.xlu0 %868, %v563
      %v870 = vpop.permute.xlu0 %869
      %873 = vset.pattern.permute.xlu0 0
      %874 = vperm.xlu0 %873, %v564
      %v875 = vpop.permute.xlu0 %874
      %878 = vset.pattern.permute.xlu0 0
      %879 = vperm.xlu0 %878, %v565
      %v880 = vpop.permute.xlu0 %879
      %883 = vset.pattern.permute.xlu0 0
      %884 = vperm.xlu0 %883, %v566
      %v885 = vpop.permute.xlu0 %884
      %vm887 = vcmask 31744
      %v889 = vsel %vm887, %v439, 0
      %v892 = vsel %vm887, %v440, 0
      %v895 = vsel %vm887, %v441, 0
      %v898 = vsel %vm887, %v442, 0
      %v901 = vsel %vm887, %v443, 0
      %v904 = vsel %vm887, %v444, 0
      %v907 = vsel %vm887, %v445, 0
      %v910 = vsel %vm887, %v446, 0
      %v913 = vsel %vm887, %v447, 0
      %v916 = vsel %vm887, %v448, 0
      %v919 = vsel %vm887, %v449, 0
      %v922 = vsel %vm887, %v450, 0
      %v925 = vsel %vm887, %v451, 0
      %v928 = vsel %vm887, %v452, 0
      %v931 = vsel %vm887, %v453, 0
      %v934 = vsel %vm887, %v454, 0
      %v937 = vsel %vm887, %v455, 0
      %v940 = vsel %vm887, %v456, 0
      %v943 = vsel %vm887, %v457, 0
      %v946 = vsel %vm887, %v458, 0
      %v949 = vsel %vm887, %v459, 0
      %v952 = vsel %vm887, %v460, 0
      %v955 = vsel %vm887, %v461, 0
      %v958 = vsel %vm887, %v462, 0
      %v961 = vsel %vm887, %v463, 0
      %v964 = vsel %vm887, %v464, 0
      %v967 = vsel %vm887, %v465, 0
      %v970 = vsel %vm887, %v466, 0
      %v973 = vsel %vm887, %v467, 0
      %v976 = vsel %vm887, %v468, 0
      %v979 = vsel %vm887, %v469, 0
      %v982 = vsel %vm887, %v470, 0
      %v985 = vsel %vm887, %v471, 0
      %v988 = vsel %vm887, %v472, 0
      %v991 = vsel %vm887, %v473, 0
      %v994 = vsel %vm887, %v474, 0
      %v997 = vsel %vm887, %v475, 0
      %v1000 = vsel %vm887, %v476, 0
      %v1003 = vsel %vm887, %v477, 0
      %v1006 = vsel %vm887, %v478, 0
      %v1009 = vsel %vm887, %v479, 0
      %v1012 = vsel %vm887, %v480, 0
      %v1015 = vsel %vm887, %v481, 0
      %v1018 = vsel %vm887, %v482, 0
      %v1021 = vsel %vm887, %v483, 0
      %v1024 = vsel %vm887, %v484, 0
      %v1027 = vsel %vm887, %v485, 0
      %v1030 = vsel %vm887, %v486, 0
      %v1033 = vsel %vm887, %v487, 0
      %v1036 = vsel %vm887, %v488, 0
      %v1039 = vsel %vm887, %v489, 0
      %v1042 = vsel %vm887, %v490, 0
      %v1045 = vsel %vm887, %v491, 0
      %v1048 = vsel %vm887, %v492, 0
      %v1051 = vsel %vm887, %v493, 0
      %v1054 = vsel %vm887, %v494, 0
      %v1057 = vsel %vm887, %v495, 0
      %v1060 = vsel %vm887, %v496, 0
      %v1063 = vsel %vm887, %v497, 0
      %v1066 = vsel %vm887, %v498, 0
      %v1069 = vsel %vm887, %v499, 0
      %v1072 = vsel %vm887, %v500, 0
      %v1075 = vsel %vm887, %v501, 0
      %v1078 = vsel %vm887, %v502, 0
      %vm1080 = vcmask 1043456
      %v1082 = vsel %vm1080, %v438, 0
      %1084 = vmatprep.subr.mxu0 0.0
      %1085 = vmatpush1.msra.mxu0 0.0
      %1086 = vmatprep.subr.mxu0 0.0
      %1087 = vmatpush1.msra.mxu0 0.0
      %1088 = vmatprep.subr.mxu0 0.0
      %1089 = vmatpush1.msra.mxu0 0.0
      %1090 = vmatprep.subr.mxu0 0.0
      %1091 = vmatpush1.msra.mxu0 0.0
      %1092 = vmatprep.subr.mxu0 0.0
      %1093 = vmatpush1.msra.mxu0 0.0
      %1094 = vmatprep.subr.mxu0 0.0
      %1095 = vmatpush1.msra.mxu0 0.0
      %1096 = vmatprep.subr.mxu0 0.0
      %1097 = vmatpush1.msra.mxu0 0.0
      %1098 = vmatprep.subr.mxu0 0.0
      %1099 = vmatpush1.msra.mxu0 0.0
      %1100 = vmatprep.subr.mxu0 0.0
      %1101 = vmatpush1.msra.mxu0 0.0
      %1102 = vmatprep.subr.mxu0 0.0
      %1103 = vmatpush1.msra.mxu0 0.0
      %1104 = vmatprep.subr.mxu0 0.0
      %1105 = vmatpush1.msra.mxu0 0.0
      %1106 = vmatprep.subr.mxu0 0.0
      %1107 = vmatpush1.msra.mxu0 0.0
      %1108 = vmatprep.subr.mxu0 0.0
      %1109 = vmatpush1.msra.mxu0 0.0
      %1110 = vmatprep.subr.mxu0 0.0
      %1111 = vmatpush1.msra.mxu0 0.0
      %1112 = vmatprep.subr.mxu0 0.0
      %1113 = vmatpush1.msra.mxu0 0.0
      %1114 = vmatprep.subr.mxu0 0.0
      %1115 = vmatpush1.msra.mxu0 %v1082
      %1116 = vmatprep.subr.mxu0 0.0
      %1117 = vmatpush2.msra.mxu0 0.0
      %1118 = vmatprep.subr.mxu0 0.0
      %1119 = vmatpush2.msra.mxu0 0.0
      %1120 = vmatprep.subr.mxu0 0.0
      %1121 = vmatpush2.msra.mxu0 0.0
      %1122 = vmatprep.subr.mxu0 0.0
      %1123 = vmatpush2.msra.mxu0 0.0
      %1124 = vmatprep.subr.mxu0 0.0
      %1125 = vmatpush2.msra.mxu0 0.0
      %1126 = vmatprep.subr.mxu0 0.0
      %1127 = vmatpush2.msra.mxu0 0.0
      %1128 = vmatprep.subr.mxu0 0.0
      %1129 = vmatpush2.msra.mxu0 0.0
      %1130 = vmatprep.subr.mxu0 0.0
      %1131 = vmatpush2.msra.mxu0 0.0
      %1132 = vmatprep.subr.mxu0 0.0
      %1133 = vmatpush2.msra.mxu0 0.0
      %1134 = vmatprep.subr.mxu0 0.0
      %1135 = vmatpush2.msra.mxu0 0.0
      %1136 = vmatprep.subr.mxu0 0.0
      %1137 = vmatpush2.msra.mxu0 0.0
      %1138 = vmatprep.subr.mxu0 0.0
      %1139 = vmatpush2.msra.mxu0 0.0
      %1140 = vmatprep.subr.mxu0 0.0
      %1141 = vmatpush2.msra.mxu0 0.0
      %1142 = vmatprep.subr.mxu0 0.0
      %1143 = vmatpush2.msra.mxu0 0.0
      %1144 = vmatprep.subr.mxu0 0.0
      %1145 = vmatpush2.msra.mxu0 0.0
      %1146 = vmatprep.subr.mxu0 0.0
      %1147 = vmatpush2.msra.mxu0 0.0
      %1148 = vmatprep.mubr.f32.mxu0 0.0
      %1149 = vmatmul.mubr.f32.gmra.mxu0 %v889
      %v1150 = vpop.f32.mrf.mxu0
      %v1151 = vadd.f32 %v570, %v1150
      %v1152 = vpop.f32.mrf.mxu0
      %1153 = vmatprep.mubr.f32.mxu0 0.0
      %1154 = vmatmul.mubr.f32.gmra.mxu0 %v892
      %v1155 = vpop.f32.mrf.mxu0
      %v1156 = vadd.f32 %v575, %v1155
      %v1157 = vpop.f32.mrf.mxu0
      %1158 = vmatprep.mubr.f32.mxu0 0.0
      %1159 = vmatmul.mubr.f32.gmra.mxu0 %v895
      %v1160 = vpop.f32.mrf.mxu0
      %v1161 = vadd.f32 %v580, %v1160
      %v1162 = vpop.f32.mrf.mxu0
      %1163 = vmatprep.mubr.f32.mxu0 0.0
      %1164 = vmatmul.mubr.f32.gmra.mxu0 %v898
      %v1165 = vpop.f32.mrf.mxu0
      %v1166 = vadd.f32 %v585, %v1165
      %v1167 = vpop.f32.mrf.mxu0
      %1168 = vmatprep.mubr.f32.mxu0 0.0
      %1169 = vmatmul.mubr.f32.gmra.mxu0 %v901
      %v1170 = vpop.f32.mrf.mxu0
      %v1171 = vadd.f32 %v590, %v1170
      %v1172 = vpop.f32.mrf.mxu0
      %1173 = vmatprep.mubr.f32.mxu0 0.0
      %1174 = vmatmul.mubr.f32.gmra.mxu0 %v904
      %v1175 = vpop.f32.mrf.mxu0
      %v1176 = vadd.f32 %v595, %v1175
      %v1177 = vpop.f32.mrf.mxu0
      %1178 = vmatprep.mubr.f32.mxu0 0.0
      %1179 = vmatmul.mubr.f32.gmra.mxu0 %v907
      %v1180 = vpop.f32.mrf.mxu0
      %v1181 = vadd.f32 %v600, %v1180
      %v1182 = vpop.f32.mrf.mxu0
      %1183 = vmatprep.mubr.f32.mxu0 0.0
      %1184 = vmatmul.mubr.f32.gmra.mxu0 %v910
      %v1185 = vpop.f32.mrf.mxu0
      %v1186 = vadd.f32 %v605, %v1185
      %v1187 = vpop.f32.mrf.mxu0
      %1188 = vmatprep.mubr.f32.mxu0 0.0
      %1189 = vmatmul.mubr.f32.gmra.mxu0 %v913
      %v1190 = vpop.f32.mrf.mxu0
      %v1191 = vadd.f32 %v610, %v1190
      %v1192 = vpop.f32.mrf.mxu0
      %1193 = vmatprep.mubr.f32.mxu0 0.0
      %1194 = vmatmul.mubr.f32.gmra.mxu0 %v916
      %v1195 = vpop.f32.mrf.mxu0
      %v1196 = vadd.f32 %v615, %v1195
      %v1197 = vpop.f32.mrf.mxu0
      %1198 = vmatprep.mubr.f32.mxu0 0.0
      %1199 = vmatmul.mubr.f32.gmra.mxu0 %v919
      %v1200 = vpop.f32.mrf.mxu0
      %v1201 = vadd.f32 %v620, %v1200
      %v1202 = vpop.f32.mrf.mxu0
      %1203 = vmatprep.mubr.f32.mxu0 0.0
      %1204 = vmatmul.mubr.f32.gmra.mxu0 %v922
      %v1205 = vpop.f32.mrf.mxu0
      %v1206 = vadd.f32 %v625, %v1205
      %v1207 = vpop.f32.mrf.mxu0
      %1208 = vmatprep.mubr.f32.mxu0 0.0
      %1209 = vmatmul.mubr.f32.gmra.mxu0 %v925
      %v1210 = vpop.f32.mrf.mxu0
      %v1211 = vadd.f32 %v630, %v1210
      %v1212 = vpop.f32.mrf.mxu0
      %1213 = vmatprep.mubr.f32.mxu0 0.0
      %1214 = vmatmul.mubr.f32.gmra.mxu0 %v928
      %v1215 = vpop.f32.mrf.mxu0
      %v1216 = vadd.f32 %v635, %v1215
      %v1217 = vpop.f32.mrf.mxu0
      %1218 = vmatprep.mubr.f32.mxu0 0.0
      %1219 = vmatmul.mubr.f32.gmra.mxu0 %v931
      %v1220 = vpop.f32.mrf.mxu0
      %v1221 = vadd.f32 %v640, %v1220
      %v1222 = vpop.f32.mrf.mxu0
      %1223 = vmatprep.mubr.f32.mxu0 0.0
      %1224 = vmatmul.mubr.f32.gmra.mxu0 %v934
      %v1225 = vpop.f32.mrf.mxu0
      %v1226 = vadd.f32 %v645, %v1225
      %v1227 = vpop.f32.mrf.mxu0
      %1228 = vmatprep.mubr.f32.mxu0 0.0
      %1229 = vmatmul.mubr.f32.gmra.mxu0 %v937
      %v1230 = vpop.f32.mrf.mxu0
      %v1231 = vadd.f32 %v650, %v1230
      %v1232 = vpop.f32.mrf.mxu0
      %1233 = vmatprep.mubr.f32.mxu0 0.0
      %1234 = vmatmul.mubr.f32.gmra.mxu0 %v940
      %v1235 = vpop.f32.mrf.mxu0
      %v1236 = vadd.f32 %v655, %v1235
      %v1237 = vpop.f32.mrf.mxu0
      %1238 = vmatprep.mubr.f32.mxu0 0.0
      %1239 = vmatmul.mubr.f32.gmra.mxu0 %v943
      %v1240 = vpop.f32.mrf.mxu0
      %v1241 = vadd.f32 %v660, %v1240
      %v1242 = vpop.f32.mrf.mxu0
      %1243 = vmatprep.mubr.f32.mxu0 0.0
      %1244 = vmatmul.mubr.f32.gmra.mxu0 %v946
      %v1245 = vpop.f32.mrf.mxu0
      %v1246 = vadd.f32 %v665, %v1245
      %v1247 = vpop.f32.mrf.mxu0
      %1248 = vmatprep.mubr.f32.mxu0 0.0
      %1249 = vmatmul.mubr.f32.gmra.mxu0 %v949
      %v1250 = vpop.f32.mrf.mxu0
      %v1251 = vadd.f32 %v670, %v1250
      %v1252 = vpop.f32.mrf.mxu0
      %1253 = vmatprep.mubr.f32.mxu0 0.0
      %1254 = vmatmul.mubr.f32.gmra.mxu0 %v952
      %v1255 = vpop.f32.mrf.mxu0
      %v1256 = vadd.f32 %v675, %v1255
      %v1257 = vpop.f32.mrf.mxu0
      %1258 = vmatprep.mubr.f32.mxu0 0.0
      %1259 = vmatmul.mubr.f32.gmra.mxu0 %v955
      %v1260 = vpop.f32.mrf.mxu0
      %v1261 = vadd.f32 %v680, %v1260
      %v1262 = vpop.f32.mrf.mxu0
      %1263 = vmatprep.mubr.f32.mxu0 0.0
      %1264 = vmatmul.mubr.f32.gmra.mxu0 %v958
      %v1265 = vpop.f32.mrf.mxu0
      %v1266 = vadd.f32 %v685, %v1265
      %v1267 = vpop.f32.mrf.mxu0
      %1268 = vmatprep.mubr.f32.mxu0 0.0
      %1269 = vmatmul.mubr.f32.gmra.mxu0 %v961
      %v1270 = vpop.f32.mrf.mxu0
      %v1271 = vadd.f32 %v690, %v1270
      %v1272 = vpop.f32.mrf.mxu0
      %1273 = vmatprep.mubr.f32.mxu0 0.0
      %1274 = vmatmul.mubr.f32.gmra.mxu0 %v964
      %v1275 = vpop.f32.mrf.mxu0
      %v1276 = vadd.f32 %v695, %v1275
      %v1277 = vpop.f32.mrf.mxu0
      %1278 = vmatprep.mubr.f32.mxu0 0.0
      %1279 = vmatmul.mubr.f32.gmra.mxu0 %v967
      %v1280 = vpop.f32.mrf.mxu0
      %v1281 = vadd.f32 %v700, %v1280
      %v1282 = vpop.f32.mrf.mxu0
      %1283 = vmatprep.mubr.f32.mxu0 0.0
      %1284 = vmatmul.mubr.f32.gmra.mxu0 %v970
      %v1285 = vpop.f32.mrf.mxu0
      %v1286 = vadd.f32 %v705, %v1285
      %v1287 = vpop.f32.mrf.mxu0
      %1288 = vmatprep.mubr.f32.mxu0 0.0
      %1289 = vmatmul.mubr.f32.gmra.mxu0 %v973
      %v1290 = vpop.f32.mrf.mxu0
      %v1291 = vadd.f32 %v710, %v1290
      %v1292 = vpop.f32.mrf.mxu0
      %1293 = vmatprep.mubr.f32.mxu0 0.0
      %1294 = vmatmul.mubr.f32.gmra.mxu0 %v976
      %v1295 = vpop.f32.mrf.mxu0
      %v1296 = vadd.f32 %v715, %v1295
      %v1297 = vpop.f32.mrf.mxu0
      %1298 = vmatprep.mubr.f32.mxu0 0.0
      %1299 = vmatmul.mubr.f32.gmra.mxu0 %v979
      %v1300 = vpop.f32.mrf.mxu0
      %v1301 = vadd.f32 %v720, %v1300
      %v1302 = vpop.f32.mrf.mxu0
      %1303 = vmatprep.mubr.f32.mxu0 0.0
      %1304 = vmatmul.mubr.f32.gmra.mxu0 %v982
      %v1305 = vpop.f32.mrf.mxu0
      %v1306 = vadd.f32 %v725, %v1305
      %v1307 = vpop.f32.mrf.mxu0
      %1308 = vmatprep.mubr.f32.mxu0 0.0
      %1309 = vmatmul.mubr.f32.gmra.mxu0 %v985
      %v1310 = vpop.f32.mrf.mxu0
      %v1311 = vadd.f32 %v730, %v1310
      %v1312 = vpop.f32.mrf.mxu0
      %1313 = vmatprep.mubr.f32.mxu0 0.0
      %1314 = vmatmul.mubr.f32.gmra.mxu0 %v988
      %v1315 = vpop.f32.mrf.mxu0
      %v1316 = vadd.f32 %v735, %v1315
      %v1317 = vpop.f32.mrf.mxu0
      %1318 = vmatprep.mubr.f32.mxu0 0.0
      %1319 = vmatmul.mubr.f32.gmra.mxu0 %v991
      %v1320 = vpop.f32.mrf.mxu0
      %v1321 = vadd.f32 %v740, %v1320
      %v1322 = vpop.f32.mrf.mxu0
      %1323 = vmatprep.mubr.f32.mxu0 0.0
      %1324 = vmatmul.mubr.f32.gmra.mxu0 %v994
      %v1325 = vpop.f32.mrf.mxu0
      %v1326 = vadd.f32 %v745, %v1325
      %v1327 = vpop.f32.mrf.mxu0
      %1328 = vmatprep.mubr.f32.mxu0 0.0
      %1329 = vmatmul.mubr.f32.gmra.mxu0 %v997
      %v1330 = vpop.f32.mrf.mxu0
      %v1331 = vadd.f32 %v750, %v1330
      %v1332 = vpop.f32.mrf.mxu0
      %1333 = vmatprep.mubr.f32.mxu0 0.0
      %1334 = vmatmul.mubr.f32.gmra.mxu0 %v1000
      %v1335 = vpop.f32.mrf.mxu0
      %v1336 = vadd.f32 %v755, %v1335
      %v1337 = vpop.f32.mrf.mxu0
      %1338 = vmatprep.mubr.f32.mxu0 0.0
      %1339 = vmatmul.mubr.f32.gmra.mxu0 %v1003
      %v1340 = vpop.f32.mrf.mxu0
      %v1341 = vadd.f32 %v760, %v1340
      %v1342 = vpop.f32.mrf.mxu0
      %1343 = vmatprep.mubr.f32.mxu0 0.0
      %1344 = vmatmul.mubr.f32.gmra.mxu0 %v1006
      %v1345 = vpop.f32.mrf.mxu0
      %v1346 = vadd.f32 %v765, %v1345
      %v1347 = vpop.f32.mrf.mxu0
      %1348 = vmatprep.mubr.f32.mxu0 0.0
      %1349 = vmatmul.mubr.f32.gmra.mxu0 %v1009
      %v1350 = vpop.f32.mrf.mxu0
      %v1351 = vadd.f32 %v770, %v1350
      %v1352 = vpop.f32.mrf.mxu0
      %1353 = vmatprep.mubr.f32.mxu0 0.0
      %1354 = vmatmul.mubr.f32.gmra.mxu0 %v1012
      %v1355 = vpop.f32.mrf.mxu0
      %v1356 = vadd.f32 %v775, %v1355
      %v1357 = vpop.f32.mrf.mxu0
      %1358 = vmatprep.mubr.f32.mxu0 0.0
      %1359 = vmatmul.mubr.f32.gmra.mxu0 %v1015
      %v1360 = vpop.f32.mrf.mxu0
      %v1361 = vadd.f32 %v780, %v1360
      %v1362 = vpop.f32.mrf.mxu0
      %1363 = vmatprep.mubr.f32.mxu0 0.0
      %1364 = vmatmul.mubr.f32.gmra.mxu0 %v1018
      %v1365 = vpop.f32.mrf.mxu0
      %v1366 = vadd.f32 %v785, %v1365
      %v1367 = vpop.f32.mrf.mxu0
      %1368 = vmatprep.mubr.f32.mxu0 0.0
      %1369 = vmatmul.mubr.f32.gmra.mxu0 %v1021
      %v1370 = vpop.f32.mrf.mxu0
      %v1371 = vadd.f32 %v790, %v1370
      %v1372 = vpop.f32.mrf.mxu0
      %1373 = vmatprep.mubr.f32.mxu0 0.0
      %1374 = vmatmul.mubr.f32.gmra.mxu0 %v1024
      %v1375 = vpop.f32.mrf.mxu0
      %v1376 = vadd.f32 %v795, %v1375
      %v1377 = vpop.f32.mrf.mxu0
      %1378 = vmatprep.mubr.f32.mxu0 0.0
      %1379 = vmatmul.mubr.f32.gmra.mxu0 %v1027
      %v1380 = vpop.f32.mrf.mxu0
      %v1381 = vadd.f32 %v800, %v1380
      %v1382 = vpop.f32.mrf.mxu0
      %1383 = vmatprep.mubr.f32.mxu0 0.0
      %1384 = vmatmul.mubr.f32.gmra.mxu0 %v1030
      %v1385 = vpop.f32.mrf.mxu0
      %v1386 = vadd.f32 %v805, %v1385
      %v1387 = vpop.f32.mrf.mxu0
      %1388 = vmatprep.mubr.f32.mxu0 0.0
      %1389 = vmatmul.mubr.f32.gmra.mxu0 %v1033
      %v1390 = vpop.f32.mrf.mxu0
      %v1391 = vadd.f32 %v810, %v1390
      %v1392 = vpop.f32.mrf.mxu0
      %1393 = vmatprep.mubr.f32.mxu0 0.0
      %1394 = vmatmul.mubr.f32.gmra.mxu0 %v1036
      %v1395 = vpop.f32.mrf.mxu0
      %v1396 = vadd.f32 %v815, %v1395
      %v1397 = vpop.f32.mrf.mxu0
      %1398 = vmatprep.mubr.f32.mxu0 0.0
      %1399 = vmatmul.mubr.f32.gmra.mxu0 %v1039
      %v1400 = vpop.f32.mrf.mxu0
      %v1401 = vadd.f32 %v820, %v1400
      %v1402 = vpop.f32.mrf.mxu0
      %1403 = vmatprep.mubr.f32.mxu0 0.0
      %1404 = vmatmul.mubr.f32.gmra.mxu0 %v1042
      %v1405 = vpop.f32.mrf.mxu0
      %v1406 = vadd.f32 %v825, %v1405
      %v1407 = vpop.f32.mrf.mxu0
      %1408 = vmatprep.mubr.f32.mxu0 0.0
      %1409 = vmatmul.mubr.f32.gmra.mxu0 %v1045
      %v1410 = vpop.f32.mrf.mxu0
      %v1411 = vadd.f32 %v830, %v1410
      %v1412 = vpop.f32.mrf.mxu0
      %1413 = vmatprep.mubr.f32.mxu0 0.0
      %1414 = vmatmul.mubr.f32.gmra.mxu0 %v1048
      %v1415 = vpop.f32.mrf.mxu0
      %v1416 = vadd.f32 %v835, %v1415
      %v1417 = vpop.f32.mrf.mxu0
      %1418 = vmatprep.mubr.f32.mxu0 0.0
      %1419 = vmatmul.mubr.f32.gmra.mxu0 %v1051
      %v1420 = vpop.f32.mrf.mxu0
      %v1421 = vadd.f32 %v840, %v1420
      %v1422 = vpop.f32.mrf.mxu0
      %1423 = vmatprep.mubr.f32.mxu0 0.0
      %1424 = vmatmul.mubr.f32.gmra.mxu0 %v1054
      %v1425 = vpop.f32.mrf.mxu0
      %v1426 = vadd.f32 %v845, %v1425
      %v1427 = vpop.f32.mrf.mxu0
      %1428 = vmatprep.mubr.f32.mxu0 0.0
      %1429 = vmatmul.mubr.f32.gmra.mxu0 %v1057
      %v1430 = vpop.f32.mrf.mxu0
      %v1431 = vadd.f32 %v850, %v1430
      %v1432 = vpop.f32.mrf.mxu0
      %1433 = vmatprep.mubr.f32.mxu0 0.0
      %1434 = vmatmul.mubr.f32.gmra.mxu0 %v1060
      %v1435 = vpop.f32.mrf.mxu0
      %v1436 = vadd.f32 %v855, %v1435
      %v1437 = vpop.f32.mrf.mxu0
      %1438 = vmatprep.mubr.f32.mxu0 0.0
      %1439 = vmatmul.mubr.f32.gmra.mxu0 %v1063
      %v1440 = vpop.f32.mrf.mxu0
      %v1441 = vadd.f32 %v860, %v1440
      %v1442 = vpop.f32.mrf.mxu0
      %1443 = vmatprep.mubr.f32.mxu0 0.0
      %1444 = vmatmul.mubr.f32.gmra.mxu0 %v1066
      %v1445 = vpop.f32.mrf.mxu0
      %v1446 = vadd.f32 %v865, %v1445
      %v1447 = vpop.f32.mrf.mxu0
      %1448 = vmatprep.mubr.f32.mxu0 0.0
      %1449 = vmatmul.mubr.f32.gmra.mxu0 %v1069
      %v1450 = vpop.f32.mrf.mxu0
      %v1451 = vadd.f32 %v870, %v1450
      %v1452 = vpop.f32.mrf.mxu0
      %1453 = vmatprep.mubr.f32.mxu0 0.0
      %1454 = vmatmul.mubr.f32.gmra.mxu0 %v1072
      %v1455 = vpop.f32.mrf.mxu0
      %v1456 = vadd.f32 %v875, %v1455
      %v1457 = vpop.f32.mrf.mxu0
      %1458 = vmatprep.mubr.f32.mxu0 0.0
      %1459 = vmatmul.mubr.f32.gmra.mxu0 %v1075
      %v1460 = vpop.f32.mrf.mxu0
      %v1461 = vadd.f32 %v880, %v1460
      %v1462 = vpop.f32.mrf.mxu0
      %1463 = vmatprep.mubr.f32.mxu0 0.0
      %1464 = vmatmul.mubr.f32.gmra.mxu0 %v1078
      %v1465 = vpop.f32.mrf.mxu0
      %v1466 = vadd.f32 %v885, %v1465
      %v1467 = vpop.f32.mrf.mxu0
      %1468 = vdwg.mxu0
      %v1469 = vmax.f32 %v1151, 0.0
      %v1470 = vmax.f32 %v1156, 0.0
      %v1471 = vmax.f32 %v1161, 0.0
      %v1472 = vmax.f32 %v1166, 0.0
      %v1473 = vmax.f32 %v1171, 0.0
      %v1474 = vmax.f32 %v1176, 0.0
      %v1475 = vmax.f32 %v1181, 0.0
      %v1476 = vmax.f32 %v1186, 0.0
      %v1477 = vmax.f32 %v1191, 0.0
      %v1478 = vmax.f32 %v1196, 0.0
      %v1479 = vmax.f32 %v1201, 0.0
      %v1480 = vmax.f32 %v1206, 0.0
      %v1481 = vmax.f32 %v1211, 0.0
      %v1482 = vmax.f32 %v1216, 0.0
      %v1483 = vmax.f32 %v1221, 0.0
      %v1484 = vmax.f32 %v1226, 0.0
      %v1485 = vmax.f32 %v1231, 0.0
      %v1486 = vmax.f32 %v1236, 0.0
      %v1487 = vmax.f32 %v1241, 0.0
      %v1488 = vmax.f32 %v1246, 0.0
      %v1489 = vmax.f32 %v1251, 0.0
      %v1490 = vmax.f32 %v1256, 0.0
      %v1491 = vmax.f32 %v1261, 0.0
      %v1492 = vmax.f32 %v1266, 0.0
      %v1493 = vmax.f32 %v1271, 0.0
      %v1494 = vmax.f32 %v1276, 0.0
      %v1495 = vmax.f32 %v1281, 0.0
      %v1496 = vmax.f32 %v1286, 0.0
      %v1497 = vmax.f32 %v1291, 0.0
      %v1498 = vmax.f32 %v1296, 0.0
      %v1499 = vmax.f32 %v1301, 0.0
      %v1500 = vmax.f32 %v1306, 0.0
      %v1501 = vmax.f32 %v1311, 0.0
      %v1502 = vmax.f32 %v1316, 0.0
      %v1503 = vmax.f32 %v1321, 0.0
      %v1504 = vmax.f32 %v1326, 0.0
      %v1505 = vmax.f32 %v1331, 0.0
      %v1506 = vmax.f32 %v1336, 0.0
      %v1507 = vmax.f32 %v1341, 0.0
      %v1508 = vmax.f32 %v1346, 0.0
      %v1509 = vmax.f32 %v1351, 0.0
      %v1510 = vmax.f32 %v1356, 0.0
      %v1511 = vmax.f32 %v1361, 0.0
      %v1512 = vmax.f32 %v1366, 0.0
      %v1513 = vmax.f32 %v1371, 0.0
      %v1514 = vmax.f32 %v1376, 0.0
      %v1515 = vmax.f32 %v1381, 0.0
      %v1516 = vmax.f32 %v1386, 0.0
      %v1517 = vmax.f32 %v1391, 0.0
      %v1518 = vmax.f32 %v1396, 0.0
      %v1519 = vmax.f32 %v1401, 0.0
      %v1520 = vmax.f32 %v1406, 0.0
      %v1521 = vmax.f32 %v1411, 0.0
      %v1522 = vmax.f32 %v1416, 0.0
      %v1523 = vmax.f32 %v1421, 0.0
      %v1524 = vmax.f32 %v1426, 0.0
      %v1525 = vmax.f32 %v1431, 0.0
      %v1526 = vmax.f32 %v1436, 0.0
      %v1527 = vmax.f32 %v1441, 0.0
      %v1528 = vmax.f32 %v1446, 0.0
      %v1529 = vmax.f32 %v1451, 0.0
      %v1530 = vmax.f32 %v1456, 0.0
      %v1531 = vmax.f32 %v1461, 0.0
      %v1532 = vmax.f32 %v1466, 0.0
      %vm1533 = vcmask 64512
      %v1534 = vsel %vm1533, %v1469, 0.0
      %1535 = vadd.xlane.f32.xlu0 %v1534
      %v1536 = vpop.xlane.xlu0 %1535
      %v1537 = vsel %vm1533, %v1470, 0.0
      %1538 = vadd.xlane.f32.xlu0 %v1537
      %v1539 = vpop.xlane.xlu0 %1538
      %v1540 = vsel %vm1533, %v1471, 0.0
      %1541 = vadd.xlane.f32.xlu0 %v1540
      %v1542 = vpop.xlane.xlu0 %1541
      %v1543 = vsel %vm1533, %v1472, 0.0
      %1544 = vadd.xlane.f32.xlu0 %v1543
      %v1545 = vpop.xlane.xlu0 %1544
      %v1546 = vsel %vm1533, %v1473, 0.0
      %1547 = vadd.xlane.f32.xlu0 %v1546
      %v1548 = vpop.xlane.xlu0 %1547
      %v1549 = vsel %vm1533, %v1474, 0.0
      %1550 = vadd.xlane.f32.xlu0 %v1549
      %v1551 = vpop.xlane.xlu0 %1550
      %v1552 = vsel %vm1533, %v1475, 0.0
      %1553 = vadd.xlane.f32.xlu0 %v1552
      %v1554 = vpop.xlane.xlu0 %1553
      %v1555 = vsel %vm1533, %v1476, 0.0
      %1556 = vadd.xlane.f32.xlu0 %v1555
      %v1557 = vpop.xlane.xlu0 %1556
      %v1558 = vsel %vm1533, %v1477, 0.0
      %1559 = vadd.xlane.f32.xlu0 %v1558
      %v1560 = vpop.xlane.xlu0 %1559
      %v1561 = vsel %vm1533, %v1478, 0.0
      %1562 = vadd.xlane.f32.xlu0 %v1561
      %v1563 = vpop.xlane.xlu0 %1562
      %v1564 = vsel %vm1533, %v1479, 0.0
      %1565 = vadd.xlane.f32.xlu0 %v1564
      %v1566 = vpop.xlane.xlu0 %1565
      %v1567 = vsel %vm1533, %v1480, 0.0
      %1568 = vadd.xlane.f32.xlu0 %v1567
      %v1569 = vpop.xlane.xlu0 %1568
      %v1570 = vsel %vm1533, %v1481, 0.0
      %1571 = vadd.xlane.f32.xlu0 %v1570
      %v1572 = vpop.xlane.xlu0 %1571
      %v1573 = vsel %vm1533, %v1482, 0.0
      %1574 = vadd.xlane.f32.xlu0 %v1573
      %v1575 = vpop.xlane.xlu0 %1574
      %v1576 = vsel %vm1533, %v1483, 0.0
      %1577 = vadd.xlane.f32.xlu0 %v1576
      %v1578 = vpop.xlane.xlu0 %1577
      %v1579 = vsel %vm1533, %v1484, 0.0
      %1580 = vadd.xlane.f32.xlu0 %v1579
      %v1581 = vpop.xlane.xlu0 %1580
      %v1582 = vsel %vm1533, %v1485, 0.0
      %1583 = vadd.xlane.f32.xlu0 %v1582
      %v1584 = vpop.xlane.xlu0 %1583
      %v1585 = vsel %vm1533, %v1486, 0.0
      %1586 = vadd.xlane.f32.xlu0 %v1585
      %v1587 = vpop.xlane.xlu0 %1586
      %v1588 = vsel %vm1533, %v1487, 0.0
      %1589 = vadd.xlane.f32.xlu0 %v1588
      %v1590 = vpop.xlane.xlu0 %1589
      %v1591 = vsel %vm1533, %v1488, 0.0
      %1592 = vadd.xlane.f32.xlu0 %v1591
      %v1593 = vpop.xlane.xlu0 %1592
      %v1594 = vsel %vm1533, %v1489, 0.0
      %1595 = vadd.xlane.f32.xlu0 %v1594
      %v1596 = vpop.xlane.xlu0 %1595
      %v1597 = vsel %vm1533, %v1490, 0.0
      %1598 = vadd.xlane.f32.xlu0 %v1597
      %v1599 = vpop.xlane.xlu0 %1598
      %v1600 = vsel %vm1533, %v1491, 0.0
      %1601 = vadd.xlane.f32.xlu0 %v1600
      %v1602 = vpop.xlane.xlu0 %1601
      %v1603 = vsel %vm1533, %v1492, 0.0
      %1604 = vadd.xlane.f32.xlu0 %v1603
      %v1605 = vpop.xlane.xlu0 %1604
      %v1606 = vsel %vm1533, %v1493, 0.0
      %1607 = vadd.xlane.f32.xlu0 %v1606
      %v1608 = vpop.xlane.xlu0 %1607
      %v1609 = vsel %vm1533, %v1494, 0.0
      %1610 = vadd.xlane.f32.xlu0 %v1609
      %v1611 = vpop.xlane.xlu0 %1610
      %v1612 = vsel %vm1533, %v1495, 0.0
      %1613 = vadd.xlane.f32.xlu0 %v1612
      %v1614 = vpop.xlane.xlu0 %1613
      %v1615 = vsel %vm1533, %v1496, 0.0
      %1616 = vadd.xlane.f32.xlu0 %v1615
      %v1617 = vpop.xlane.xlu0 %1616
      %v1618 = vsel %vm1533, %v1497, 0.0
      %1619 = vadd.xlane.f32.xlu0 %v1618
      %v1620 = vpop.xlane.xlu0 %1619
      %v1621 = vsel %vm1533, %v1498, 0.0
      %1622 = vadd.xlane.f32.xlu0 %v1621
      %v1623 = vpop.xlane.xlu0 %1622
      %v1624 = vsel %vm1533, %v1499, 0.0
      %1625 = vadd.xlane.f32.xlu0 %v1624
      %v1626 = vpop.xlane.xlu0 %1625
      %v1627 = vsel %vm1533, %v1500, 0.0
      %1628 = vadd.xlane.f32.xlu0 %v1627
      %v1629 = vpop.xlane.xlu0 %1628
      %v1630 = vsel %vm1533, %v1501, 0.0
      %1631 = vadd.xlane.f32.xlu0 %v1630
      %v1632 = vpop.xlane.xlu0 %1631
      %v1633 = vsel %vm1533, %v1502, 0.0
      %1634 = vadd.xlane.f32.xlu0 %v1633
      %v1635 = vpop.xlane.xlu0 %1634
      %v1636 = vsel %vm1533, %v1503, 0.0
      %1637 = vadd.xlane.f32.xlu0 %v1636
      %v1638 = vpop.xlane.xlu0 %1637
      %v1639 = vsel %vm1533, %v1504, 0.0
      %1640 = vadd.xlane.f32.xlu0 %v1639
      %v1641 = vpop.xlane.xlu0 %1640
      %v1642 = vsel %vm1533, %v1505, 0.0
      %1643 = vadd.xlane.f32.xlu0 %v1642
      %v1644 = vpop.xlane.xlu0 %1643
      %v1645 = vsel %vm1533, %v1506, 0.0
      %1646 = vadd.xlane.f32.xlu0 %v1645
      %v1647 = vpop.xlane.xlu0 %1646
      %v1648 = vsel %vm1533, %v1507, 0.0
      %1649 = vadd.xlane.f32.xlu0 %v1648
      %v1650 = vpop.xlane.xlu0 %1649
      %v1651 = vsel %vm1533, %v1508, 0.0
      %1652 = vadd.xlane.f32.xlu0 %v1651
      %v1653 = vpop.xlane.xlu0 %1652
      %v1654 = vsel %vm1533, %v1509, 0.0
      %1655 = vadd.xlane.f32.xlu0 %v1654
      %v1656 = vpop.xlane.xlu0 %1655
      %v1657 = vsel %vm1533, %v1510, 0.0
      %1658 = vadd.xlane.f32.xlu0 %v1657
      %v1659 = vpop.xlane.xlu0 %1658
      %v1660 = vsel %vm1533, %v1511, 0.0
      %1661 = vadd.xlane.f32.xlu0 %v1660
      %v1662 = vpop.xlane.xlu0 %1661
      %v1663 = vsel %vm1533, %v1512, 0.0
      %1664 = vadd.xlane.f32.xlu0 %v1663
      %v1665 = vpop.xlane.xlu0 %1664
      %v1666 = vsel %vm1533, %v1513, 0.0
      %1667 = vadd.xlane.f32.xlu0 %v1666
      %v1668 = vpop.xlane.xlu0 %1667
      %v1669 = vsel %vm1533, %v1514, 0.0
      %1670 = vadd.xlane.f32.xlu0 %v1669
      %v1671 = vpop.xlane.xlu0 %1670
      %v1672 = vsel %vm1533, %v1515, 0.0
      %1673 = vadd.xlane.f32.xlu0 %v1672
      %v1674 = vpop.xlane.xlu0 %1673
      %v1675 = vsel %vm1533, %v1516, 0.0
      %1676 = vadd.xlane.f32.xlu0 %v1675
      %v1677 = vpop.xlane.xlu0 %1676
      %v1678 = vsel %vm1533, %v1517, 0.0
      %1679 = vadd.xlane.f32.xlu0 %v1678
      %v1680 = vpop.xlane.xlu0 %1679
      %v1681 = vsel %vm1533, %v1518, 0.0
      %1682 = vadd.xlane.f32.xlu0 %v1681
      %v1683 = vpop.xlane.xlu0 %1682
      %v1684 = vsel %vm1533, %v1519, 0.0
      %1685 = vadd.xlane.f32.xlu0 %v1684
      %v1686 = vpop.xlane.xlu0 %1685
      %v1687 = vsel %vm1533, %v1520, 0.0
      %1688 = vadd.xlane.f32.xlu0 %v1687
      %v1689 = vpop.xlane.xlu0 %1688
      %v1690 = vsel %vm1533, %v1521, 0.0
      %1691 = vadd.xlane.f32.xlu0 %v1690
      %v1692 = vpop.xlane.xlu0 %1691
      %v1693 = vsel %vm1533, %v1522, 0.0
      %1694 = vadd.xlane.f32.xlu0 %v1693
      %v1695 = vpop.xlane.xlu0 %1694
      %v1696 = vsel %vm1533, %v1523, 0.0
      %1697 = vadd.xlane.f32.xlu0 %v1696
      %v1698 = vpop.xlane.xlu0 %1697
      %v1699 = vsel %vm1533, %v1524, 0.0
      %1700 = vadd.xlane.f32.xlu0 %v1699
      %v1701 = vpop.xlane.xlu0 %1700
      %v1702 = vsel %vm1533, %v1525, 0.0
      %1703 = vadd.xlane.f32.xlu0 %v1702
      %v1704 = vpop.xlane.xlu0 %1703
      %v1705 = vsel %vm1533, %v1526, 0.0
      %1706 = vadd.xlane.f32.xlu0 %v1705
      %v1707 = vpop.xlane.xlu0 %1706
      %v1708 = vsel %vm1533, %v1527, 0.0
      %1709 = vadd.xlane.f32.xlu0 %v1708
      %v1710 = vpop.xlane.xlu0 %1709
      %v1711 = vsel %vm1533, %v1528, 0.0
      %1712 = vadd.xlane.f32.xlu0 %v1711
      %v1713 = vpop.xlane.xlu0 %1712
      %v1714 = vsel %vm1533, %v1529, 0.0
      %1715 = vadd.xlane.f32.xlu0 %v1714
      %v1716 = vpop.xlane.xlu0 %1715
      %v1717 = vsel %vm1533, %v1530, 0.0
      %1718 = vadd.xlane.f32.xlu0 %v1717
      %v1719 = vpop.xlane.xlu0 %1718
      %v1720 = vsel %vm1533, %v1531, 0.0
      %1721 = vadd.xlane.f32.xlu0 %v1720
      %v1722 = vpop.xlane.xlu0 %1721
      %v1723 = vsel %vm1533, %v1532, 0.0
      %1724 = vadd.xlane.f32.xlu0 %v1723
      %v1725 = vpop.xlane.xlu0 %1724
      %v1726 = vmul.f32 %v1469, %v1469
      %v1727 = vmul.f32 %v1470, %v1470
      %v1728 = vmul.f32 %v1471, %v1471
      %v1729 = vmul.f32 %v1472, %v1472
      %v1730 = vmul.f32 %v1473, %v1473
      %v1731 = vmul.f32 %v1474, %v1474
      %v1732 = vmul.f32 %v1475, %v1475
      %v1733 = vmul.f32 %v1476, %v1476
      %v1734 = vmul.f32 %v1477, %v1477
      %v1735 = vmul.f32 %v1478, %v1478
      %v1736 = vmul.f32 %v1479, %v1479
      %v1737 = vmul.f32 %v1480, %v1480
      %v1738 = vmul.f32 %v1481, %v1481
      %v1739 = vmul.f32 %v1482, %v1482
      %v1740 = vmul.f32 %v1483, %v1483
      %v1741 = vmul.f32 %v1484, %v1484
      %v1742 = vmul.f32 %v1485, %v1485
      %v1743 = vmul.f32 %v1486, %v1486
      %v1744 = vmul.f32 %v1487, %v1487
      %v1745 = vmul.f32 %v1488, %v1488
      %v1746 = vmul.f32 %v1489, %v1489
      %v1747 = vmul.f32 %v1490, %v1490
      %v1748 = vmul.f32 %v1491, %v1491
      %v1749 = vmul.f32 %v1492, %v1492
      %v1750 = vmul.f32 %v1493, %v1493
      %v1751 = vmul.f32 %v1494, %v1494
      %v1752 = vmul.f32 %v1495, %v1495
      %v1753 = vmul.f32 %v1496, %v1496
      %v1754 = vmul.f32 %v1497, %v1497
      %v1755 = vmul.f32 %v1498, %v1498
      %v1756 = vmul.f32 %v1499, %v1499
      %v1757 = vmul.f32 %v1500, %v1500
      %v1758 = vmul.f32 %v1501, %v1501
      %v1759 = vmul.f32 %v1502, %v1502
      %v1760 = vmul.f32 %v1503, %v1503
      %v1761 = vmul.f32 %v1504, %v1504
      %v1762 = vmul.f32 %v1505, %v1505
      %v1763 = vmul.f32 %v1506, %v1506
      %v1764 = vmul.f32 %v1507, %v1507
      %v1765 = vmul.f32 %v1508, %v1508
      %v1766 = vmul.f32 %v1509, %v1509
      %v1767 = vmul.f32 %v1510, %v1510
      %v1768 = vmul.f32 %v1511, %v1511
      %v1769 = vmul.f32 %v1512, %v1512
      %v1770 = vmul.f32 %v1513, %v1513
      %v1771 = vmul.f32 %v1514, %v1514
      %v1772 = vmul.f32 %v1515, %v1515
      %v1773 = vmul.f32 %v1516, %v1516
      %v1774 = vmul.f32 %v1517, %v1517
      %v1775 = vmul.f32 %v1518, %v1518
      %v1776 = vmul.f32 %v1519, %v1519
      %v1777 = vmul.f32 %v1520, %v1520
      %v1778 = vmul.f32 %v1521, %v1521
      %v1779 = vmul.f32 %v1522, %v1522
      %v1780 = vmul.f32 %v1523, %v1523
      %v1781 = vmul.f32 %v1524, %v1524
      %v1782 = vmul.f32 %v1525, %v1525
      %v1783 = vmul.f32 %v1526, %v1526
      %v1784 = vmul.f32 %v1527, %v1527
      %v1785 = vmul.f32 %v1528, %v1528
      %v1786 = vmul.f32 %v1529, %v1529
      %v1787 = vmul.f32 %v1530, %v1530
      %v1788 = vmul.f32 %v1531, %v1531
      %v1789 = vmul.f32 %v1532, %v1532
      %v1790 = vsel %vm1533, %v1726, 0.0
      %1791 = vadd.xlane.f32.xlu0 %v1790
      %v1792 = vpop.xlane.xlu0 %1791
      %v1793 = vsel %vm1533, %v1727, 0.0
      %1794 = vadd.xlane.f32.xlu0 %v1793
      %v1795 = vpop.xlane.xlu0 %1794
      %v1796 = vsel %vm1533, %v1728, 0.0
      %1797 = vadd.xlane.f32.xlu0 %v1796
      %v1798 = vpop.xlane.xlu0 %1797
      %v1799 = vsel %vm1533, %v1729, 0.0
      %1800 = vadd.xlane.f32.xlu0 %v1799
      %v1801 = vpop.xlane.xlu0 %1800
      %v1802 = vsel %vm1533, %v1730, 0.0
      %1803 = vadd.xlane.f32.xlu0 %v1802
      %v1804 = vpop.xlane.xlu0 %1803
      %v1805 = vsel %vm1533, %v1731, 0.0
      %1806 = vadd.xlane.f32.xlu0 %v1805
      %v1807 = vpop.xlane.xlu0 %1806
      %v1808 = vsel %vm1533, %v1732, 0.0
      %1809 = vadd.xlane.f32.xlu0 %v1808
      %v1810 = vpop.xlane.xlu0 %1809
      %v1811 = vsel %vm1533, %v1733, 0.0
      %1812 = vadd.xlane.f32.xlu0 %v1811
      %v1813 = vpop.xlane.xlu0 %1812
      %v1814 = vsel %vm1533, %v1734, 0.0
      %1815 = vadd.xlane.f32.xlu0 %v1814
      %v1816 = vpop.xlane.xlu0 %1815
      %v1817 = vsel %vm1533, %v1735, 0.0
      %1818 = vadd.xlane.f32.xlu0 %v1817
      %v1819 = vpop.xlane.xlu0 %1818
      %v1820 = vsel %vm1533, %v1736, 0.0
      %1821 = vadd.xlane.f32.xlu0 %v1820
      %v1822 = vpop.xlane.xlu0 %1821
      %v1823 = vsel %vm1533, %v1737, 0.0
      %1824 = vadd.xlane.f32.xlu0 %v1823
      %v1825 = vpop.xlane.xlu0 %1824
      %v1826 = vsel %vm1533, %v1738, 0.0
      %1827 = vadd.xlane.f32.xlu0 %v1826
      %v1828 = vpop.xlane.xlu0 %1827
      %v1829 = vsel %vm1533, %v1739, 0.0
      %1830 = vadd.xlane.f32.xlu0 %v1829
      %v1831 = vpop.xlane.xlu0 %1830
      %v1832 = vsel %vm1533, %v1740, 0.0
      %1833 = vadd.xlane.f32.xlu0 %v1832
      %v1834 = vpop.xlane.xlu0 %1833
      %v1835 = vsel %vm1533, %v1741, 0.0
      %1836 = vadd.xlane.f32.xlu0 %v1835
      %v1837 = vpop.xlane.xlu0 %1836
      %v1838 = vsel %vm1533, %v1742, 0.0
      %1839 = vadd.xlane.f32.xlu0 %v1838
      %v1840 = vpop.xlane.xlu0 %1839
      %v1841 = vsel %vm1533, %v1743, 0.0
      %1842 = vadd.xlane.f32.xlu0 %v1841
      %v1843 = vpop.xlane.xlu0 %1842
      %v1844 = vsel %vm1533, %v1744, 0.0
      %1845 = vadd.xlane.f32.xlu0 %v1844
      %v1846 = vpop.xlane.xlu0 %1845
      %v1847 = vsel %vm1533, %v1745, 0.0
      %1848 = vadd.xlane.f32.xlu0 %v1847
      %v1849 = vpop.xlane.xlu0 %1848
      %v1850 = vsel %vm1533, %v1746, 0.0
      %1851 = vadd.xlane.f32.xlu0 %v1850
      %v1852 = vpop.xlane.xlu0 %1851
      %v1853 = vsel %vm1533, %v1747, 0.0
      %1854 = vadd.xlane.f32.xlu0 %v1853
      %v1855 = vpop.xlane.xlu0 %1854
      %v1856 = vsel %vm1533, %v1748, 0.0
      %1857 = vadd.xlane.f32.xlu0 %v1856
      %v1858 = vpop.xlane.xlu0 %1857
      %v1859 = vsel %vm1533, %v1749, 0.0
      %1860 = vadd.xlane.f32.xlu0 %v1859
      %v1861 = vpop.xlane.xlu0 %1860
      %v1862 = vsel %vm1533, %v1750, 0.0
      %1863 = vadd.xlane.f32.xlu0 %v1862
      %v1864 = vpop.xlane.xlu0 %1863
      %v1865 = vsel %vm1533, %v1751, 0.0
      %1866 = vadd.xlane.f32.xlu0 %v1865
      %v1867 = vpop.xlane.xlu0 %1866
      %v1868 = vsel %vm1533, %v1752, 0.0
      %1869 = vadd.xlane.f32.xlu0 %v1868
      %v1870 = vpop.xlane.xlu0 %1869
      %v1871 = vsel %vm1533, %v1753, 0.0
      %1872 = vadd.xlane.f32.xlu0 %v1871
      %v1873 = vpop.xlane.xlu0 %1872
      %v1874 = vsel %vm1533, %v1754, 0.0
      %1875 = vadd.xlane.f32.xlu0 %v1874
      %v1876 = vpop.xlane.xlu0 %1875
      %v1877 = vsel %vm1533, %v1755, 0.0
      %1878 = vadd.xlane.f32.xlu0 %v1877
      %v1879 = vpop.xlane.xlu0 %1878
      %v1880 = vsel %vm1533, %v1756, 0.0
      %1881 = vadd.xlane.f32.xlu0 %v1880
      %v1882 = vpop.xlane.xlu0 %1881
      %v1883 = vsel %vm1533, %v1757, 0.0
      %1884 = vadd.xlane.f32.xlu0 %v1883
      %v1885 = vpop.xlane.xlu0 %1884
      %v1886 = vsel %vm1533, %v1758, 0.0
      %1887 = vadd.xlane.f32.xlu0 %v1886
      %v1888 = vpop.xlane.xlu0 %1887
      %v1889 = vsel %vm1533, %v1759, 0.0
      %1890 = vadd.xlane.f32.xlu0 %v1889
      %v1891 = vpop.xlane.xlu0 %1890
      %v1892 = vsel %vm1533, %v1760, 0.0
      %1893 = vadd.xlane.f32.xlu0 %v1892
      %v1894 = vpop.xlane.xlu0 %1893
      %v1895 = vsel %vm1533, %v1761, 0.0
      %1896 = vadd.xlane.f32.xlu0 %v1895
      %v1897 = vpop.xlane.xlu0 %1896
      %v1898 = vsel %vm1533, %v1762, 0.0
      %1899 = vadd.xlane.f32.xlu0 %v1898
      %v1900 = vpop.xlane.xlu0 %1899
      %v1901 = vsel %vm1533, %v1763, 0.0
      %1902 = vadd.xlane.f32.xlu0 %v1901
      %v1903 = vpop.xlane.xlu0 %1902
      %v1904 = vsel %vm1533, %v1764, 0.0
      %1905 = vadd.xlane.f32.xlu0 %v1904
      %v1906 = vpop.xlane.xlu0 %1905
      %v1907 = vsel %vm1533, %v1765, 0.0
      %1908 = vadd.xlane.f32.xlu0 %v1907
      %v1909 = vpop.xlane.xlu0 %1908
      %v1910 = vsel %vm1533, %v1766, 0.0
      %1911 = vadd.xlane.f32.xlu0 %v1910
      %v1912 = vpop.xlane.xlu0 %1911
      %v1913 = vsel %vm1533, %v1767, 0.0
      %1914 = vadd.xlane.f32.xlu0 %v1913
      %v1915 = vpop.xlane.xlu0 %1914
      %v1916 = vsel %vm1533, %v1768, 0.0
      %1917 = vadd.xlane.f32.xlu0 %v1916
      %v1918 = vpop.xlane.xlu0 %1917
      %v1919 = vsel %vm1533, %v1769, 0.0
      %1920 = vadd.xlane.f32.xlu0 %v1919
      %v1921 = vpop.xlane.xlu0 %1920
      %v1922 = vsel %vm1533, %v1770, 0.0
      %1923 = vadd.xlane.f32.xlu0 %v1922
      %v1924 = vpop.xlane.xlu0 %1923
      %v1925 = vsel %vm1533, %v1771, 0.0
      %1926 = vadd.xlane.f32.xlu0 %v1925
      %v1927 = vpop.xlane.xlu0 %1926
      %v1928 = vsel %vm1533, %v1772, 0.0
      %1929 = vadd.xlane.f32.xlu0 %v1928
      %v1930 = vpop.xlane.xlu0 %1929
      %v1931 = vsel %vm1533, %v1773, 0.0
      %1932 = vadd.xlane.f32.xlu0 %v1931
      %v1933 = vpop.xlane.xlu0 %1932
      %v1934 = vsel %vm1533, %v1774, 0.0
      %1935 = vadd.xlane.f32.xlu0 %v1934
      %v1936 = vpop.xlane.xlu0 %1935
      %v1937 = vsel %vm1533, %v1775, 0.0
      %1938 = vadd.xlane.f32.xlu0 %v1937
      %v1939 = vpop.xlane.xlu0 %1938
      %v1940 = vsel %vm1533, %v1776, 0.0
      %1941 = vadd.xlane.f32.xlu0 %v1940
      %v1942 = vpop.xlane.xlu0 %1941
      %v1943 = vsel %vm1533, %v1777, 0.0
      %1944 = vadd.xlane.f32.xlu0 %v1943
      %v1945 = vpop.xlane.xlu0 %1944
      %v1946 = vsel %vm1533, %v1778, 0.0
      %1947 = vadd.xlane.f32.xlu0 %v1946
      %v1948 = vpop.xlane.xlu0 %1947
      %v1949 = vsel %vm1533, %v1779, 0.0
      %1950 = vadd.xlane.f32.xlu0 %v1949
      %v1951 = vpop.xlane.xlu0 %1950
      %v1952 = vsel %vm1533, %v1780, 0.0
      %1953 = vadd.xlane.f32.xlu0 %v1952
      %v1954 = vpop.xlane.xlu0 %1953
      %v1955 = vsel %vm1533, %v1781, 0.0
      %1956 = vadd.xlane.f32.xlu0 %v1955
      %v1957 = vpop.xlane.xlu0 %1956
      %v1958 = vsel %vm1533, %v1782, 0.0
      %1959 = vadd.xlane.f32.xlu0 %v1958
      %v1960 = vpop.xlane.xlu0 %1959
      %v1961 = vsel %vm1533, %v1783, 0.0
      %1962 = vadd.xlane.f32.xlu0 %v1961
      %v1963 = vpop.xlane.xlu0 %1962
      %v1964 = vsel %vm1533, %v1784, 0.0
      %1965 = vadd.xlane.f32.xlu0 %v1964
      %v1966 = vpop.xlane.xlu0 %1965
      %v1967 = vsel %vm1533, %v1785, 0.0
      %1968 = vadd.xlane.f32.xlu0 %v1967
      %v1969 = vpop.xlane.xlu0 %1968
      %v1970 = vsel %vm1533, %v1786, 0.0
      %1971 = vadd.xlane.f32.xlu0 %v1970
      %v1972 = vpop.xlane.xlu0 %1971
      %v1973 = vsel %vm1533, %v1787, 0.0
      %1974 = vadd.xlane.f32.xlu0 %v1973
      %v1975 = vpop.xlane.xlu0 %1974
      %v1976 = vsel %vm1533, %v1788, 0.0
      %1977 = vadd.xlane.f32.xlu0 %v1976
      %v1978 = vpop.xlane.xlu0 %1977
      %v1979 = vsel %vm1533, %v1789, 0.0
      %1980 = vadd.xlane.f32.xlu0 %v1979
      %v1981 = vpop.xlane.xlu0 %1980
      %v1982 = vld [vmem:[%s7] sm:$0xff]
      %v1983 = vld [vmem:[%s7 + $0x8] sm:$0xff]
      %v1984 = vld [vmem:[%s7 + $0x10] sm:$0xff]
      %v1985 = vld [vmem:[%s7 + $0x18] sm:$0xff]
      %v1986 = vld [vmem:[%s7 + $0x20] sm:$0xff]
      %v1987 = vld [vmem:[%s7 + $0x28] sm:$0xff]
      %v1988 = vld [vmem:[%s7 + $0x30] sm:$0xff]
      %v1989 = vld [vmem:[%s7 + $0x38] sm:$0xff]
      %1990 = vmatprep.subr.mxu0 0.0
      %1991 = vmatpush1.msra.mxu0 %v1581
      %1992 = vmatprep.subr.mxu0 0.0
      %1993 = vmatpush1.msra.mxu0 %v1578
      %1994 = vmatprep.subr.mxu0 0.0
      %1995 = vmatpush1.msra.mxu0 %v1575
      %1996 = vmatprep.subr.mxu0 0.0
      %1997 = vmatpush1.msra.mxu0 %v1572
      %1998 = vmatprep.subr.mxu0 0.0
      %1999 = vmatpush1.msra.mxu0 %v1569
      %2000 = vmatprep.subr.mxu0 0.0
      %2001 = vmatpush1.msra.mxu0 %v1566
      %2002 = vmatprep.subr.mxu0 0.0
      %2003 = vmatpush1.msra.mxu0 %v1563
      %2004 = vmatprep.subr.mxu0 0.0
      %2005 = vmatpush1.msra.mxu0 %v1560
      %2006 = vmatprep.subr.mxu0 0.0
      %2007 = vmatpush1.msra.mxu0 %v1557
      %2008 = vmatprep.subr.mxu0 0.0
      %2009 = vmatpush1.msra.mxu0 %v1554
      %2010 = vmatprep.subr.mxu0 0.0
      %2011 = vmatpush1.msra.mxu0 %v1551
      %2012 = vmatprep.subr.mxu0 0.0
      %2013 = vmatpush1.msra.mxu0 %v1548
      %2014 = vmatprep.subr.mxu0 0.0
      %2015 = vmatpush1.msra.mxu0 %v1545
      %2016 = vmatprep.subr.mxu0 0.0
      %2017 = vmatpush1.msra.mxu0 %v1542
      %2018 = vmatprep.subr.mxu0 0.0
      %2019 = vmatpush1.msra.mxu0 %v1539
      %2020 = vmatprep.subr.mxu0 0.0
      %2021 = vmatpush1.msra.mxu0 %v1536
      %2022 = vmatprep.subr.mxu0 0.0
      %2023 = vmatpush2.msra.mxu0 %v1629
      %2024 = vmatprep.subr.mxu0 0.0
      %2025 = vmatpush2.msra.mxu0 %v1626
      %2026 = vmatprep.subr.mxu0 0.0
      %2027 = vmatpush2.msra.mxu0 %v1623
      %2028 = vmatprep.subr.mxu0 0.0
      %2029 = vmatpush2.msra.mxu0 %v1620
      %2030 = vmatprep.subr.mxu0 0.0
      %2031 = vmatpush2.msra.mxu0 %v1617
      %2032 = vmatprep.subr.mxu0 0.0
      %2033 = vmatpush2.msra.mxu0 %v1614
      %2034 = vmatprep.subr.mxu0 0.0
      %2035 = vmatpush2.msra.mxu0 %v1611
      %2036 = vmatprep.subr.mxu0 0.0
      %2037 = vmatpush2.msra.mxu0 %v1608
      %2038 = vmatprep.subr.mxu0 0.0
      %2039 = vmatpush2.msra.mxu0 %v1605
      %2040 = vmatprep.subr.mxu0 0.0
      %2041 = vmatpush2.msra.mxu0 %v1602
      %2042 = vmatprep.subr.mxu0 0.0
      %2043 = vmatpush2.msra.mxu0 %v1599
      %2044 = vmatprep.subr.mxu0 0.0
      %2045 = vmatpush2.msra.mxu0 %v1596
      %2046 = vmatprep.subr.mxu0 0.0
      %2047 = vmatpush2.msra.mxu0 %v1593
      %2048 = vmatprep.subr.mxu0 0.0
      %2049 = vmatpush2.msra.mxu0 %v1590
      %2050 = vmatprep.subr.mxu0 0.0
      %2051 = vmatpush2.msra.mxu0 %v1587
      %2052 = vmatprep.subr.mxu0 0.0
      %2053 = vmatpush2.msra.mxu0 %v1584
      %2054 = vmatprep.mubr.f32.mxu0 %v1983
      %2055 = vmatmul.mubr.f32.gmra.mxu0 %v1982
      %v2056 = vpop.f32.mrf.mxu0
      %v2057 = vadd.f32 0.0, %v2056
      %v2058 = vpop.f32.mrf.mxu0
      %2059 = vmatprep.mubr.f32.mxu0 %v1987
      %2060 = vmatmul.mubr.f32.gmra.mxu0 %v1986
      %v2061 = vpop.f32.mrf.mxu0
      %v2062 = vadd.f32 0.0, %v2061
      %v2063 = vpop.f32.mrf.mxu0
      %2064 = vdwg.mxu0
      %2065 = vmatprep.subr.mxu0 0.0
      %2066 = vmatpush1.msra.mxu0 %v1677
      %2067 = vmatprep.subr.mxu0 0.0
      %2068 = vmatpush1.msra.mxu0 %v1674
      %2069 = vmatprep.subr.mxu0 0.0
      %2070 = vmatpush1.msra.mxu0 %v1671
      %2071 = vmatprep.subr.mxu0 0.0
      %2072 = vmatpush1.msra.mxu0 %v1668
      %2073 = vmatprep.subr.mxu0 0.0
      %2074 = vmatpush1.msra.mxu0 %v1665
      %2075 = vmatprep.subr.mxu0 0.0
      %2076 = vmatpush1.msra.mxu0 %v1662
      %2077 = vmatprep.subr.mxu0 0.0
      %2078 = vmatpush1.msra.mxu0 %v1659
      %2079 = vmatprep.subr.mxu0 0.0
      %2080 = vmatpush1.msra.mxu0 %v1656
      %2081 = vmatprep.subr.mxu0 0.0
      %2082 = vmatpush1.msra.mxu0 %v1653
      %2083 = vmatprep.subr.mxu0 0.0
      %2084 = vmatpush1.msra.mxu0 %v1650
      %2085 = vmatprep.subr.mxu0 0.0
      %2086 = vmatpush1.msra.mxu0 %v1647
      %2087 = vmatprep.subr.mxu0 0.0
      %2088 = vmatpush1.msra.mxu0 %v1644
      %2089 = vmatprep.subr.mxu0 0.0
      %2090 = vmatpush1.msra.mxu0 %v1641
      %2091 = vmatprep.subr.mxu0 0.0
      %2092 = vmatpush1.msra.mxu0 %v1638
      %2093 = vmatprep.subr.mxu0 0.0
      %2094 = vmatpush1.msra.mxu0 %v1635
      %2095 = vmatprep.subr.mxu0 0.0
      %2096 = vmatpush1.msra.mxu0 %v1632
      %2097 = vmatprep.subr.mxu0 0.0
      %2098 = vmatpush2.msra.mxu0 %v1725
      %2099 = vmatprep.subr.mxu0 0.0
      %2100 = vmatpush2.msra.mxu0 %v1722
      %2101 = vmatprep.subr.mxu0 0.0
      %2102 = vmatpush2.msra.mxu0 %v1719
      %2103 = vmatprep.subr.mxu0 0.0
      %2104 = vmatpush2.msra.mxu0 %v1716
      %2105 = vmatprep.subr.mxu0 0.0
      %2106 = vmatpush2.msra.mxu0 %v1713
      %2107 = vmatprep.subr.mxu0 0.0
      %2108 = vmatpush2.msra.mxu0 %v1710
      %2109 = vmatprep.subr.mxu0 0.0
      %2110 = vmatpush2.msra.mxu0 %v1707
      %2111 = vmatprep.subr.mxu0 0.0
      %2112 = vmatpush2.msra.mxu0 %v1704
      %2113 = vmatprep.subr.mxu0 0.0
      %2114 = vmatpush2.msra.mxu0 %v1701
      %2115 = vmatprep.subr.mxu0 0.0
      %2116 = vmatpush2.msra.mxu0 %v1698
      %2117 = vmatprep.subr.mxu0 0.0
      %2118 = vmatpush2.msra.mxu0 %v1695
      %2119 = vmatprep.subr.mxu0 0.0
      %2120 = vmatpush2.msra.mxu0 %v1692
      %2121 = vmatprep.subr.mxu0 0.0
      %2122 = vmatpush2.msra.mxu0 %v1689
      %2123 = vmatprep.subr.mxu0 0.0
      %2124 = vmatpush2.msra.mxu0 %v1686
      %2125 = vmatprep.subr.mxu0 0.0
      %2126 = vmatpush2.msra.mxu0 %v1683
      %2127 = vmatprep.subr.mxu0 0.0
      %2128 = vmatpush2.msra.mxu0 %v1680
      %2129 = vmatprep.mubr.f32.mxu0 %v1985
      %2130 = vmatmul.mubr.f32.gmra.mxu0 %v1984
      %v2131 = vpop.f32.mrf.mxu0
      %v2132 = vadd.f32 %v2057, %v2131
      %v2133 = vpop.f32.mrf.mxu0
      %2134 = vmatprep.mubr.f32.mxu0 %v1989
      %2135 = vmatmul.mubr.f32.gmra.mxu0 %v1988
      %v2136 = vpop.f32.mrf.mxu0
      %v2137 = vadd.f32 %v2062, %v2136
      %v2138 = vpop.f32.mrf.mxu0
      %2139 = vdwg.mxu0
      %v2140 = vrcp.pop 256.0
      %v2141 = vmul.f32 %v2132, %v2140
      %v2142 = vmul.f32 %v2137, %v2140
      %2143 = vmatprep.subr.mxu0 0.0
      %2144 = vmatpush1.msra.mxu0 %v1837
      %2145 = vmatprep.subr.mxu0 0.0
      %2146 = vmatpush1.msra.mxu0 %v1834
      %2147 = vmatprep.subr.mxu0 0.0
      %2148 = vmatpush1.msra.mxu0 %v1831
      %2149 = vmatprep.subr.mxu0 0.0
      %2150 = vmatpush1.msra.mxu0 %v1828
      %2151 = vmatprep.subr.mxu0 0.0
      %2152 = vmatpush1.msra.mxu0 %v1825
      %2153 = vmatprep.subr.mxu0 0.0
      %2154 = vmatpush1.msra.mxu0 %v1822
      %2155 = vmatprep.subr.mxu0 0.0
      %2156 = vmatpush1.msra.mxu0 %v1819
      %2157 = vmatprep.subr.mxu0 0.0
      %2158 = vmatpush1.msra.mxu0 %v1816
      %2159 = vmatprep.subr.mxu0 0.0
      %2160 = vmatpush1.msra.mxu0 %v1813
      %2161 = vmatprep.subr.mxu0 0.0
      %2162 = vmatpush1.msra.mxu0 %v1810
      %2163 = vmatprep.subr.mxu0 0.0
      %2164 = vmatpush1.msra.mxu0 %v1807
      %2165 = vmatprep.subr.mxu0 0.0
      %2166 = vmatpush1.msra.mxu0 %v1804
      %2167 = vmatprep.subr.mxu0 0.0
      %2168 = vmatpush1.msra.mxu0 %v1801
      %2169 = vmatprep.subr.mxu0 0.0
      %2170 = vmatpush1.msra.mxu0 %v1798
      %2171 = vmatprep.subr.mxu0 0.0
      %2172 = vmatpush1.msra.mxu0 %v1795
      %2173 = vmatprep.subr.mxu0 0.0
      %2174 = vmatpush1.msra.mxu0 %v1792
      %2175 = vmatprep.subr.mxu0 0.0
      %2176 = vmatpush2.msra.mxu0 %v1885
      %2177 = vmatprep.subr.mxu0 0.0
      %2178 = vmatpush2.msra.mxu0 %v1882
      %2179 = vmatprep.subr.mxu0 0.0
      %2180 = vmatpush2.msra.mxu0 %v1879
      %2181 = vmatprep.subr.mxu0 0.0
      %2182 = vmatpush2.msra.mxu0 %v1876
      %2183 = vmatprep.subr.mxu0 0.0
      %2184 = vmatpush2.msra.mxu0 %v1873
      %2185 = vmatprep.subr.mxu0 0.0
      %2186 = vmatpush2.msra.mxu0 %v1870
      %2187 = vmatprep.subr.mxu0 0.0
      %2188 = vmatpush2.msra.mxu0 %v1867
      %2189 = vmatprep.subr.mxu0 0.0
      %2190 = vmatpush2.msra.mxu0 %v1864
      %2191 = vmatprep.subr.mxu0 0.0
      %2192 = vmatpush2.msra.mxu0 %v1861
      %2193 = vmatprep.subr.mxu0 0.0
      %2194 = vmatpush2.msra.mxu0 %v1858
      %2195 = vmatprep.subr.mxu0 0.0
      %2196 = vmatpush2.msra.mxu0 %v1855
      %2197 = vmatprep.subr.mxu0 0.0
      %2198 = vmatpush2.msra.mxu0 %v1852
      %2199 = vmatprep.subr.mxu0 0.0
      %2200 = vmatpush2.msra.mxu0 %v1849
      %2201 = vmatprep.subr.mxu0 0.0
      %2202 = vmatpush2.msra.mxu0 %v1846
      %2203 = vmatprep.subr.mxu0 0.0
      %2204 = vmatpush2.msra.mxu0 %v1843
      %2205 = vmatprep.subr.mxu0 0.0
      %2206 = vmatpush2.msra.mxu0 %v1840
      %2207 = vmatprep.mubr.f32.mxu0 %v1983
      %2208 = vmatmul.mubr.f32.gmra.mxu0 %v1982
      %v2209 = vpop.f32.mrf.mxu0
      %v2210 = vadd.f32 0.0, %v2209
      %v2211 = vpop.f32.mrf.mxu0
      %2212 = vmatprep.mubr.f32.mxu0 %v1987
      %2213 = vmatmul.mubr.f32.gmra.mxu0 %v1986
      %v2214 = vpop.f32.mrf.mxu0
      %v2215 = vadd.f32 0.0, %v2214
      %v2216 = vpop.f32.mrf.mxu0
      %2217 = vdwg.mxu0
      %2218 = vmatprep.subr.mxu0 0.0
      %2219 = vmatpush1.msra.mxu0 %v1933
      %2220 = vmatprep.subr.mxu0 0.0
      %2221 = vmatpush1.msra.mxu0 %v1930
      %2222 = vmatprep.subr.mxu0 0.0
      %2223 = vmatpush1.msra.mxu0 %v1927
      %2224 = vmatprep.subr.mxu0 0.0
      %2225 = vmatpush1.msra.mxu0 %v1924
      %2226 = vmatprep.subr.mxu0 0.0
      %2227 = vmatpush1.msra.mxu0 %v1921
      %2228 = vmatprep.subr.mxu0 0.0
      %2229 = vmatpush1.msra.mxu0 %v1918
      %2230 = vmatprep.subr.mxu0 0.0
      %2231 = vmatpush1.msra.mxu0 %v1915
      %2232 = vmatprep.subr.mxu0 0.0
      %2233 = vmatpush1.msra.mxu0 %v1912
      %2234 = vmatprep.subr.mxu0 0.0
      %2235 = vmatpush1.msra.mxu0 %v1909
      %2236 = vmatprep.subr.mxu0 0.0
      %2237 = vmatpush1.msra.mxu0 %v1906
      %2238 = vmatprep.subr.mxu0 0.0
      %2239 = vmatpush1.msra.mxu0 %v1903
      %2240 = vmatprep.subr.mxu0 0.0
      %2241 = vmatpush1.msra.mxu0 %v1900
      %2242 = vmatprep.subr.mxu0 0.0
      %2243 = vmatpush1.msra.mxu0 %v1897
      %2244 = vmatprep.subr.mxu0 0.0
      %2245 = vmatpush1.msra.mxu0 %v1894
      %2246 = vmatprep.subr.mxu0 0.0
      %2247 = vmatpush1.msra.mxu0 %v1891
      %2248 = vmatprep.subr.mxu0 0.0
      %2249 = vmatpush1.msra.mxu0 %v1888
      %2250 = vmatprep.subr.mxu0 0.0
      %2251 = vmatpush2.msra.mxu0 %v1981
      %2252 = vmatprep.subr.mxu0 0.0
      %2253 = vmatpush2.msra.mxu0 %v1978
      %2254 = vmatprep.subr.mxu0 0.0
      %2255 = vmatpush2.msra.mxu0 %v1975
      %2256 = vmatprep.subr.mxu0 0.0
      %2257 = vmatpush2.msra.mxu0 %v1972
      %2258 = vmatprep.subr.mxu0 0.0
      %2259 = vmatpush2.msra.mxu0 %v1969
      %2260 = vmatprep.subr.mxu0 0.0
      %2261 = vmatpush2.msra.mxu0 %v1966
      %2262 = vmatprep.subr.mxu0 0.0
      %2263 = vmatpush2.msra.mxu0 %v1963
      %2264 = vmatprep.subr.mxu0 0.0
      %2265 = vmatpush2.msra.mxu0 %v1960
      %2266 = vmatprep.subr.mxu0 0.0
      %2267 = vmatpush2.msra.mxu0 %v1957
      %2268 = vmatprep.subr.mxu0 0.0
      %2269 = vmatpush2.msra.mxu0 %v1954
      %2270 = vmatprep.subr.mxu0 0.0
      %2271 = vmatpush2.msra.mxu0 %v1951
      %2272 = vmatprep.subr.mxu0 0.0
      %2273 = vmatpush2.msra.mxu0 %v1948
      %2274 = vmatprep.subr.mxu0 0.0
      %2275 = vmatpush2.msra.mxu0 %v1945
      %2276 = vmatprep.subr.mxu0 0.0
      %2277 = vmatpush2.msra.mxu0 %v1942
      %2278 = vmatprep.subr.mxu0 0.0
      %2279 = vmatpush2.msra.mxu0 %v1939
      %2280 = vmatprep.subr.mxu0 0.0
      %2281 = vmatpush2.msra.mxu0 %v1936
      %2282 = vmatprep.mubr.f32.mxu0 %v1985
      %2283 = vmatmul.mubr.f32.gmra.mxu0 %v1984
      %v2284 = vpop.f32.mrf.mxu0
      %v2285 = vadd.f32 %v2210, %v2284
      %v2286 = vpop.f32.mrf.mxu0
      %2287 = vmatprep.mubr.f32.mxu0 %v1989
      %2288 = vmatmul.mubr.f32.gmra.mxu0 %v1988
      %v2289 = vpop.f32.mrf.mxu0
      %v2290 = vadd.f32 %v2215, %v2289
      %v2291 = vpop.f32.mrf.mxu0
      %2292 = vdwg.mxu0
      %v2293 = vmul.f32 %v2285, %v2140
      %v2294 = vmul.f32 %v2290, %v2140
      %v2295 = vmul.f32 %v2141, %v2141
      %v2296 = vmul.f32 %v2142, %v2142
      %v2297 = vsub.f32 %v2293, %v2295
      %v2298 = vsub.f32 %v2294, %v2296
      %v2299 = vmax.f32 %v2297, 0.0
      %v2300 = vmax.f32 %v2298, 0.0
      %v2301 = vadd.f32 %v2299, 1e-05
      %v2302 = vadd.f32 %v2300, 1e-05
      %v2303 = vrsqrt.pop %v2301
      %v2304 = vrsqrt.pop %v2302
      %v2305 = vld [vmem:[%s8] sm:$0xff]
      %v2306 = vld [vmem:[%s8 + $0x8] sm:$0xff]
      %v2307 = vld [vmem:[%s8 + $0x10] sm:$0xff]
      %v2308 = vld [vmem:[%s8 + $0x18] sm:$0xff]
      %v2309 = vld [vmem:[%s8 + $0x20] sm:$0xff]
      %v2310 = vld [vmem:[%s8 + $0x28] sm:$0xff]
      %v2311 = vld [vmem:[%s8 + $0x30] sm:$0xff]
      %v2312 = vld [vmem:[%s8 + $0x38] sm:$0xff]
      %v2313 = vld [vmem:[%s8 + $0x40] sm:$0xff]
      %v2314 = vld [vmem:[%s8 + $0x48] sm:$0xff]
      %v2315 = vld [vmem:[%s8 + $0x50] sm:$0xff]
      %v2316 = vld [vmem:[%s8 + $0x58] sm:$0xff]
      %v2317 = vld [vmem:[%s8 + $0x60] sm:$0xff]
      %v2318 = vld [vmem:[%s8 + $0x68] sm:$0xff]
      %v2319 = vld [vmem:[%s8 + $0x70] sm:$0xff]
      %v2320 = vld [vmem:[%s8 + $0x78] sm:$0xff]
      %v2321 = vld [vmem:[%s8 + $0x80] sm:$0xff]
      %v2322 = vld [vmem:[%s8 + $0x88] sm:$0xff]
      %v2323 = vld [vmem:[%s8 + $0x90] sm:$0xff]
      %v2324 = vld [vmem:[%s8 + $0x98] sm:$0xff]
      %v2325 = vld [vmem:[%s8 + $0xa0] sm:$0xff]
      %v2326 = vld [vmem:[%s8 + $0xa8] sm:$0xff]
      %v2327 = vld [vmem:[%s8 + $0xb0] sm:$0xff]
      %v2328 = vld [vmem:[%s8 + $0xb8] sm:$0xff]
      %v2329 = vld [vmem:[%s8 + $0xc0] sm:$0xff]
      %v2330 = vld [vmem:[%s8 + $0xc8] sm:$0xff]
      %v2331 = vld [vmem:[%s8 + $0xd0] sm:$0xff]
      %v2332 = vld [vmem:[%s8 + $0xd8] sm:$0xff]
      %v2333 = vld [vmem:[%s8 + $0xe0] sm:$0xff]
      %v2334 = vld [vmem:[%s8 + $0xe8] sm:$0xff]
      %v2335 = vld [vmem:[%s8 + $0xf0] sm:$0xff]
      %v2336 = vld [vmem:[%s8 + $0xf8] sm:$0xff]
      %v2337 = vld [vmem:[%s8 + $0x100] sm:$0xff]
      %v2338 = vld [vmem:[%s8 + $0x108] sm:$0xff]
      %v2339 = vld [vmem:[%s8 + $0x110] sm:$0xff]
      %v2340 = vld [vmem:[%s8 + $0x118] sm:$0xff]
      %v2341 = vld [vmem:[%s8 + $0x120] sm:$0xff]
      %v2342 = vld [vmem:[%s8 + $0x128] sm:$0xff]
      %v2343 = vld [vmem:[%s8 + $0x130] sm:$0xff]
      %v2344 = vld [vmem:[%s8 + $0x138] sm:$0xff]
      %v2345 = vld [vmem:[%s8 + $0x140] sm:$0xff]
      %v2346 = vld [vmem:[%s8 + $0x148] sm:$0xff]
      %v2347 = vld [vmem:[%s8 + $0x150] sm:$0xff]
      %v2348 = vld [vmem:[%s8 + $0x158] sm:$0xff]
      %v2349 = vld [vmem:[%s8 + $0x160] sm:$0xff]
      %v2350 = vld [vmem:[%s8 + $0x168] sm:$0xff]
      %v2351 = vld [vmem:[%s8 + $0x170] sm:$0xff]
      %v2352 = vld [vmem:[%s8 + $0x178] sm:$0xff]
      %v2353 = vld [vmem:[%s8 + $0x180] sm:$0xff]
      %v2354 = vld [vmem:[%s8 + $0x188] sm:$0xff]
      %v2355 = vld [vmem:[%s8 + $0x190] sm:$0xff]
      %v2356 = vld [vmem:[%s8 + $0x198] sm:$0xff]
      %v2357 = vld [vmem:[%s8 + $0x1a0] sm:$0xff]
      %v2358 = vld [vmem:[%s8 + $0x1a8] sm:$0xff]
      %v2359 = vld [vmem:[%s8 + $0x1b0] sm:$0xff]
      %v2360 = vld [vmem:[%s8 + $0x1b8] sm:$0xff]
      %v2361 = vld [vmem:[%s8 + $0x1c0] sm:$0xff]
      %v2362 = vld [vmem:[%s8 + $0x1c8] sm:$0xff]
      %v2363 = vld [vmem:[%s8 + $0x1d0] sm:$0xff]
      %v2364 = vld [vmem:[%s8 + $0x1d8] sm:$0xff]
      %v2365 = vld [vmem:[%s8 + $0x1e0] sm:$0xff]
      %v2366 = vld [vmem:[%s8 + $0x1e8] sm:$0xff]
      %v2367 = vld [vmem:[%s8 + $0x1f0] sm:$0xff]
      %v2368 = vld [vmem:[%s8 + $0x1f8] sm:$0xff]
      %vm2369 = vcmask 130048
      %v2371 = vsel %vm2369, %v2305, 0
      %v2374 = vsel %vm2369, %v2306, 0
      %v2377 = vsel %vm2369, %v2307, 0
      %v2380 = vsel %vm2369, %v2308, 0
      %v2383 = vsel %vm2369, %v2309, 0
      %v2386 = vsel %vm2369, %v2310, 0
      %v2389 = vsel %vm2369, %v2311, 0
      %v2392 = vsel %vm2369, %v2312, 0
      %v2395 = vsel %vm2369, %v2313, 0
      %v2398 = vsel %vm2369, %v2314, 0
      %v2401 = vsel %vm2369, %v2315, 0
      %v2404 = vsel %vm2369, %v2316, 0
      %v2407 = vsel %vm2369, %v2317, 0
      %v2410 = vsel %vm2369, %v2318, 0
      %v2413 = vsel %vm2369, %v2319, 0
      %v2416 = vsel %vm2369, %v2320, 0
      %v2419 = vsel %vm2369, %v2321, 0
      %v2422 = vsel %vm2369, %v2322, 0
      %v2425 = vsel %vm2369, %v2323, 0
      %v2428 = vsel %vm2369, %v2324, 0
      %v2431 = vsel %vm2369, %v2325, 0
      %v2434 = vsel %vm2369, %v2326, 0
      %v2437 = vsel %vm2369, %v2327, 0
      %v2440 = vsel %vm2369, %v2328, 0
      %v2443 = vsel %vm2369, %v2329, 0
      %v2446 = vsel %vm2369, %v2330, 0
      %v2449 = vsel %vm2369, %v2331, 0
      %v2452 = vsel %vm2369, %v2332, 0
      %v2455 = vsel %vm2369, %v2333, 0
      %v2458 = vsel %vm2369, %v2334, 0
      %v2461 = vsel %vm2369, %v2335, 0
      %v2464 = vsel %vm2369, %v2336, 0
      %v2467 = vsel %vm2369, %v2337, 0
      %v2470 = vsel %vm2369, %v2338, 0
      %v2473 = vsel %vm2369, %v2339, 0
      %v2476 = vsel %vm2369, %v2340, 0
      %v2479 = vsel %vm2369, %v2341, 0
      %v2482 = vsel %vm2369, %v2342, 0
      %v2485 = vsel %vm2369, %v2343, 0
      %v2488 = vsel %vm2369, %v2344, 0
      %v2491 = vsel %vm2369, %v2345, 0
      %v2494 = vsel %vm2369, %v2346, 0
      %v2497 = vsel %vm2369, %v2347, 0
      %v2500 = vsel %vm2369, %v2348, 0
      %v2503 = vsel %vm2369, %v2349, 0
      %v2506 = vsel %vm2369, %v2350, 0
      %v2509 = vsel %vm2369, %v2351, 0
      %v2512 = vsel %vm2369, %v2352, 0
      %v2515 = vsel %vm2369, %v2353, 0
      %v2518 = vsel %vm2369, %v2354, 0
      %v2521 = vsel %vm2369, %v2355, 0
      %v2524 = vsel %vm2369, %v2356, 0
      %v2527 = vsel %vm2369, %v2357, 0
      %v2530 = vsel %vm2369, %v2358, 0
      %v2533 = vsel %vm2369, %v2359, 0
      %v2536 = vsel %vm2369, %v2360, 0
      %v2539 = vsel %vm2369, %v2361, 0
      %v2542 = vsel %vm2369, %v2362, 0
      %v2545 = vsel %vm2369, %v2363, 0
      %v2548 = vsel %vm2369, %v2364, 0
      %v2551 = vsel %vm2369, %v2365, 0
      %v2554 = vsel %vm2369, %v2366, 0
      %v2557 = vsel %vm2369, %v2367, 0
      %v2560 = vsel %vm2369, %v2368, 0
      %2562 = vmatprep.subr.mxu0 0.0
      %2563 = vmatpush1.msra.mxu0 0.0
      %2564 = vmatprep.subr.mxu0 0.0
      %2565 = vmatpush1.msra.mxu0 0.0
      %2566 = vmatprep.subr.mxu0 0.0
      %2567 = vmatpush1.msra.mxu0 0.0
      %2568 = vmatprep.subr.mxu0 0.0
      %2569 = vmatpush1.msra.mxu0 0.0
      %2570 = vmatprep.subr.mxu0 0.0
      %2571 = vmatpush1.msra.mxu0 0.0
      %2572 = vmatprep.subr.mxu0 0.0
      %2573 = vmatpush1.msra.mxu0 0.0
      %2574 = vmatprep.subr.mxu0 0.0
      %2575 = vmatpush1.msra.mxu0 0.0
      %2576 = vmatprep.subr.mxu0 0.0
      %2577 = vmatpush1.msra.mxu0 0.0
      %2578 = vmatprep.subr.mxu0 0.0
      %2579 = vmatpush1.msra.mxu0 0.0
      %2580 = vmatprep.subr.mxu0 0.0
      %2581 = vmatpush1.msra.mxu0 0.0
      %2582 = vmatprep.subr.mxu0 0.0
      %2583 = vmatpush1.msra.mxu0 0.0
      %2584 = vmatprep.subr.mxu0 0.0
      %2585 = vmatpush1.msra.mxu0 0.0
      %2586 = vmatprep.subr.mxu0 0.0
      %2587 = vmatpush1.msra.mxu0 0.0
      %2588 = vmatprep.subr.mxu0 0.0
      %2589 = vmatpush1.msra.mxu0 0.0
      %2590 = vmatprep.subr.mxu0 0.0
      %2591 = vmatpush1.msra.mxu0 %v2142
      %2592 = vmatprep.subr.mxu0 0.0
      %2593 = vmatpush1.msra.mxu0 %v2141
      %2594 = vmatprep.subr.mxu0 0.0
      %2595 = vmatpush2.msra.mxu0 0.0
      %2596 = vmatprep.subr.mxu0 0.0
      %2597 = vmatpush2.msra.mxu0 0.0
      %2598 = vmatprep.subr.mxu0 0.0
      %2599 = vmatpush2.msra.mxu0 0.0
      %2600 = vmatprep.subr.mxu0 0.0
      %2601 = vmatpush2.msra.mxu0 0.0
      %2602 = vmatprep.subr.mxu0 0.0
      %2603 = vmatpush2.msra.mxu0 0.0
      %2604 = vmatprep.subr.mxu0 0.0
      %2605 = vmatpush2.msra.mxu0 0.0
      %2606 = vmatprep.subr.mxu0 0.0
      %2607 = vmatpush2.msra.mxu0 0.0
      %2608 = vmatprep.subr.mxu0 0.0
      %2609 = vmatpush2.msra.mxu0 0.0
      %2610 = vmatprep.subr.mxu0 0.0
      %2611 = vmatpush2.msra.mxu0 0.0
      %2612 = vmatprep.subr.mxu0 0.0
      %2613 = vmatpush2.msra.mxu0 0.0
      %2614 = vmatprep.subr.mxu0 0.0
      %2615 = vmatpush2.msra.mxu0 0.0
      %2616 = vmatprep.subr.mxu0 0.0
      %2617 = vmatpush2.msra.mxu0 0.0
      %2618 = vmatprep.subr.mxu0 0.0
      %2619 = vmatpush2.msra.mxu0 0.0
      %2620 = vmatprep.subr.mxu0 0.0
      %2621 = vmatpush2.msra.mxu0 0.0
      %2622 = vmatprep.subr.mxu0 0.0
      %2623 = vmatpush2.msra.mxu0 0.0
      %2624 = vmatprep.subr.mxu0 0.0
      %2625 = vmatpush2.msra.mxu0 0.0
      %2626 = vmatprep.mubr.f32.mxu0 0.0
      %2627 = vmatmul.mubr.f32.gmra.mxu0 %v2371
      %v2628 = vpop.f32.mrf.mxu0
      %v2629 = vadd.f32 0.0, %v2628
      %v2630 = vpop.f32.mrf.mxu0
      %2631 = vmatprep.mubr.f32.mxu0 0.0
      %2632 = vmatmul.mubr.f32.gmra.mxu0 %v2374
      %v2633 = vpop.f32.mrf.mxu0
      %v2634 = vadd.f32 0.0, %v2633
      %v2635 = vpop.f32.mrf.mxu0
      %2636 = vmatprep.mubr.f32.mxu0 0.0
      %2637 = vmatmul.mubr.f32.gmra.mxu0 %v2377
      %v2638 = vpop.f32.mrf.mxu0
      %v2639 = vadd.f32 0.0, %v2638
      %v2640 = vpop.f32.mrf.mxu0
      %2641 = vmatprep.mubr.f32.mxu0 0.0
      %2642 = vmatmul.mubr.f32.gmra.mxu0 %v2380
      %v2643 = vpop.f32.mrf.mxu0
      %v2644 = vadd.f32 0.0, %v2643
      %v2645 = vpop.f32.mrf.mxu0
      %2646 = vmatprep.mubr.f32.mxu0 0.0
      %2647 = vmatmul.mubr.f32.gmra.mxu0 %v2383
      %v2648 = vpop.f32.mrf.mxu0
      %v2649 = vadd.f32 0.0, %v2648
      %v2650 = vpop.f32.mrf.mxu0
      %2651 = vmatprep.mubr.f32.mxu0 0.0
      %2652 = vmatmul.mubr.f32.gmra.mxu0 %v2386
      %v2653 = vpop.f32.mrf.mxu0
      %v2654 = vadd.f32 0.0, %v2653
      %v2655 = vpop.f32.mrf.mxu0
      %2656 = vmatprep.mubr.f32.mxu0 0.0
      %2657 = vmatmul.mubr.f32.gmra.mxu0 %v2389
      %v2658 = vpop.f32.mrf.mxu0
      %v2659 = vadd.f32 0.0, %v2658
      %v2660 = vpop.f32.mrf.mxu0
      %2661 = vmatprep.mubr.f32.mxu0 0.0
      %2662 = vmatmul.mubr.f32.gmra.mxu0 %v2392
      %v2663 = vpop.f32.mrf.mxu0
      %v2664 = vadd.f32 0.0, %v2663
      %v2665 = vpop.f32.mrf.mxu0
      %2666 = vmatprep.mubr.f32.mxu0 0.0
      %2667 = vmatmul.mubr.f32.gmra.mxu0 %v2395
      %v2668 = vpop.f32.mrf.mxu0
      %v2669 = vadd.f32 0.0, %v2668
      %v2670 = vpop.f32.mrf.mxu0
      %2671 = vmatprep.mubr.f32.mxu0 0.0
      %2672 = vmatmul.mubr.f32.gmra.mxu0 %v2398
      %v2673 = vpop.f32.mrf.mxu0
      %v2674 = vadd.f32 0.0, %v2673
      %v2675 = vpop.f32.mrf.mxu0
      %2676 = vmatprep.mubr.f32.mxu0 0.0
      %2677 = vmatmul.mubr.f32.gmra.mxu0 %v2401
      %v2678 = vpop.f32.mrf.mxu0
      %v2679 = vadd.f32 0.0, %v2678
      %v2680 = vpop.f32.mrf.mxu0
      %2681 = vmatprep.mubr.f32.mxu0 0.0
      %2682 = vmatmul.mubr.f32.gmra.mxu0 %v2404
      %v2683 = vpop.f32.mrf.mxu0
      %v2684 = vadd.f32 0.0, %v2683
      %v2685 = vpop.f32.mrf.mxu0
      %2686 = vmatprep.mubr.f32.mxu0 0.0
      %2687 = vmatmul.mubr.f32.gmra.mxu0 %v2407
      %v2688 = vpop.f32.mrf.mxu0
      %v2689 = vadd.f32 0.0, %v2688
      %v2690 = vpop.f32.mrf.mxu0
      %2691 = vmatprep.mubr.f32.mxu0 0.0
      %2692 = vmatmul.mubr.f32.gmra.mxu0 %v2410
      %v2693 = vpop.f32.mrf.mxu0
      %v2694 = vadd.f32 0.0, %v2693
      %v2695 = vpop.f32.mrf.mxu0
      %2696 = vmatprep.mubr.f32.mxu0 0.0
      %2697 = vmatmul.mubr.f32.gmra.mxu0 %v2413
      %v2698 = vpop.f32.mrf.mxu0
      %v2699 = vadd.f32 0.0, %v2698
      %v2700 = vpop.f32.mrf.mxu0
      %2701 = vmatprep.mubr.f32.mxu0 0.0
      %2702 = vmatmul.mubr.f32.gmra.mxu0 %v2416
      %v2703 = vpop.f32.mrf.mxu0
      %v2704 = vadd.f32 0.0, %v2703
      %v2705 = vpop.f32.mrf.mxu0
      %2706 = vmatprep.mubr.f32.mxu0 0.0
      %2707 = vmatmul.mubr.f32.gmra.mxu0 %v2419
      %v2708 = vpop.f32.mrf.mxu0
      %v2709 = vadd.f32 0.0, %v2708
      %v2710 = vpop.f32.mrf.mxu0
      %2711 = vmatprep.mubr.f32.mxu0 0.0
      %2712 = vmatmul.mubr.f32.gmra.mxu0 %v2422
      %v2713 = vpop.f32.mrf.mxu0
      %v2714 = vadd.f32 0.0, %v2713
      %v2715 = vpop.f32.mrf.mxu0
      %2716 = vmatprep.mubr.f32.mxu0 0.0
      %2717 = vmatmul.mubr.f32.gmra.mxu0 %v2425
      %v2718 = vpop.f32.mrf.mxu0
      %v2719 = vadd.f32 0.0, %v2718
      %v2720 = vpop.f32.mrf.mxu0
      %2721 = vmatprep.mubr.f32.mxu0 0.0
      %2722 = vmatmul.mubr.f32.gmra.mxu0 %v2428
      %v2723 = vpop.f32.mrf.mxu0
      %v2724 = vadd.f32 0.0, %v2723
      %v2725 = vpop.f32.mrf.mxu0
      %2726 = vmatprep.mubr.f32.mxu0 0.0
      %2727 = vmatmul.mubr.f32.gmra.mxu0 %v2431
      %v2728 = vpop.f32.mrf.mxu0
      %v2729 = vadd.f32 0.0, %v2728
      %v2730 = vpop.f32.mrf.mxu0
      %2731 = vmatprep.mubr.f32.mxu0 0.0
      %2732 = vmatmul.mubr.f32.gmra.mxu0 %v2434
      %v2733 = vpop.f32.mrf.mxu0
      %v2734 = vadd.f32 0.0, %v2733
      %v2735 = vpop.f32.mrf.mxu0
      %2736 = vmatprep.mubr.f32.mxu0 0.0
      %2737 = vmatmul.mubr.f32.gmra.mxu0 %v2437
      %v2738 = vpop.f32.mrf.mxu0
      %v2739 = vadd.f32 0.0, %v2738
      %v2740 = vpop.f32.mrf.mxu0
      %2741 = vmatprep.mubr.f32.mxu0 0.0
      %2742 = vmatmul.mubr.f32.gmra.mxu0 %v2440
      %v2743 = vpop.f32.mrf.mxu0
      %v2744 = vadd.f32 0.0, %v2743
      %v2745 = vpop.f32.mrf.mxu0
      %2746 = vmatprep.mubr.f32.mxu0 0.0
      %2747 = vmatmul.mubr.f32.gmra.mxu0 %v2443
      %v2748 = vpop.f32.mrf.mxu0
      %v2749 = vadd.f32 0.0, %v2748
      %v2750 = vpop.f32.mrf.mxu0
      %2751 = vmatprep.mubr.f32.mxu0 0.0
      %2752 = vmatmul.mubr.f32.gmra.mxu0 %v2446
      %v2753 = vpop.f32.mrf.mxu0
      %v2754 = vadd.f32 0.0, %v2753
      %v2755 = vpop.f32.mrf.mxu0
      %2756 = vmatprep.mubr.f32.mxu0 0.0
      %2757 = vmatmul.mubr.f32.gmra.mxu0 %v2449
      %v2758 = vpop.f32.mrf.mxu0
      %v2759 = vadd.f32 0.0, %v2758
      %v2760 = vpop.f32.mrf.mxu0
      %2761 = vmatprep.mubr.f32.mxu0 0.0
      %2762 = vmatmul.mubr.f32.gmra.mxu0 %v2452
      %v2763 = vpop.f32.mrf.mxu0
      %v2764 = vadd.f32 0.0, %v2763
      %v2765 = vpop.f32.mrf.mxu0
      %2766 = vmatprep.mubr.f32.mxu0 0.0
      %2767 = vmatmul.mubr.f32.gmra.mxu0 %v2455
      %v2768 = vpop.f32.mrf.mxu0
      %v2769 = vadd.f32 0.0, %v2768
      %v2770 = vpop.f32.mrf.mxu0
      %2771 = vmatprep.mubr.f32.mxu0 0.0
      %2772 = vmatmul.mubr.f32.gmra.mxu0 %v2458
      %v2773 = vpop.f32.mrf.mxu0
      %v2774 = vadd.f32 0.0, %v2773
      %v2775 = vpop.f32.mrf.mxu0
      %2776 = vmatprep.mubr.f32.mxu0 0.0
      %2777 = vmatmul.mubr.f32.gmra.mxu0 %v2461
      %v2778 = vpop.f32.mrf.mxu0
      %v2779 = vadd.f32 0.0, %v2778
      %v2780 = vpop.f32.mrf.mxu0
      %2781 = vmatprep.mubr.f32.mxu0 0.0
      %2782 = vmatmul.mubr.f32.gmra.mxu0 %v2464
      %v2783 = vpop.f32.mrf.mxu0
      %v2784 = vadd.f32 0.0, %v2783
      %v2785 = vpop.f32.mrf.mxu0
      %2786 = vmatprep.mubr.f32.mxu0 0.0
      %2787 = vmatmul.mubr.f32.gmra.mxu0 %v2467
      %v2788 = vpop.f32.mrf.mxu0
      %v2789 = vadd.f32 0.0, %v2788
      %v2790 = vpop.f32.mrf.mxu0
      %2791 = vmatprep.mubr.f32.mxu0 0.0
      %2792 = vmatmul.mubr.f32.gmra.mxu0 %v2470
      %v2793 = vpop.f32.mrf.mxu0
      %v2794 = vadd.f32 0.0, %v2793
      %v2795 = vpop.f32.mrf.mxu0
      %2796 = vmatprep.mubr.f32.mxu0 0.0
      %2797 = vmatmul.mubr.f32.gmra.mxu0 %v2473
      %v2798 = vpop.f32.mrf.mxu0
      %v2799 = vadd.f32 0.0, %v2798
      %v2800 = vpop.f32.mrf.mxu0
      %2801 = vmatprep.mubr.f32.mxu0 0.0
      %2802 = vmatmul.mubr.f32.gmra.mxu0 %v2476
      %v2803 = vpop.f32.mrf.mxu0
      %v2804 = vadd.f32 0.0, %v2803
      %v2805 = vpop.f32.mrf.mxu0
      %2806 = vmatprep.mubr.f32.mxu0 0.0
      %2807 = vmatmul.mubr.f32.gmra.mxu0 %v2479
      %v2808 = vpop.f32.mrf.mxu0
      %v2809 = vadd.f32 0.0, %v2808
      %v2810 = vpop.f32.mrf.mxu0
      %2811 = vmatprep.mubr.f32.mxu0 0.0
      %2812 = vmatmul.mubr.f32.gmra.mxu0 %v2482
      %v2813 = vpop.f32.mrf.mxu0
      %v2814 = vadd.f32 0.0, %v2813
      %v2815 = vpop.f32.mrf.mxu0
      %2816 = vmatprep.mubr.f32.mxu0 0.0
      %2817 = vmatmul.mubr.f32.gmra.mxu0 %v2485
      %v2818 = vpop.f32.mrf.mxu0
      %v2819 = vadd.f32 0.0, %v2818
      %v2820 = vpop.f32.mrf.mxu0
      %2821 = vmatprep.mubr.f32.mxu0 0.0
      %2822 = vmatmul.mubr.f32.gmra.mxu0 %v2488
      %v2823 = vpop.f32.mrf.mxu0
      %v2824 = vadd.f32 0.0, %v2823
      %v2825 = vpop.f32.mrf.mxu0
      %2826 = vmatprep.mubr.f32.mxu0 0.0
      %2827 = vmatmul.mubr.f32.gmra.mxu0 %v2491
      %v2828 = vpop.f32.mrf.mxu0
      %v2829 = vadd.f32 0.0, %v2828
      %v2830 = vpop.f32.mrf.mxu0
      %2831 = vmatprep.mubr.f32.mxu0 0.0
      %2832 = vmatmul.mubr.f32.gmra.mxu0 %v2494
      %v2833 = vpop.f32.mrf.mxu0
      %v2834 = vadd.f32 0.0, %v2833
      %v2835 = vpop.f32.mrf.mxu0
      %2836 = vmatprep.mubr.f32.mxu0 0.0
      %2837 = vmatmul.mubr.f32.gmra.mxu0 %v2497
      %v2838 = vpop.f32.mrf.mxu0
      %v2839 = vadd.f32 0.0, %v2838
      %v2840 = vpop.f32.mrf.mxu0
      %2841 = vmatprep.mubr.f32.mxu0 0.0
      %2842 = vmatmul.mubr.f32.gmra.mxu0 %v2500
      %v2843 = vpop.f32.mrf.mxu0
      %v2844 = vadd.f32 0.0, %v2843
      %v2845 = vpop.f32.mrf.mxu0
      %2846 = vmatprep.mubr.f32.mxu0 0.0
      %2847 = vmatmul.mubr.f32.gmra.mxu0 %v2503
      %v2848 = vpop.f32.mrf.mxu0
      %v2849 = vadd.f32 0.0, %v2848
      %v2850 = vpop.f32.mrf.mxu0
      %2851 = vmatprep.mubr.f32.mxu0 0.0
      %2852 = vmatmul.mubr.f32.gmra.mxu0 %v2506
      %v2853 = vpop.f32.mrf.mxu0
      %v2854 = vadd.f32 0.0, %v2853
      %v2855 = vpop.f32.mrf.mxu0
      %2856 = vmatprep.mubr.f32.mxu0 0.0
      %2857 = vmatmul.mubr.f32.gmra.mxu0 %v2509
      %v2858 = vpop.f32.mrf.mxu0
      %v2859 = vadd.f32 0.0, %v2858
      %v2860 = vpop.f32.mrf.mxu0
      %2861 = vmatprep.mubr.f32.mxu0 0.0
      %2862 = vmatmul.mubr.f32.gmra.mxu0 %v2512
      %v2863 = vpop.f32.mrf.mxu0
      %v2864 = vadd.f32 0.0, %v2863
      %v2865 = vpop.f32.mrf.mxu0
      %2866 = vmatprep.mubr.f32.mxu0 0.0
      %2867 = vmatmul.mubr.f32.gmra.mxu0 %v2515
      %v2868 = vpop.f32.mrf.mxu0
      %v2869 = vadd.f32 0.0, %v2868
      %v2870 = vpop.f32.mrf.mxu0
      %2871 = vmatprep.mubr.f32.mxu0 0.0
      %2872 = vmatmul.mubr.f32.gmra.mxu0 %v2518
      %v2873 = vpop.f32.mrf.mxu0
      %v2874 = vadd.f32 0.0, %v2873
      %v2875 = vpop.f32.mrf.mxu0
      %2876 = vmatprep.mubr.f32.mxu0 0.0
      %2877 = vmatmul.mubr.f32.gmra.mxu0 %v2521
      %v2878 = vpop.f32.mrf.mxu0
      %v2879 = vadd.f32 0.0, %v2878
      %v2880 = vpop.f32.mrf.mxu0
      %2881 = vmatprep.mubr.f32.mxu0 0.0
      %2882 = vmatmul.mubr.f32.gmra.mxu0 %v2524
      %v2883 = vpop.f32.mrf.mxu0
      %v2884 = vadd.f32 0.0, %v2883
      %v2885 = vpop.f32.mrf.mxu0
      %2886 = vmatprep.mubr.f32.mxu0 0.0
      %2887 = vmatmul.mubr.f32.gmra.mxu0 %v2527
      %v2888 = vpop.f32.mrf.mxu0
      %v2889 = vadd.f32 0.0, %v2888
      %v2890 = vpop.f32.mrf.mxu0
      %2891 = vmatprep.mubr.f32.mxu0 0.0
      %2892 = vmatmul.mubr.f32.gmra.mxu0 %v2530
      %v2893 = vpop.f32.mrf.mxu0
      %v2894 = vadd.f32 0.0, %v2893
      %v2895 = vpop.f32.mrf.mxu0
      %2896 = vmatprep.mubr.f32.mxu0 0.0
      %2897 = vmatmul.mubr.f32.gmra.mxu0 %v2533
      %v2898 = vpop.f32.mrf.mxu0
      %v2899 = vadd.f32 0.0, %v2898
      %v2900 = vpop.f32.mrf.mxu0
      %2901 = vmatprep.mubr.f32.mxu0 0.0
      %2902 = vmatmul.mubr.f32.gmra.mxu0 %v2536
      %v2903 = vpop.f32.mrf.mxu0
      %v2904 = vadd.f32 0.0, %v2903
      %v2905 = vpop.f32.mrf.mxu0
      %2906 = vmatprep.mubr.f32.mxu0 0.0
      %2907 = vmatmul.mubr.f32.gmra.mxu0 %v2539
      %v2908 = vpop.f32.mrf.mxu0
      %v2909 = vadd.f32 0.0, %v2908
      %v2910 = vpop.f32.mrf.mxu0
      %2911 = vmatprep.mubr.f32.mxu0 0.0
      %2912 = vmatmul.mubr.f32.gmra.mxu0 %v2542
      %v2913 = vpop.f32.mrf.mxu0
      %v2914 = vadd.f32 0.0, %v2913
      %v2915 = vpop.f32.mrf.mxu0
      %2916 = vmatprep.mubr.f32.mxu0 0.0
      %2917 = vmatmul.mubr.f32.gmra.mxu0 %v2545
      %v2918 = vpop.f32.mrf.mxu0
      %v2919 = vadd.f32 0.0, %v2918
      %v2920 = vpop.f32.mrf.mxu0
      %2921 = vmatprep.mubr.f32.mxu0 0.0
      %2922 = vmatmul.mubr.f32.gmra.mxu0 %v2548
      %v2923 = vpop.f32.mrf.mxu0
      %v2924 = vadd.f32 0.0, %v2923
      %v2925 = vpop.f32.mrf.mxu0
      %2926 = vmatprep.mubr.f32.mxu0 0.0
      %2927 = vmatmul.mubr.f32.gmra.mxu0 %v2551
      %v2928 = vpop.f32.mrf.mxu0
      %v2929 = vadd.f32 0.0, %v2928
      %v2930 = vpop.f32.mrf.mxu0
      %2931 = vmatprep.mubr.f32.mxu0 0.0
      %2932 = vmatmul.mubr.f32.gmra.mxu0 %v2554
      %v2933 = vpop.f32.mrf.mxu0
      %v2934 = vadd.f32 0.0, %v2933
      %v2935 = vpop.f32.mrf.mxu0
      %2936 = vmatprep.mubr.f32.mxu0 0.0
      %2937 = vmatmul.mubr.f32.gmra.mxu0 %v2557
      %v2938 = vpop.f32.mrf.mxu0
      %v2939 = vadd.f32 0.0, %v2938
      %v2940 = vpop.f32.mrf.mxu0
      %2941 = vmatprep.mubr.f32.mxu0 0.0
      %2942 = vmatmul.mubr.f32.gmra.mxu0 %v2560
      %v2943 = vpop.f32.mrf.mxu0
      %v2944 = vadd.f32 0.0, %v2943
      %v2945 = vpop.f32.mrf.mxu0
      %2946 = vdwg.mxu0
      %2947 = vmatprep.subr.mxu0 0.0
      %2948 = vmatpush1.msra.mxu0 0.0
      %2949 = vmatprep.subr.mxu0 0.0
      %2950 = vmatpush1.msra.mxu0 0.0
      %2951 = vmatprep.subr.mxu0 0.0
      %2952 = vmatpush1.msra.mxu0 0.0
      %2953 = vmatprep.subr.mxu0 0.0
      %2954 = vmatpush1.msra.mxu0 0.0
      %2955 = vmatprep.subr.mxu0 0.0
      %2956 = vmatpush1.msra.mxu0 0.0
      %2957 = vmatprep.subr.mxu0 0.0
      %2958 = vmatpush1.msra.mxu0 0.0
      %2959 = vmatprep.subr.mxu0 0.0
      %2960 = vmatpush1.msra.mxu0 0.0
      %2961 = vmatprep.subr.mxu0 0.0
      %2962 = vmatpush1.msra.mxu0 0.0
      %2963 = vmatprep.subr.mxu0 0.0
      %2964 = vmatpush1.msra.mxu0 0.0
      %2965 = vmatprep.subr.mxu0 0.0
      %2966 = vmatpush1.msra.mxu0 0.0
      %2967 = vmatprep.subr.mxu0 0.0
      %2968 = vmatpush1.msra.mxu0 0.0
      %2969 = vmatprep.subr.mxu0 0.0
      %2970 = vmatpush1.msra.mxu0 0.0
      %2971 = vmatprep.subr.mxu0 0.0
      %2972 = vmatpush1.msra.mxu0 0.0
      %2973 = vmatprep.subr.mxu0 0.0
      %2974 = vmatpush1.msra.mxu0 0.0
      %2975 = vmatprep.subr.mxu0 0.0
      %2976 = vmatpush1.msra.mxu0 %v2304
      %2977 = vmatprep.subr.mxu0 0.0
      %2978 = vmatpush1.msra.mxu0 %v2303
      %2979 = vmatprep.subr.mxu0 0.0
      %2980 = vmatpush2.msra.mxu0 0.0
      %2981 = vmatprep.subr.mxu0 0.0
      %2982 = vmatpush2.msra.mxu0 0.0
      %2983 = vmatprep.subr.mxu0 0.0
      %2984 = vmatpush2.msra.mxu0 0.0
      %2985 = vmatprep.subr.mxu0 0.0
      %2986 = vmatpush2.msra.mxu0 0.0
      %2987 = vmatprep.subr.mxu0 0.0
      %2988 = vmatpush2.msra.mxu0 0.0
      %2989 = vmatprep.subr.mxu0 0.0
      %2990 = vmatpush2.msra.mxu0 0.0
      %2991 = vmatprep.subr.mxu0 0.0
      %2992 = vmatpush2.msra.mxu0 0.0
      %2993 = vmatprep.subr.mxu0 0.0
      %2994 = vmatpush2.msra.mxu0 0.0
      %2995 = vmatprep.subr.mxu0 0.0
      %2996 = vmatpush2.msra.mxu0 0.0
      %2997 = vmatprep.subr.mxu0 0.0
      %2998 = vmatpush2.msra.mxu0 0.0
      %2999 = vmatprep.subr.mxu0 0.0
      %3000 = vmatpush2.msra.mxu0 0.0
      %3001 = vmatprep.subr.mxu0 0.0
      %3002 = vmatpush2.msra.mxu0 0.0
      %3003 = vmatprep.subr.mxu0 0.0
      %3004 = vmatpush2.msra.mxu0 0.0
      %3005 = vmatprep.subr.mxu0 0.0
      %3006 = vmatpush2.msra.mxu0 0.0
      %3007 = vmatprep.subr.mxu0 0.0
      %3008 = vmatpush2.msra.mxu0 0.0
      %3009 = vmatprep.subr.mxu0 0.0
      %3010 = vmatpush2.msra.mxu0 0.0
      %3011 = vmatprep.mubr.f32.mxu0 0.0
      %3012 = vmatmul.mubr.f32.gmra.mxu0 %v2371
      %v3013 = vpop.f32.mrf.mxu0
      %v3014 = vadd.f32 0.0, %v3013
      %v3015 = vpop.f32.mrf.mxu0
      %3016 = vmatprep.mubr.f32.mxu0 0.0
      %3017 = vmatmul.mubr.f32.gmra.mxu0 %v2374
      %v3018 = vpop.f32.mrf.mxu0
      %v3019 = vadd.f32 0.0, %v3018
      %v3020 = vpop.f32.mrf.mxu0
      %3021 = vmatprep.mubr.f32.mxu0 0.0
      %3022 = vmatmul.mubr.f32.gmra.mxu0 %v2377
      %v3023 = vpop.f32.mrf.mxu0
      %v3024 = vadd.f32 0.0, %v3023
      %v3025 = vpop.f32.mrf.mxu0
      %3026 = vmatprep.mubr.f32.mxu0 0.0
      %3027 = vmatmul.mubr.f32.gmra.mxu0 %v2380
      %v3028 = vpop.f32.mrf.mxu0
      %v3029 = vadd.f32 0.0, %v3028
      %v3030 = vpop.f32.mrf.mxu0
      %3031 = vmatprep.mubr.f32.mxu0 0.0
      %3032 = vmatmul.mubr.f32.gmra.mxu0 %v2383
      %v3033 = vpop.f32.mrf.mxu0
      %v3034 = vadd.f32 0.0, %v3033
      %v3035 = vpop.f32.mrf.mxu0
      %3036 = vmatprep.mubr.f32.mxu0 0.0
      %3037 = vmatmul.mubr.f32.gmra.mxu0 %v2386
      %v3038 = vpop.f32.mrf.mxu0
      %v3039 = vadd.f32 0.0, %v3038
      %v3040 = vpop.f32.mrf.mxu0
      %3041 = vmatprep.mubr.f32.mxu0 0.0
      %3042 = vmatmul.mubr.f32.gmra.mxu0 %v2389
      %v3043 = vpop.f32.mrf.mxu0
      %v3044 = vadd.f32 0.0, %v3043
      %v3045 = vpop.f32.mrf.mxu0
      %3046 = vmatprep.mubr.f32.mxu0 0.0
      %3047 = vmatmul.mubr.f32.gmra.mxu0 %v2392
      %v3048 = vpop.f32.mrf.mxu0
      %v3049 = vadd.f32 0.0, %v3048
      %v3050 = vpop.f32.mrf.mxu0
      %3051 = vmatprep.mubr.f32.mxu0 0.0
      %3052 = vmatmul.mubr.f32.gmra.mxu0 %v2395
      %v3053 = vpop.f32.mrf.mxu0
      %v3054 = vadd.f32 0.0, %v3053
      %v3055 = vpop.f32.mrf.mxu0
      %3056 = vmatprep.mubr.f32.mxu0 0.0
      %3057 = vmatmul.mubr.f32.gmra.mxu0 %v2398
      %v3058 = vpop.f32.mrf.mxu0
      %v3059 = vadd.f32 0.0, %v3058
      %v3060 = vpop.f32.mrf.mxu0
      %3061 = vmatprep.mubr.f32.mxu0 0.0
      %3062 = vmatmul.mubr.f32.gmra.mxu0 %v2401
      %v3063 = vpop.f32.mrf.mxu0
      %v3064 = vadd.f32 0.0, %v3063
      %v3065 = vpop.f32.mrf.mxu0
      %3066 = vmatprep.mubr.f32.mxu0 0.0
      %3067 = vmatmul.mubr.f32.gmra.mxu0 %v2404
      %v3068 = vpop.f32.mrf.mxu0
      %v3069 = vadd.f32 0.0, %v3068
      %v3070 = vpop.f32.mrf.mxu0
      %3071 = vmatprep.mubr.f32.mxu0 0.0
      %3072 = vmatmul.mubr.f32.gmra.mxu0 %v2407
      %v3073 = vpop.f32.mrf.mxu0
      %v3074 = vadd.f32 0.0, %v3073
      %v3075 = vpop.f32.mrf.mxu0
      %3076 = vmatprep.mubr.f32.mxu0 0.0
      %3077 = vmatmul.mubr.f32.gmra.mxu0 %v2410
      %v3078 = vpop.f32.mrf.mxu0
      %v3079 = vadd.f32 0.0, %v3078
      %v3080 = vpop.f32.mrf.mxu0
      %3081 = vmatprep.mubr.f32.mxu0 0.0
      %3082 = vmatmul.mubr.f32.gmra.mxu0 %v2413
      %v3083 = vpop.f32.mrf.mxu0
      %v3084 = vadd.f32 0.0, %v3083
      %v3085 = vpop.f32.mrf.mxu0
      %3086 = vmatprep.mubr.f32.mxu0 0.0
      %3087 = vmatmul.mubr.f32.gmra.mxu0 %v2416
      %v3088 = vpop.f32.mrf.mxu0
      %v3089 = vadd.f32 0.0, %v3088
      %v3090 = vpop.f32.mrf.mxu0
      %3091 = vmatprep.mubr.f32.mxu0 0.0
      %3092 = vmatmul.mubr.f32.gmra.mxu0 %v2419
      %v3093 = vpop.f32.mrf.mxu0
      %v3094 = vadd.f32 0.0, %v3093
      %v3095 = vpop.f32.mrf.mxu0
      %3096 = vmatprep.mubr.f32.mxu0 0.0
      %3097 = vmatmul.mubr.f32.gmra.mxu0 %v2422
      %v3098 = vpop.f32.mrf.mxu0
      %v3099 = vadd.f32 0.0, %v3098
      %v3100 = vpop.f32.mrf.mxu0
      %3101 = vmatprep.mubr.f32.mxu0 0.0
      %3102 = vmatmul.mubr.f32.gmra.mxu0 %v2425
      %v3103 = vpop.f32.mrf.mxu0
      %v3104 = vadd.f32 0.0, %v3103
      %v3105 = vpop.f32.mrf.mxu0
      %3106 = vmatprep.mubr.f32.mxu0 0.0
      %3107 = vmatmul.mubr.f32.gmra.mxu0 %v2428
      %v3108 = vpop.f32.mrf.mxu0
      %v3109 = vadd.f32 0.0, %v3108
      %v3110 = vpop.f32.mrf.mxu0
      %3111 = vmatprep.mubr.f32.mxu0 0.0
      %3112 = vmatmul.mubr.f32.gmra.mxu0 %v2431
      %v3113 = vpop.f32.mrf.mxu0
      %v3114 = vadd.f32 0.0, %v3113
      %v3115 = vpop.f32.mrf.mxu0
      %3116 = vmatprep.mubr.f32.mxu0 0.0
      %3117 = vmatmul.mubr.f32.gmra.mxu0 %v2434
      %v3118 = vpop.f32.mrf.mxu0
      %v3119 = vadd.f32 0.0, %v3118
      %v3120 = vpop.f32.mrf.mxu0
      %3121 = vmatprep.mubr.f32.mxu0 0.0
      %3122 = vmatmul.mubr.f32.gmra.mxu0 %v2437
      %v3123 = vpop.f32.mrf.mxu0
      %v3124 = vadd.f32 0.0, %v3123
      %v3125 = vpop.f32.mrf.mxu0
      %3126 = vmatprep.mubr.f32.mxu0 0.0
      %3127 = vmatmul.mubr.f32.gmra.mxu0 %v2440
      %v3128 = vpop.f32.mrf.mxu0
      %v3129 = vadd.f32 0.0, %v3128
      %v3130 = vpop.f32.mrf.mxu0
      %3131 = vmatprep.mubr.f32.mxu0 0.0
      %3132 = vmatmul.mubr.f32.gmra.mxu0 %v2443
      %v3133 = vpop.f32.mrf.mxu0
      %v3134 = vadd.f32 0.0, %v3133
      %v3135 = vpop.f32.mrf.mxu0
      %3136 = vmatprep.mubr.f32.mxu0 0.0
      %3137 = vmatmul.mubr.f32.gmra.mxu0 %v2446
      %v3138 = vpop.f32.mrf.mxu0
      %v3139 = vadd.f32 0.0, %v3138
      %v3140 = vpop.f32.mrf.mxu0
      %3141 = vmatprep.mubr.f32.mxu0 0.0
      %3142 = vmatmul.mubr.f32.gmra.mxu0 %v2449
      %v3143 = vpop.f32.mrf.mxu0
      %v3144 = vadd.f32 0.0, %v3143
      %v3145 = vpop.f32.mrf.mxu0
      %3146 = vmatprep.mubr.f32.mxu0 0.0
      %3147 = vmatmul.mubr.f32.gmra.mxu0 %v2452
      %v3148 = vpop.f32.mrf.mxu0
      %v3149 = vadd.f32 0.0, %v3148
      %v3150 = vpop.f32.mrf.mxu0
      %3151 = vmatprep.mubr.f32.mxu0 0.0
      %3152 = vmatmul.mubr.f32.gmra.mxu0 %v2455
      %v3153 = vpop.f32.mrf.mxu0
      %v3154 = vadd.f32 0.0, %v3153
      %v3155 = vpop.f32.mrf.mxu0
      %3156 = vmatprep.mubr.f32.mxu0 0.0
      %3157 = vmatmul.mubr.f32.gmra.mxu0 %v2458
      %v3158 = vpop.f32.mrf.mxu0
      %v3159 = vadd.f32 0.0, %v3158
      %v3160 = vpop.f32.mrf.mxu0
      %3161 = vmatprep.mubr.f32.mxu0 0.0
      %3162 = vmatmul.mubr.f32.gmra.mxu0 %v2461
      %v3163 = vpop.f32.mrf.mxu0
      %v3164 = vadd.f32 0.0, %v3163
      %v3165 = vpop.f32.mrf.mxu0
      %3166 = vmatprep.mubr.f32.mxu0 0.0
      %3167 = vmatmul.mubr.f32.gmra.mxu0 %v2464
      %v3168 = vpop.f32.mrf.mxu0
      %v3169 = vadd.f32 0.0, %v3168
      %v3170 = vpop.f32.mrf.mxu0
      %3171 = vmatprep.mubr.f32.mxu0 0.0
      %3172 = vmatmul.mubr.f32.gmra.mxu0 %v2467
      %v3173 = vpop.f32.mrf.mxu0
      %v3174 = vadd.f32 0.0, %v3173
      %v3175 = vpop.f32.mrf.mxu0
      %3176 = vmatprep.mubr.f32.mxu0 0.0
      %3177 = vmatmul.mubr.f32.gmra.mxu0 %v2470
      %v3178 = vpop.f32.mrf.mxu0
      %v3179 = vadd.f32 0.0, %v3178
      %v3180 = vpop.f32.mrf.mxu0
      %3181 = vmatprep.mubr.f32.mxu0 0.0
      %3182 = vmatmul.mubr.f32.gmra.mxu0 %v2473
      %v3183 = vpop.f32.mrf.mxu0
      %v3184 = vadd.f32 0.0, %v3183
      %v3185 = vpop.f32.mrf.mxu0
      %3186 = vmatprep.mubr.f32.mxu0 0.0
      %3187 = vmatmul.mubr.f32.gmra.mxu0 %v2476
      %v3188 = vpop.f32.mrf.mxu0
      %v3189 = vadd.f32 0.0, %v3188
      %v3190 = vpop.f32.mrf.mxu0
      %3191 = vmatprep.mubr.f32.mxu0 0.0
      %3192 = vmatmul.mubr.f32.gmra.mxu0 %v2479
      %v3193 = vpop.f32.mrf.mxu0
      %v3194 = vadd.f32 0.0, %v3193
      %v3195 = vpop.f32.mrf.mxu0
      %3196 = vmatprep.mubr.f32.mxu0 0.0
      %3197 = vmatmul.mubr.f32.gmra.mxu0 %v2482
      %v3198 = vpop.f32.mrf.mxu0
      %v3199 = vadd.f32 0.0, %v3198
      %v3200 = vpop.f32.mrf.mxu0
      %3201 = vmatprep.mubr.f32.mxu0 0.0
      %3202 = vmatmul.mubr.f32.gmra.mxu0 %v2485
      %v3203 = vpop.f32.mrf.mxu0
      %v3204 = vadd.f32 0.0, %v3203
      %v3205 = vpop.f32.mrf.mxu0
      %3206 = vmatprep.mubr.f32.mxu0 0.0
      %3207 = vmatmul.mubr.f32.gmra.mxu0 %v2488
      %v3208 = vpop.f32.mrf.mxu0
      %v3209 = vadd.f32 0.0, %v3208
      %v3210 = vpop.f32.mrf.mxu0
      %3211 = vmatprep.mubr.f32.mxu0 0.0
      %3212 = vmatmul.mubr.f32.gmra.mxu0 %v2491
      %v3213 = vpop.f32.mrf.mxu0
      %v3214 = vadd.f32 0.0, %v3213
      %v3215 = vpop.f32.mrf.mxu0
      %3216 = vmatprep.mubr.f32.mxu0 0.0
      %3217 = vmatmul.mubr.f32.gmra.mxu0 %v2494
      %v3218 = vpop.f32.mrf.mxu0
      %v3219 = vadd.f32 0.0, %v3218
      %v3220 = vpop.f32.mrf.mxu0
      %3221 = vmatprep.mubr.f32.mxu0 0.0
      %3222 = vmatmul.mubr.f32.gmra.mxu0 %v2497
      %v3223 = vpop.f32.mrf.mxu0
      %v3224 = vadd.f32 0.0, %v3223
      %v3225 = vpop.f32.mrf.mxu0
      %3226 = vmatprep.mubr.f32.mxu0 0.0
      %3227 = vmatmul.mubr.f32.gmra.mxu0 %v2500
      %v3228 = vpop.f32.mrf.mxu0
      %v3229 = vadd.f32 0.0, %v3228
      %v3230 = vpop.f32.mrf.mxu0
      %3231 = vmatprep.mubr.f32.mxu0 0.0
      %3232 = vmatmul.mubr.f32.gmra.mxu0 %v2503
      %v3233 = vpop.f32.mrf.mxu0
      %v3234 = vadd.f32 0.0, %v3233
      %v3235 = vpop.f32.mrf.mxu0
      %3236 = vmatprep.mubr.f32.mxu0 0.0
      %3237 = vmatmul.mubr.f32.gmra.mxu0 %v2506
      %v3238 = vpop.f32.mrf.mxu0
      %v3239 = vadd.f32 0.0, %v3238
      %v3240 = vpop.f32.mrf.mxu0
      %3241 = vmatprep.mubr.f32.mxu0 0.0
      %3242 = vmatmul.mubr.f32.gmra.mxu0 %v2509
      %v3243 = vpop.f32.mrf.mxu0
      %v3244 = vadd.f32 0.0, %v3243
      %v3245 = vpop.f32.mrf.mxu0
      %3246 = vmatprep.mubr.f32.mxu0 0.0
      %3247 = vmatmul.mubr.f32.gmra.mxu0 %v2512
      %v3248 = vpop.f32.mrf.mxu0
      %v3249 = vadd.f32 0.0, %v3248
      %v3250 = vpop.f32.mrf.mxu0
      %3251 = vmatprep.mubr.f32.mxu0 0.0
      %3252 = vmatmul.mubr.f32.gmra.mxu0 %v2515
      %v3253 = vpop.f32.mrf.mxu0
      %v3254 = vadd.f32 0.0, %v3253
      %v3255 = vpop.f32.mrf.mxu0
      %3256 = vmatprep.mubr.f32.mxu0 0.0
      %3257 = vmatmul.mubr.f32.gmra.mxu0 %v2518
      %v3258 = vpop.f32.mrf.mxu0
      %v3259 = vadd.f32 0.0, %v3258
      %v3260 = vpop.f32.mrf.mxu0
      %3261 = vmatprep.mubr.f32.mxu0 0.0
      %3262 = vmatmul.mubr.f32.gmra.mxu0 %v2521
      %v3263 = vpop.f32.mrf.mxu0
      %v3264 = vadd.f32 0.0, %v3263
      %v3265 = vpop.f32.mrf.mxu0
      %3266 = vmatprep.mubr.f32.mxu0 0.0
      %3267 = vmatmul.mubr.f32.gmra.mxu0 %v2524
      %v3268 = vpop.f32.mrf.mxu0
      %v3269 = vadd.f32 0.0, %v3268
      %v3270 = vpop.f32.mrf.mxu0
      %3271 = vmatprep.mubr.f32.mxu0 0.0
      %3272 = vmatmul.mubr.f32.gmra.mxu0 %v2527
      %v3273 = vpop.f32.mrf.mxu0
      %v3274 = vadd.f32 0.0, %v3273
      %v3275 = vpop.f32.mrf.mxu0
      %3276 = vmatprep.mubr.f32.mxu0 0.0
      %3277 = vmatmul.mubr.f32.gmra.mxu0 %v2530
      %v3278 = vpop.f32.mrf.mxu0
      %v3279 = vadd.f32 0.0, %v3278
      %v3280 = vpop.f32.mrf.mxu0
      %3281 = vmatprep.mubr.f32.mxu0 0.0
      %3282 = vmatmul.mubr.f32.gmra.mxu0 %v2533
      %v3283 = vpop.f32.mrf.mxu0
      %v3284 = vadd.f32 0.0, %v3283
      %v3285 = vpop.f32.mrf.mxu0
      %3286 = vmatprep.mubr.f32.mxu0 0.0
      %3287 = vmatmul.mubr.f32.gmra.mxu0 %v2536
      %v3288 = vpop.f32.mrf.mxu0
      %v3289 = vadd.f32 0.0, %v3288
      %v3290 = vpop.f32.mrf.mxu0
      %3291 = vmatprep.mubr.f32.mxu0 0.0
      %3292 = vmatmul.mubr.f32.gmra.mxu0 %v2539
      %v3293 = vpop.f32.mrf.mxu0
      %v3294 = vadd.f32 0.0, %v3293
      %v3295 = vpop.f32.mrf.mxu0
      %3296 = vmatprep.mubr.f32.mxu0 0.0
      %3297 = vmatmul.mubr.f32.gmra.mxu0 %v2542
      %v3298 = vpop.f32.mrf.mxu0
      %v3299 = vadd.f32 0.0, %v3298
      %v3300 = vpop.f32.mrf.mxu0
      %3301 = vmatprep.mubr.f32.mxu0 0.0
      %3302 = vmatmul.mubr.f32.gmra.mxu0 %v2545
      %v3303 = vpop.f32.mrf.mxu0
      %v3304 = vadd.f32 0.0, %v3303
      %v3305 = vpop.f32.mrf.mxu0
      %3306 = vmatprep.mubr.f32.mxu0 0.0
      %3307 = vmatmul.mubr.f32.gmra.mxu0 %v2548
      %v3308 = vpop.f32.mrf.mxu0
      %v3309 = vadd.f32 0.0, %v3308
      %v3310 = vpop.f32.mrf.mxu0
      %3311 = vmatprep.mubr.f32.mxu0 0.0
      %3312 = vmatmul.mubr.f32.gmra.mxu0 %v2551
      %v3313 = vpop.f32.mrf.mxu0
      %v3314 = vadd.f32 0.0, %v3313
      %v3315 = vpop.f32.mrf.mxu0
      %3316 = vmatprep.mubr.f32.mxu0 0.0
      %3317 = vmatmul.mubr.f32.gmra.mxu0 %v2554
      %v3318 = vpop.f32.mrf.mxu0
      %v3319 = vadd.f32 0.0, %v3318
      %v3320 = vpop.f32.mrf.mxu0
      %3321 = vmatprep.mubr.f32.mxu0 0.0
      %3322 = vmatmul.mubr.f32.gmra.mxu0 %v2557
      %v3323 = vpop.f32.mrf.mxu0
      %v3324 = vadd.f32 0.0, %v3323
      %v3325 = vpop.f32.mrf.mxu0
      %3326 = vmatprep.mubr.f32.mxu0 0.0
      %3327 = vmatmul.mubr.f32.gmra.mxu0 %v2560
      %v3328 = vpop.f32.mrf.mxu0
      %v3329 = vadd.f32 0.0, %v3328
      %v3330 = vpop.f32.mrf.mxu0
      %3331 = vdwg.mxu0
      %3333 = vset.pattern.permute.xlu0 0
      %3334 = vperm.xlu0 %3333, %v2629
      %v3335 = vpop.permute.xlu0 %3334
      %3338 = vset.pattern.permute.xlu0 0
      %3339 = vperm.xlu0 %3338, %v2634
      %v3340 = vpop.permute.xlu0 %3339
      %3343 = vset.pattern.permute.xlu0 0
      %3344 = vperm.xlu0 %3343, %v2639
      %v3345 = vpop.permute.xlu0 %3344
      %3348 = vset.pattern.permute.xlu0 0
      %3349 = vperm.xlu0 %3348, %v2644
      %v3350 = vpop.permute.xlu0 %3349
      %3353 = vset.pattern.permute.xlu0 0
      %3354 = vperm.xlu0 %3353, %v2649
      %v3355 = vpop.permute.xlu0 %3354
      %3358 = vset.pattern.permute.xlu0 0
      %3359 = vperm.xlu0 %3358, %v2654
      %v3360 = vpop.permute.xlu0 %3359
      %3363 = vset.pattern.permute.xlu0 0
      %3364 = vperm.xlu0 %3363, %v2659
      %v3365 = vpop.permute.xlu0 %3364
      %3368 = vset.pattern.permute.xlu0 0
      %3369 = vperm.xlu0 %3368, %v2664
      %v3370 = vpop.permute.xlu0 %3369
      %3373 = vset.pattern.permute.xlu0 0
      %3374 = vperm.xlu0 %3373, %v2669
      %v3375 = vpop.permute.xlu0 %3374
      %3378 = vset.pattern.permute.xlu0 0
      %3379 = vperm.xlu0 %3378, %v2674
      %v3380 = vpop.permute.xlu0 %3379
      %3383 = vset.pattern.permute.xlu0 0
      %3384 = vperm.xlu0 %3383, %v2679
      %v3385 = vpop.permute.xlu0 %3384
      %3388 = vset.pattern.permute.xlu0 0
      %3389 = vperm.xlu0 %3388, %v2684
      %v3390 = vpop.permute.xlu0 %3389
      %3393 = vset.pattern.permute.xlu0 0
      %3394 = vperm.xlu0 %3393, %v2689
      %v3395 = vpop.permute.xlu0 %3394
      %3398 = vset.pattern.permute.xlu0 0
      %3399 = vperm.xlu0 %3398, %v2694
      %v3400 = vpop.permute.xlu0 %3399
      %3403 = vset.pattern.permute.xlu0 0
      %3404 = vperm.xlu0 %3403, %v2699
      %v3405 = vpop.permute.xlu0 %3404
      %3408 = vset.pattern.permute.xlu0 0
      %3409 = vperm.xlu0 %3408, %v2704
      %v3410 = vpop.permute.xlu0 %3409
      %3413 = vset.pattern.permute.xlu0 0
      %3414 = vperm.xlu0 %3413, %v2709
      %v3415 = vpop.permute.xlu0 %3414
      %3418 = vset.pattern.permute.xlu0 0
      %3419 = vperm.xlu0 %3418, %v2714
      %v3420 = vpop.permute.xlu0 %3419
      %3423 = vset.pattern.permute.xlu0 0
      %3424 = vperm.xlu0 %3423, %v2719
      %v3425 = vpop.permute.xlu0 %3424
      %3428 = vset.pattern.permute.xlu0 0
      %3429 = vperm.xlu0 %3428, %v2724
      %v3430 = vpop.permute.xlu0 %3429
      %3433 = vset.pattern.permute.xlu0 0
      %3434 = vperm.xlu0 %3433, %v2729
      %v3435 = vpop.permute.xlu0 %3434
      %3438 = vset.pattern.permute.xlu0 0
      %3439 = vperm.xlu0 %3438, %v2734
      %v3440 = vpop.permute.xlu0 %3439
      %3443 = vset.pattern.permute.xlu0 0
      %3444 = vperm.xlu0 %3443, %v2739
      %v3445 = vpop.permute.xlu0 %3444
      %3448 = vset.pattern.permute.xlu0 0
      %3449 = vperm.xlu0 %3448, %v2744
      %v3450 = vpop.permute.xlu0 %3449
      %3453 = vset.pattern.permute.xlu0 0
      %3454 = vperm.xlu0 %3453, %v2749
      %v3455 = vpop.permute.xlu0 %3454
      %3458 = vset.pattern.permute.xlu0 0
      %3459 = vperm.xlu0 %3458, %v2754
      %v3460 = vpop.permute.xlu0 %3459
      %3463 = vset.pattern.permute.xlu0 0
      %3464 = vperm.xlu0 %3463, %v2759
      %v3465 = vpop.permute.xlu0 %3464
      %3468 = vset.pattern.permute.xlu0 0
      %3469 = vperm.xlu0 %3468, %v2764
      %v3470 = vpop.permute.xlu0 %3469
      %3473 = vset.pattern.permute.xlu0 0
      %3474 = vperm.xlu0 %3473, %v2769
      %v3475 = vpop.permute.xlu0 %3474
      %3478 = vset.pattern.permute.xlu0 0
      %3479 = vperm.xlu0 %3478, %v2774
      %v3480 = vpop.permute.xlu0 %3479
      %3483 = vset.pattern.permute.xlu0 0
      %3484 = vperm.xlu0 %3483, %v2779
      %v3485 = vpop.permute.xlu0 %3484
      %3488 = vset.pattern.permute.xlu0 0
      %3489 = vperm.xlu0 %3488, %v2784
      %v3490 = vpop.permute.xlu0 %3489
      %3493 = vset.pattern.permute.xlu0 0
      %3494 = vperm.xlu0 %3493, %v2789
      %v3495 = vpop.permute.xlu0 %3494
      %3498 = vset.pattern.permute.xlu0 0
      %3499 = vperm.xlu0 %3498, %v2794
      %v3500 = vpop.permute.xlu0 %3499
      %3503 = vset.pattern.permute.xlu0 0
      %3504 = vperm.xlu0 %3503, %v2799
      %v3505 = vpop.permute.xlu0 %3504
      %3508 = vset.pattern.permute.xlu0 0
      %3509 = vperm.xlu0 %3508, %v2804
      %v3510 = vpop.permute.xlu0 %3509
      %3513 = vset.pattern.permute.xlu0 0
      %3514 = vperm.xlu0 %3513, %v2809
      %v3515 = vpop.permute.xlu0 %3514
      %3518 = vset.pattern.permute.xlu0 0
      %3519 = vperm.xlu0 %3518, %v2814
      %v3520 = vpop.permute.xlu0 %3519
      %3523 = vset.pattern.permute.xlu0 0
      %3524 = vperm.xlu0 %3523, %v2819
      %v3525 = vpop.permute.xlu0 %3524
      %3528 = vset.pattern.permute.xlu0 0
      %3529 = vperm.xlu0 %3528, %v2824
      %v3530 = vpop.permute.xlu0 %3529
      %3533 = vset.pattern.permute.xlu0 0
      %3534 = vperm.xlu0 %3533, %v2829
      %v3535 = vpop.permute.xlu0 %3534
      %3538 = vset.pattern.permute.xlu0 0
      %3539 = vperm.xlu0 %3538, %v2834
      %v3540 = vpop.permute.xlu0 %3539
      %3543 = vset.pattern.permute.xlu0 0
      %3544 = vperm.xlu0 %3543, %v2839
      %v3545 = vpop.permute.xlu0 %3544
      %3548 = vset.pattern.permute.xlu0 0
      %3549 = vperm.xlu0 %3548, %v2844
      %v3550 = vpop.permute.xlu0 %3549
      %3553 = vset.pattern.permute.xlu0 0
      %3554 = vperm.xlu0 %3553, %v2849
      %v3555 = vpop.permute.xlu0 %3554
      %3558 = vset.pattern.permute.xlu0 0
      %3559 = vperm.xlu0 %3558, %v2854
      %v3560 = vpop.permute.xlu0 %3559
      %3563 = vset.pattern.permute.xlu0 0
      %3564 = vperm.xlu0 %3563, %v2859
      %v3565 = vpop.permute.xlu0 %3564
      %3568 = vset.pattern.permute.xlu0 0
      %3569 = vperm.xlu0 %3568, %v2864
      %v3570 = vpop.permute.xlu0 %3569
      %3573 = vset.pattern.permute.xlu0 0
      %3574 = vperm.xlu0 %3573, %v2869
      %v3575 = vpop.permute.xlu0 %3574
      %3578 = vset.pattern.permute.xlu0 0
      %3579 = vperm.xlu0 %3578, %v2874
      %v3580 = vpop.permute.xlu0 %3579
      %3583 = vset.pattern.permute.xlu0 0
      %3584 = vperm.xlu0 %3583, %v2879
      %v3585 = vpop.permute.xlu0 %3584
      %3588 = vset.pattern.permute.xlu0 0
      %3589 = vperm.xlu0 %3588, %v2884
      %v3590 = vpop.permute.xlu0 %3589
      %3593 = vset.pattern.permute.xlu0 0
      %3594 = vperm.xlu0 %3593, %v2889
      %v3595 = vpop.permute.xlu0 %3594
      %3598 = vset.pattern.permute.xlu0 0
      %3599 = vperm.xlu0 %3598, %v2894
      %v3600 = vpop.permute.xlu0 %3599
      %3603 = vset.pattern.permute.xlu0 0
      %3604 = vperm.xlu0 %3603, %v2899
      %v3605 = vpop.permute.xlu0 %3604
      %3608 = vset.pattern.permute.xlu0 0
      %3609 = vperm.xlu0 %3608, %v2904
      %v3610 = vpop.permute.xlu0 %3609
      %3613 = vset.pattern.permute.xlu0 0
      %3614 = vperm.xlu0 %3613, %v2909
      %v3615 = vpop.permute.xlu0 %3614
      %3618 = vset.pattern.permute.xlu0 0
      %3619 = vperm.xlu0 %3618, %v2914
      %v3620 = vpop.permute.xlu0 %3619
      %3623 = vset.pattern.permute.xlu0 0
      %3624 = vperm.xlu0 %3623, %v2919
      %v3625 = vpop.permute.xlu0 %3624
      %3628 = vset.pattern.permute.xlu0 0
      %3629 = vperm.xlu0 %3628, %v2924
      %v3630 = vpop.permute.xlu0 %3629
      %3633 = vset.pattern.permute.xlu0 0
      %3634 = vperm.xlu0 %3633, %v2929
      %v3635 = vpop.permute.xlu0 %3634
      %3638 = vset.pattern.permute.xlu0 0
      %3639 = vperm.xlu0 %3638, %v2934
      %v3640 = vpop.permute.xlu0 %3639
      %3643 = vset.pattern.permute.xlu0 0
      %3644 = vperm.xlu0 %3643, %v2939
      %v3645 = vpop.permute.xlu0 %3644
      %3648 = vset.pattern.permute.xlu0 0
      %3649 = vperm.xlu0 %3648, %v2944
      %v3650 = vpop.permute.xlu0 %3649
      %v3652 = vsub.f32 %v1469, %v3335
      %v3653 = vsub.f32 %v1470, %v3340
      %v3654 = vsub.f32 %v1471, %v3345
      %v3655 = vsub.f32 %v1472, %v3350
      %v3656 = vsub.f32 %v1473, %v3355
      %v3657 = vsub.f32 %v1474, %v3360
      %v3658 = vsub.f32 %v1475, %v3365
      %v3659 = vsub.f32 %v1476, %v3370
      %v3660 = vsub.f32 %v1477, %v3375
      %v3661 = vsub.f32 %v1478, %v3380
      %v3662 = vsub.f32 %v1479, %v3385
      %v3663 = vsub.f32 %v1480, %v3390
      %v3664 = vsub.f32 %v1481, %v3395
      %v3665 = vsub.f32 %v1482, %v3400
      %v3666 = vsub.f32 %v1483, %v3405
      %v3667 = vsub.f32 %v1484, %v3410
      %v3668 = vsub.f32 %v1485, %v3415
      %v3669 = vsub.f32 %v1486, %v3420
      %v3670 = vsub.f32 %v1487, %v3425
      %v3671 = vsub.f32 %v1488, %v3430
      %v3672 = vsub.f32 %v1489, %v3435
      %v3673 = vsub.f32 %v1490, %v3440
      %v3674 = vsub.f32 %v1491, %v3445
      %v3675 = vsub.f32 %v1492, %v3450
      %v3676 = vsub.f32 %v1493, %v3455
      %v3677 = vsub.f32 %v1494, %v3460
      %v3678 = vsub.f32 %v1495, %v3465
      %v3679 = vsub.f32 %v1496, %v3470
      %v3680 = vsub.f32 %v1497, %v3475
      %v3681 = vsub.f32 %v1498, %v3480
      %v3682 = vsub.f32 %v1499, %v3485
      %v3683 = vsub.f32 %v1500, %v3490
      %v3684 = vsub.f32 %v1501, %v3495
      %v3685 = vsub.f32 %v1502, %v3500
      %v3686 = vsub.f32 %v1503, %v3505
      %v3687 = vsub.f32 %v1504, %v3510
      %v3688 = vsub.f32 %v1505, %v3515
      %v3689 = vsub.f32 %v1506, %v3520
      %v3690 = vsub.f32 %v1507, %v3525
      %v3691 = vsub.f32 %v1508, %v3530
      %v3692 = vsub.f32 %v1509, %v3535
      %v3693 = vsub.f32 %v1510, %v3540
      %v3694 = vsub.f32 %v1511, %v3545
      %v3695 = vsub.f32 %v1512, %v3550
      %v3696 = vsub.f32 %v1513, %v3555
      %v3697 = vsub.f32 %v1514, %v3560
      %v3698 = vsub.f32 %v1515, %v3565
      %v3699 = vsub.f32 %v1516, %v3570
      %v3700 = vsub.f32 %v1517, %v3575
      %v3701 = vsub.f32 %v1518, %v3580
      %v3702 = vsub.f32 %v1519, %v3585
      %v3703 = vsub.f32 %v1520, %v3590
      %v3704 = vsub.f32 %v1521, %v3595
      %v3705 = vsub.f32 %v1522, %v3600
      %v3706 = vsub.f32 %v1523, %v3605
      %v3707 = vsub.f32 %v1524, %v3610
      %v3708 = vsub.f32 %v1525, %v3615
      %v3709 = vsub.f32 %v1526, %v3620
      %v3710 = vsub.f32 %v1527, %v3625
      %v3711 = vsub.f32 %v1528, %v3630
      %v3712 = vsub.f32 %v1529, %v3635
      %v3713 = vsub.f32 %v1530, %v3640
      %v3714 = vsub.f32 %v1531, %v3645
      %v3715 = vsub.f32 %v1532, %v3650
      %3717 = vset.pattern.permute.xlu0 0
      %3718 = vperm.xlu0 %3717, %v3014
      %v3719 = vpop.permute.xlu0 %3718
      %3722 = vset.pattern.permute.xlu0 0
      %3723 = vperm.xlu0 %3722, %v3019
      %v3724 = vpop.permute.xlu0 %3723
      %3727 = vset.pattern.permute.xlu0 0
      %3728 = vperm.xlu0 %3727, %v3024
      %v3729 = vpop.permute.xlu0 %3728
      %3732 = vset.pattern.permute.xlu0 0
      %3733 = vperm.xlu0 %3732, %v3029
      %v3734 = vpop.permute.xlu0 %3733
      %3737 = vset.pattern.permute.xlu0 0
      %3738 = vperm.xlu0 %3737, %v3034
      %v3739 = vpop.permute.xlu0 %3738
      %3742 = vset.pattern.permute.xlu0 0
      %3743 = vperm.xlu0 %3742, %v3039
      %v3744 = vpop.permute.xlu0 %3743
      %3747 = vset.pattern.permute.xlu0 0
      %3748 = vperm.xlu0 %3747, %v3044
      %v3749 = vpop.permute.xlu0 %3748
      %3752 = vset.pattern.permute.xlu0 0
      %3753 = vperm.xlu0 %3752, %v3049
      %v3754 = vpop.permute.xlu0 %3753
      %3757 = vset.pattern.permute.xlu0 0
      %3758 = vperm.xlu0 %3757, %v3054
      %v3759 = vpop.permute.xlu0 %3758
      %3762 = vset.pattern.permute.xlu0 0
      %3763 = vperm.xlu0 %3762, %v3059
      %v3764 = vpop.permute.xlu0 %3763
      %3767 = vset.pattern.permute.xlu0 0
      %3768 = vperm.xlu0 %3767, %v3064
      %v3769 = vpop.permute.xlu0 %3768
      %3772 = vset.pattern.permute.xlu0 0
      %3773 = vperm.xlu0 %3772, %v3069
      %v3774 = vpop.permute.xlu0 %3773
      %3777 = vset.pattern.permute.xlu0 0
      %3778 = vperm.xlu0 %3777, %v3074
      %v3779 = vpop.permute.xlu0 %3778
      %3782 = vset.pattern.permute.xlu0 0
      %3783 = vperm.xlu0 %3782, %v3079
      %v3784 = vpop.permute.xlu0 %3783
      %3787 = vset.pattern.permute.xlu0 0
      %3788 = vperm.xlu0 %3787, %v3084
      %v3789 = vpop.permute.xlu0 %3788
      %3792 = vset.pattern.permute.xlu0 0
      %3793 = vperm.xlu0 %3792, %v3089
      %v3794 = vpop.permute.xlu0 %3793
      %3797 = vset.pattern.permute.xlu0 0
      %3798 = vperm.xlu0 %3797, %v3094
      %v3799 = vpop.permute.xlu0 %3798
      %3802 = vset.pattern.permute.xlu0 0
      %3803 = vperm.xlu0 %3802, %v3099
      %v3804 = vpop.permute.xlu0 %3803
      %3807 = vset.pattern.permute.xlu0 0
      %3808 = vperm.xlu0 %3807, %v3104
      %v3809 = vpop.permute.xlu0 %3808
      %3812 = vset.pattern.permute.xlu0 0
      %3813 = vperm.xlu0 %3812, %v3109
      %v3814 = vpop.permute.xlu0 %3813
      %3817 = vset.pattern.permute.xlu0 0
      %3818 = vperm.xlu0 %3817, %v3114
      %v3819 = vpop.permute.xlu0 %3818
      %3822 = vset.pattern.permute.xlu0 0
      %3823 = vperm.xlu0 %3822, %v3119
      %v3824 = vpop.permute.xlu0 %3823
      %3827 = vset.pattern.permute.xlu0 0
      %3828 = vperm.xlu0 %3827, %v3124
      %v3829 = vpop.permute.xlu0 %3828
      %3832 = vset.pattern.permute.xlu0 0
      %3833 = vperm.xlu0 %3832, %v3129
      %v3834 = vpop.permute.xlu0 %3833
      %3837 = vset.pattern.permute.xlu0 0
      %3838 = vperm.xlu0 %3837, %v3134
      %v3839 = vpop.permute.xlu0 %3838
      %3842 = vset.pattern.permute.xlu0 0
      %3843 = vperm.xlu0 %3842, %v3139
      %v3844 = vpop.permute.xlu0 %3843
      %3847 = vset.pattern.permute.xlu0 0
      %3848 = vperm.xlu0 %3847, %v3144
      %v3849 = vpop.permute.xlu0 %3848
      %3852 = vset.pattern.permute.xlu0 0
      %3853 = vperm.xlu0 %3852, %v3149
      %v3854 = vpop.permute.xlu0 %3853
      %3857 = vset.pattern.permute.xlu0 0
      %3858 = vperm.xlu0 %3857, %v3154
      %v3859 = vpop.permute.xlu0 %3858
      %3862 = vset.pattern.permute.xlu0 0
      %3863 = vperm.xlu0 %3862, %v3159
      %v3864 = vpop.permute.xlu0 %3863
      %3867 = vset.pattern.permute.xlu0 0
      %3868 = vperm.xlu0 %3867, %v3164
      %v3869 = vpop.permute.xlu0 %3868
      %3872 = vset.pattern.permute.xlu0 0
      %3873 = vperm.xlu0 %3872, %v3169
      %v3874 = vpop.permute.xlu0 %3873
      %3877 = vset.pattern.permute.xlu0 0
      %3878 = vperm.xlu0 %3877, %v3174
      %v3879 = vpop.permute.xlu0 %3878
      %3882 = vset.pattern.permute.xlu0 0
      %3883 = vperm.xlu0 %3882, %v3179
      %v3884 = vpop.permute.xlu0 %3883
      %3887 = vset.pattern.permute.xlu0 0
      %3888 = vperm.xlu0 %3887, %v3184
      %v3889 = vpop.permute.xlu0 %3888
      %3892 = vset.pattern.permute.xlu0 0
      %3893 = vperm.xlu0 %3892, %v3189
      %v3894 = vpop.permute.xlu0 %3893
      %3897 = vset.pattern.permute.xlu0 0
      %3898 = vperm.xlu0 %3897, %v3194
      %v3899 = vpop.permute.xlu0 %3898
      %3902 = vset.pattern.permute.xlu0 0
      %3903 = vperm.xlu0 %3902, %v3199
      %v3904 = vpop.permute.xlu0 %3903
      %3907 = vset.pattern.permute.xlu0 0
      %3908 = vperm.xlu0 %3907, %v3204
      %v3909 = vpop.permute.xlu0 %3908
      %3912 = vset.pattern.permute.xlu0 0
      %3913 = vperm.xlu0 %3912, %v3209
      %v3914 = vpop.permute.xlu0 %3913
      %3917 = vset.pattern.permute.xlu0 0
      %3918 = vperm.xlu0 %3917, %v3214
      %v3919 = vpop.permute.xlu0 %3918
      %3922 = vset.pattern.permute.xlu0 0
      %3923 = vperm.xlu0 %3922, %v3219
      %v3924 = vpop.permute.xlu0 %3923
      %3927 = vset.pattern.permute.xlu0 0
      %3928 = vperm.xlu0 %3927, %v3224
      %v3929 = vpop.permute.xlu0 %3928
      %3932 = vset.pattern.permute.xlu0 0
      %3933 = vperm.xlu0 %3932, %v3229
      %v3934 = vpop.permute.xlu0 %3933
      %3937 = vset.pattern.permute.xlu0 0
      %3938 = vperm.xlu0 %3937, %v3234
      %v3939 = vpop.permute.xlu0 %3938
      %3942 = vset.pattern.permute.xlu0 0
      %3943 = vperm.xlu0 %3942, %v3239
      %v3944 = vpop.permute.xlu0 %3943
      %3947 = vset.pattern.permute.xlu0 0
      %3948 = vperm.xlu0 %3947, %v3244
      %v3949 = vpop.permute.xlu0 %3948
      %3952 = vset.pattern.permute.xlu0 0
      %3953 = vperm.xlu0 %3952, %v3249
      %v3954 = vpop.permute.xlu0 %3953
      %3957 = vset.pattern.permute.xlu0 0
      %3958 = vperm.xlu0 %3957, %v3254
      %v3959 = vpop.permute.xlu0 %3958
      %3962 = vset.pattern.permute.xlu0 0
      %3963 = vperm.xlu0 %3962, %v3259
      %v3964 = vpop.permute.xlu0 %3963
      %3967 = vset.pattern.permute.xlu0 0
      %3968 = vperm.xlu0 %3967, %v3264
      %v3969 = vpop.permute.xlu0 %3968
      %3972 = vset.pattern.permute.xlu0 0
      %3973 = vperm.xlu0 %3972, %v3269
      %v3974 = vpop.permute.xlu0 %3973
      %3977 = vset.pattern.permute.xlu0 0
      %3978 = vperm.xlu0 %3977, %v3274
      %v3979 = vpop.permute.xlu0 %3978
      %3982 = vset.pattern.permute.xlu0 0
      %3983 = vperm.xlu0 %3982, %v3279
      %v3984 = vpop.permute.xlu0 %3983
      %3987 = vset.pattern.permute.xlu0 0
      %3988 = vperm.xlu0 %3987, %v3284
      %v3989 = vpop.permute.xlu0 %3988
      %3992 = vset.pattern.permute.xlu0 0
      %3993 = vperm.xlu0 %3992, %v3289
      %v3994 = vpop.permute.xlu0 %3993
      %3997 = vset.pattern.permute.xlu0 0
      %3998 = vperm.xlu0 %3997, %v3294
      %v3999 = vpop.permute.xlu0 %3998
      %4002 = vset.pattern.permute.xlu0 0
      %4003 = vperm.xlu0 %4002, %v3299
      %v4004 = vpop.permute.xlu0 %4003
      %4007 = vset.pattern.permute.xlu0 0
      %4008 = vperm.xlu0 %4007, %v3304
      %v4009 = vpop.permute.xlu0 %4008
      %4012 = vset.pattern.permute.xlu0 0
      %4013 = vperm.xlu0 %4012, %v3309
      %v4014 = vpop.permute.xlu0 %4013
      %4017 = vset.pattern.permute.xlu0 0
      %4018 = vperm.xlu0 %4017, %v3314
      %v4019 = vpop.permute.xlu0 %4018
      %4022 = vset.pattern.permute.xlu0 0
      %4023 = vperm.xlu0 %4022, %v3319
      %v4024 = vpop.permute.xlu0 %4023
      %4027 = vset.pattern.permute.xlu0 0
      %4028 = vperm.xlu0 %4027, %v3324
      %v4029 = vpop.permute.xlu0 %4028
      %4032 = vset.pattern.permute.xlu0 0
      %4033 = vperm.xlu0 %4032, %v3329
      %v4034 = vpop.permute.xlu0 %4033
      %v4036 = vmul.f32 %v3652, %v3719
      %v4037 = vmul.f32 %v3653, %v3724
      %v4038 = vmul.f32 %v3654, %v3729
      %v4039 = vmul.f32 %v3655, %v3734
      %v4040 = vmul.f32 %v3656, %v3739
      %v4041 = vmul.f32 %v3657, %v3744
      %v4042 = vmul.f32 %v3658, %v3749
      %v4043 = vmul.f32 %v3659, %v3754
      %v4044 = vmul.f32 %v3660, %v3759
      %v4045 = vmul.f32 %v3661, %v3764
      %v4046 = vmul.f32 %v3662, %v3769
      %v4047 = vmul.f32 %v3663, %v3774
      %v4048 = vmul.f32 %v3664, %v3779
      %v4049 = vmul.f32 %v3665, %v3784
      %v4050 = vmul.f32 %v3666, %v3789
      %v4051 = vmul.f32 %v3667, %v3794
      %v4052 = vmul.f32 %v3668, %v3799
      %v4053 = vmul.f32 %v3669, %v3804
      %v4054 = vmul.f32 %v3670, %v3809
      %v4055 = vmul.f32 %v3671, %v3814
      %v4056 = vmul.f32 %v3672, %v3819
      %v4057 = vmul.f32 %v3673, %v3824
      %v4058 = vmul.f32 %v3674, %v3829
      %v4059 = vmul.f32 %v3675, %v3834
      %v4060 = vmul.f32 %v3676, %v3839
      %v4061 = vmul.f32 %v3677, %v3844
      %v4062 = vmul.f32 %v3678, %v3849
      %v4063 = vmul.f32 %v3679, %v3854
      %v4064 = vmul.f32 %v3680, %v3859
      %v4065 = vmul.f32 %v3681, %v3864
      %v4066 = vmul.f32 %v3682, %v3869
      %v4067 = vmul.f32 %v3683, %v3874
      %v4068 = vmul.f32 %v3684, %v3879
      %v4069 = vmul.f32 %v3685, %v3884
      %v4070 = vmul.f32 %v3686, %v3889
      %v4071 = vmul.f32 %v3687, %v3894
      %v4072 = vmul.f32 %v3688, %v3899
      %v4073 = vmul.f32 %v3689, %v3904
      %v4074 = vmul.f32 %v3690, %v3909
      %v4075 = vmul.f32 %v3691, %v3914
      %v4076 = vmul.f32 %v3692, %v3919
      %v4077 = vmul.f32 %v3693, %v3924
      %v4078 = vmul.f32 %v3694, %v3929
      %v4079 = vmul.f32 %v3695, %v3934
      %v4080 = vmul.f32 %v3696, %v3939
      %v4081 = vmul.f32 %v3697, %v3944
      %v4082 = vmul.f32 %v3698, %v3949
      %v4083 = vmul.f32 %v3699, %v3954
      %v4084 = vmul.f32 %v3700, %v3959
      %v4085 = vmul.f32 %v3701, %v3964
      %v4086 = vmul.f32 %v3702, %v3969
      %v4087 = vmul.f32 %v3703, %v3974
      %v4088 = vmul.f32 %v3704, %v3979
      %v4089 = vmul.f32 %v3705, %v3984
      %v4090 = vmul.f32 %v3706, %v3989
      %v4091 = vmul.f32 %v3707, %v3994
      %v4092 = vmul.f32 %v3708, %v3999
      %v4093 = vmul.f32 %v3709, %v4004
      %v4094 = vmul.f32 %v3710, %v4009
      %v4095 = vmul.f32 %v3711, %v4014
      %v4096 = vmul.f32 %v3712, %v4019
      %v4097 = vmul.f32 %v3713, %v4024
      %v4098 = vmul.f32 %v3714, %v4029
      %v4099 = vmul.f32 %v3715, %v4034
      %v4100 = vld [vmem:[%s3] sm:$0xff]
      %v4101 = vld [vmem:[%s3 + $0x8] sm:$0xff]
      %v4102 = vld [vmem:[%s3 + $0x10] sm:$0xff]
      %v4103 = vld [vmem:[%s3 + $0x18] sm:$0xff]
      %v4104 = vld [vmem:[%s3 + $0x20] sm:$0xff]
      %v4105 = vld [vmem:[%s3 + $0x28] sm:$0xff]
      %v4106 = vld [vmem:[%s3 + $0x30] sm:$0xff]
      %v4107 = vld [vmem:[%s3 + $0x38] sm:$0xff]
      %v4108 = vld [vmem:[%s3 + $0x40] sm:$0xff]
      %v4109 = vld [vmem:[%s3 + $0x48] sm:$0xff]
      %v4110 = vld [vmem:[%s3 + $0x50] sm:$0xff]
      %v4111 = vld [vmem:[%s3 + $0x58] sm:$0xff]
      %v4112 = vld [vmem:[%s3 + $0x60] sm:$0xff]
      %v4113 = vld [vmem:[%s3 + $0x68] sm:$0xff]
      %v4114 = vld [vmem:[%s3 + $0x70] sm:$0xff]
      %v4115 = vld [vmem:[%s3 + $0x78] sm:$0xff]
      %v4116 = vld [vmem:[%s3 + $0x80] sm:$0xff]
      %v4117 = vld [vmem:[%s3 + $0x88] sm:$0xff]
      %v4118 = vld [vmem:[%s3 + $0x90] sm:$0xff]
      %v4119 = vld [vmem:[%s3 + $0x98] sm:$0xff]
      %v4120 = vld [vmem:[%s3 + $0xa0] sm:$0xff]
      %v4121 = vld [vmem:[%s3 + $0xa8] sm:$0xff]
      %v4122 = vld [vmem:[%s3 + $0xb0] sm:$0xff]
      %v4123 = vld [vmem:[%s3 + $0xb8] sm:$0xff]
      %v4124 = vld [vmem:[%s3 + $0xc0] sm:$0xff]
      %v4125 = vld [vmem:[%s3 + $0xc8] sm:$0xff]
      %v4126 = vld [vmem:[%s3 + $0xd0] sm:$0xff]
      %v4127 = vld [vmem:[%s3 + $0xd8] sm:$0xff]
      %v4128 = vld [vmem:[%s3 + $0xe0] sm:$0xff]
      %v4129 = vld [vmem:[%s3 + $0xe8] sm:$0xff]
      %v4130 = vld [vmem:[%s3 + $0xf0] sm:$0xff]
      %v4131 = vld [vmem:[%s3 + $0xf8] sm:$0xff]
      %v4132 = vld [vmem:[%s3 + $0x100] sm:$0xff]
      %v4133 = vld [vmem:[%s3 + $0x108] sm:$0xff]
      %v4134 = vld [vmem:[%s3 + $0x110] sm:$0xff]
      %v4135 = vld [vmem:[%s3 + $0x118] sm:$0xff]
      %v4136 = vld [vmem:[%s3 + $0x120] sm:$0xff]
      %v4137 = vld [vmem:[%s3 + $0x128] sm:$0xff]
      %v4138 = vld [vmem:[%s3 + $0x130] sm:$0xff]
      %v4139 = vld [vmem:[%s3 + $0x138] sm:$0xff]
      %v4140 = vld [vmem:[%s3 + $0x140] sm:$0xff]
      %v4141 = vld [vmem:[%s3 + $0x148] sm:$0xff]
      %v4142 = vld [vmem:[%s3 + $0x150] sm:$0xff]
      %v4143 = vld [vmem:[%s3 + $0x158] sm:$0xff]
      %v4144 = vld [vmem:[%s3 + $0x160] sm:$0xff]
      %v4145 = vld [vmem:[%s3 + $0x168] sm:$0xff]
      %v4146 = vld [vmem:[%s3 + $0x170] sm:$0xff]
      %v4147 = vld [vmem:[%s3 + $0x178] sm:$0xff]
      %v4148 = vld [vmem:[%s3 + $0x180] sm:$0xff]
      %v4149 = vld [vmem:[%s3 + $0x188] sm:$0xff]
      %v4150 = vld [vmem:[%s3 + $0x190] sm:$0xff]
      %v4151 = vld [vmem:[%s3 + $0x198] sm:$0xff]
      %v4152 = vld [vmem:[%s3 + $0x1a0] sm:$0xff]
      %v4153 = vld [vmem:[%s3 + $0x1a8] sm:$0xff]
      %v4154 = vld [vmem:[%s3 + $0x1b0] sm:$0xff]
      %v4155 = vld [vmem:[%s3 + $0x1b8] sm:$0xff]
      %v4156 = vld [vmem:[%s3 + $0x1c0] sm:$0xff]
      %v4157 = vld [vmem:[%s3 + $0x1c8] sm:$0xff]
      %v4158 = vld [vmem:[%s3 + $0x1d0] sm:$0xff]
      %v4159 = vld [vmem:[%s3 + $0x1d8] sm:$0xff]
      %v4160 = vld [vmem:[%s3 + $0x1e0] sm:$0xff]
      %v4161 = vld [vmem:[%s3 + $0x1e8] sm:$0xff]
      %v4162 = vld [vmem:[%s3 + $0x1f0] sm:$0xff]
      %v4163 = vld [vmem:[%s3 + $0x1f8] sm:$0xff]
      %4165 = vset.pattern.permute.xlu0 0
      %4166 = vperm.xlu0 %4165, %v4100
      %v4167 = vpop.permute.xlu0 %4166
      %4170 = vset.pattern.permute.xlu0 0
      %4171 = vperm.xlu0 %4170, %v4101
      %v4172 = vpop.permute.xlu0 %4171
      %4175 = vset.pattern.permute.xlu0 0
      %4176 = vperm.xlu0 %4175, %v4102
      %v4177 = vpop.permute.xlu0 %4176
      %4180 = vset.pattern.permute.xlu0 0
      %4181 = vperm.xlu0 %4180, %v4103
      %v4182 = vpop.permute.xlu0 %4181
      %4185 = vset.pattern.permute.xlu0 0
      %4186 = vperm.xlu0 %4185, %v4104
      %v4187 = vpop.permute.xlu0 %4186
      %4190 = vset.pattern.permute.xlu0 0
      %4191 = vperm.xlu0 %4190, %v4105
      %v4192 = vpop.permute.xlu0 %4191
      %4195 = vset.pattern.permute.xlu0 0
      %4196 = vperm.xlu0 %4195, %v4106
      %v4197 = vpop.permute.xlu0 %4196
      %4200 = vset.pattern.permute.xlu0 0
      %4201 = vperm.xlu0 %4200, %v4107
      %v4202 = vpop.permute.xlu0 %4201
      %4205 = vset.pattern.permute.xlu0 0
      %4206 = vperm.xlu0 %4205, %v4108
      %v4207 = vpop.permute.xlu0 %4206
      %4210 = vset.pattern.permute.xlu0 0
      %4211 = vperm.xlu0 %4210, %v4109
      %v4212 = vpop.permute.xlu0 %4211
      %4215 = vset.pattern.permute.xlu0 0
      %4216 = vperm.xlu0 %4215, %v4110
      %v4217 = vpop.permute.xlu0 %4216
      %4220 = vset.pattern.permute.xlu0 0
      %4221 = vperm.xlu0 %4220, %v4111
      %v4222 = vpop.permute.xlu0 %4221
      %4225 = vset.pattern.permute.xlu0 0
      %4226 = vperm.xlu0 %4225, %v4112
      %v4227 = vpop.permute.xlu0 %4226
      %4230 = vset.pattern.permute.xlu0 0
      %4231 = vperm.xlu0 %4230, %v4113
      %v4232 = vpop.permute.xlu0 %4231
      %4235 = vset.pattern.permute.xlu0 0
      %4236 = vperm.xlu0 %4235, %v4114
      %v4237 = vpop.permute.xlu0 %4236
      %4240 = vset.pattern.permute.xlu0 0
      %4241 = vperm.xlu0 %4240, %v4115
      %v4242 = vpop.permute.xlu0 %4241
      %4245 = vset.pattern.permute.xlu0 0
      %4246 = vperm.xlu0 %4245, %v4116
      %v4247 = vpop.permute.xlu0 %4246
      %4250 = vset.pattern.permute.xlu0 0
      %4251 = vperm.xlu0 %4250, %v4117
      %v4252 = vpop.permute.xlu0 %4251
      %4255 = vset.pattern.permute.xlu0 0
      %4256 = vperm.xlu0 %4255, %v4118
      %v4257 = vpop.permute.xlu0 %4256
      %4260 = vset.pattern.permute.xlu0 0
      %4261 = vperm.xlu0 %4260, %v4119
      %v4262 = vpop.permute.xlu0 %4261
      %4265 = vset.pattern.permute.xlu0 0
      %4266 = vperm.xlu0 %4265, %v4120
      %v4267 = vpop.permute.xlu0 %4266
      %4270 = vset.pattern.permute.xlu0 0
      %4271 = vperm.xlu0 %4270, %v4121
      %v4272 = vpop.permute.xlu0 %4271
      %4275 = vset.pattern.permute.xlu0 0
      %4276 = vperm.xlu0 %4275, %v4122
      %v4277 = vpop.permute.xlu0 %4276
      %4280 = vset.pattern.permute.xlu0 0
      %4281 = vperm.xlu0 %4280, %v4123
      %v4282 = vpop.permute.xlu0 %4281
      %4285 = vset.pattern.permute.xlu0 0
      %4286 = vperm.xlu0 %4285, %v4124
      %v4287 = vpop.permute.xlu0 %4286
      %4290 = vset.pattern.permute.xlu0 0
      %4291 = vperm.xlu0 %4290, %v4125
      %v4292 = vpop.permute.xlu0 %4291
      %4295 = vset.pattern.permute.xlu0 0
      %4296 = vperm.xlu0 %4295, %v4126
      %v4297 = vpop.permute.xlu0 %4296
      %4300 = vset.pattern.permute.xlu0 0
      %4301 = vperm.xlu0 %4300, %v4127
      %v4302 = vpop.permute.xlu0 %4301
      %4305 = vset.pattern.permute.xlu0 0
      %4306 = vperm.xlu0 %4305, %v4128
      %v4307 = vpop.permute.xlu0 %4306
      %4310 = vset.pattern.permute.xlu0 0
      %4311 = vperm.xlu0 %4310, %v4129
      %v4312 = vpop.permute.xlu0 %4311
      %4315 = vset.pattern.permute.xlu0 0
      %4316 = vperm.xlu0 %4315, %v4130
      %v4317 = vpop.permute.xlu0 %4316
      %4320 = vset.pattern.permute.xlu0 0
      %4321 = vperm.xlu0 %4320, %v4131
      %v4322 = vpop.permute.xlu0 %4321
      %4325 = vset.pattern.permute.xlu0 0
      %4326 = vperm.xlu0 %4325, %v4132
      %v4327 = vpop.permute.xlu0 %4326
      %4330 = vset.pattern.permute.xlu0 0
      %4331 = vperm.xlu0 %4330, %v4133
      %v4332 = vpop.permute.xlu0 %4331
      %4335 = vset.pattern.permute.xlu0 0
      %4336 = vperm.xlu0 %4335, %v4134
      %v4337 = vpop.permute.xlu0 %4336
      %4340 = vset.pattern.permute.xlu0 0
      %4341 = vperm.xlu0 %4340, %v4135
      %v4342 = vpop.permute.xlu0 %4341
      %4345 = vset.pattern.permute.xlu0 0
      %4346 = vperm.xlu0 %4345, %v4136
      %v4347 = vpop.permute.xlu0 %4346
      %4350 = vset.pattern.permute.xlu0 0
      %4351 = vperm.xlu0 %4350, %v4137
      %v4352 = vpop.permute.xlu0 %4351
      %4355 = vset.pattern.permute.xlu0 0
      %4356 = vperm.xlu0 %4355, %v4138
      %v4357 = vpop.permute.xlu0 %4356
      %4360 = vset.pattern.permute.xlu0 0
      %4361 = vperm.xlu0 %4360, %v4139
      %v4362 = vpop.permute.xlu0 %4361
      %4365 = vset.pattern.permute.xlu0 0
      %4366 = vperm.xlu0 %4365, %v4140
      %v4367 = vpop.permute.xlu0 %4366
      %4370 = vset.pattern.permute.xlu0 0
      %4371 = vperm.xlu0 %4370, %v4141
      %v4372 = vpop.permute.xlu0 %4371
      %4375 = vset.pattern.permute.xlu0 0
      %4376 = vperm.xlu0 %4375, %v4142
      %v4377 = vpop.permute.xlu0 %4376
      %4380 = vset.pattern.permute.xlu0 0
      %4381 = vperm.xlu0 %4380, %v4143
      %v4382 = vpop.permute.xlu0 %4381
      %4385 = vset.pattern.permute.xlu0 0
      %4386 = vperm.xlu0 %4385, %v4144
      %v4387 = vpop.permute.xlu0 %4386
      %4390 = vset.pattern.permute.xlu0 0
      %4391 = vperm.xlu0 %4390, %v4145
      %v4392 = vpop.permute.xlu0 %4391
      %4395 = vset.pattern.permute.xlu0 0
      %4396 = vperm.xlu0 %4395, %v4146
      %v4397 = vpop.permute.xlu0 %4396
      %4400 = vset.pattern.permute.xlu0 0
      %4401 = vperm.xlu0 %4400, %v4147
      %v4402 = vpop.permute.xlu0 %4401
      %4405 = vset.pattern.permute.xlu0 0
      %4406 = vperm.xlu0 %4405, %v4148
      %v4407 = vpop.permute.xlu0 %4406
      %4410 = vset.pattern.permute.xlu0 0
      %4411 = vperm.xlu0 %4410, %v4149
      %v4412 = vpop.permute.xlu0 %4411
      %4415 = vset.pattern.permute.xlu0 0
      %4416 = vperm.xlu0 %4415, %v4150
      %v4417 = vpop.permute.xlu0 %4416
      %4420 = vset.pattern.permute.xlu0 0
      %4421 = vperm.xlu0 %4420, %v4151
      %v4422 = vpop.permute.xlu0 %4421
      %4425 = vset.pattern.permute.xlu0 0
      %4426 = vperm.xlu0 %4425, %v4152
      %v4427 = vpop.permute.xlu0 %4426
      %4430 = vset.pattern.permute.xlu0 0
      %4431 = vperm.xlu0 %4430, %v4153
      %v4432 = vpop.permute.xlu0 %4431
      %4435 = vset.pattern.permute.xlu0 0
      %4436 = vperm.xlu0 %4435, %v4154
      %v4437 = vpop.permute.xlu0 %4436
      %4440 = vset.pattern.permute.xlu0 0
      %4441 = vperm.xlu0 %4440, %v4155
      %v4442 = vpop.permute.xlu0 %4441
      %4445 = vset.pattern.permute.xlu0 0
      %4446 = vperm.xlu0 %4445, %v4156
      %v4447 = vpop.permute.xlu0 %4446
      %4450 = vset.pattern.permute.xlu0 0
      %4451 = vperm.xlu0 %4450, %v4157
      %v4452 = vpop.permute.xlu0 %4451
      %4455 = vset.pattern.permute.xlu0 0
      %4456 = vperm.xlu0 %4455, %v4158
      %v4457 = vpop.permute.xlu0 %4456
      %4460 = vset.pattern.permute.xlu0 0
      %4461 = vperm.xlu0 %4460, %v4159
      %v4462 = vpop.permute.xlu0 %4461
      %4465 = vset.pattern.permute.xlu0 0
      %4466 = vperm.xlu0 %4465, %v4160
      %v4467 = vpop.permute.xlu0 %4466
      %4470 = vset.pattern.permute.xlu0 0
      %4471 = vperm.xlu0 %4470, %v4161
      %v4472 = vpop.permute.xlu0 %4471
      %4475 = vset.pattern.permute.xlu0 0
      %4476 = vperm.xlu0 %4475, %v4162
      %v4477 = vpop.permute.xlu0 %4476
      %4480 = vset.pattern.permute.xlu0 0
      %4481 = vperm.xlu0 %4480, %v4163
      %v4482 = vpop.permute.xlu0 %4481
      %v4484 = vmul.f32 %v4036, %v4167
      %v4485 = vmul.f32 %v4037, %v4172
      %v4486 = vmul.f32 %v4038, %v4177
      %v4487 = vmul.f32 %v4039, %v4182
      %v4488 = vmul.f32 %v4040, %v4187
      %v4489 = vmul.f32 %v4041, %v4192
      %v4490 = vmul.f32 %v4042, %v4197
      %v4491 = vmul.f32 %v4043, %v4202
      %v4492 = vmul.f32 %v4044, %v4207
      %v4493 = vmul.f32 %v4045, %v4212
      %v4494 = vmul.f32 %v4046, %v4217
      %v4495 = vmul.f32 %v4047, %v4222
      %v4496 = vmul.f32 %v4048, %v4227
      %v4497 = vmul.f32 %v4049, %v4232
      %v4498 = vmul.f32 %v4050, %v4237
      %v4499 = vmul.f32 %v4051, %v4242
      %v4500 = vmul.f32 %v4052, %v4247
      %v4501 = vmul.f32 %v4053, %v4252
      %v4502 = vmul.f32 %v4054, %v4257
      %v4503 = vmul.f32 %v4055, %v4262
      %v4504 = vmul.f32 %v4056, %v4267
      %v4505 = vmul.f32 %v4057, %v4272
      %v4506 = vmul.f32 %v4058, %v4277
      %v4507 = vmul.f32 %v4059, %v4282
      %v4508 = vmul.f32 %v4060, %v4287
      %v4509 = vmul.f32 %v4061, %v4292
      %v4510 = vmul.f32 %v4062, %v4297
      %v4511 = vmul.f32 %v4063, %v4302
      %v4512 = vmul.f32 %v4064, %v4307
      %v4513 = vmul.f32 %v4065, %v4312
      %v4514 = vmul.f32 %v4066, %v4317
      %v4515 = vmul.f32 %v4067, %v4322
      %v4516 = vmul.f32 %v4068, %v4327
      %v4517 = vmul.f32 %v4069, %v4332
      %v4518 = vmul.f32 %v4070, %v4337
      %v4519 = vmul.f32 %v4071, %v4342
      %v4520 = vmul.f32 %v4072, %v4347
      %v4521 = vmul.f32 %v4073, %v4352
      %v4522 = vmul.f32 %v4074, %v4357
      %v4523 = vmul.f32 %v4075, %v4362
      %v4524 = vmul.f32 %v4076, %v4367
      %v4525 = vmul.f32 %v4077, %v4372
      %v4526 = vmul.f32 %v4078, %v4377
      %v4527 = vmul.f32 %v4079, %v4382
      %v4528 = vmul.f32 %v4080, %v4387
      %v4529 = vmul.f32 %v4081, %v4392
      %v4530 = vmul.f32 %v4082, %v4397
      %v4531 = vmul.f32 %v4083, %v4402
      %v4532 = vmul.f32 %v4084, %v4407
      %v4533 = vmul.f32 %v4085, %v4412
      %v4534 = vmul.f32 %v4086, %v4417
      %v4535 = vmul.f32 %v4087, %v4422
      %v4536 = vmul.f32 %v4088, %v4427
      %v4537 = vmul.f32 %v4089, %v4432
      %v4538 = vmul.f32 %v4090, %v4437
      %v4539 = vmul.f32 %v4091, %v4442
      %v4540 = vmul.f32 %v4092, %v4447
      %v4541 = vmul.f32 %v4093, %v4452
      %v4542 = vmul.f32 %v4094, %v4457
      %v4543 = vmul.f32 %v4095, %v4462
      %v4544 = vmul.f32 %v4096, %v4467
      %v4545 = vmul.f32 %v4097, %v4472
      %v4546 = vmul.f32 %v4098, %v4477
      %v4547 = vmul.f32 %v4099, %v4482
      %v4548 = vld [vmem:[%s4] sm:$0xff]
      %v4549 = vld [vmem:[%s4 + $0x8] sm:$0xff]
      %v4550 = vld [vmem:[%s4 + $0x10] sm:$0xff]
      %v4551 = vld [vmem:[%s4 + $0x18] sm:$0xff]
      %v4552 = vld [vmem:[%s4 + $0x20] sm:$0xff]
      %v4553 = vld [vmem:[%s4 + $0x28] sm:$0xff]
      %v4554 = vld [vmem:[%s4 + $0x30] sm:$0xff]
      %v4555 = vld [vmem:[%s4 + $0x38] sm:$0xff]
      %v4556 = vld [vmem:[%s4 + $0x40] sm:$0xff]
      %v4557 = vld [vmem:[%s4 + $0x48] sm:$0xff]
      %v4558 = vld [vmem:[%s4 + $0x50] sm:$0xff]
      %v4559 = vld [vmem:[%s4 + $0x58] sm:$0xff]
      %v4560 = vld [vmem:[%s4 + $0x60] sm:$0xff]
      %v4561 = vld [vmem:[%s4 + $0x68] sm:$0xff]
      %v4562 = vld [vmem:[%s4 + $0x70] sm:$0xff]
      %v4563 = vld [vmem:[%s4 + $0x78] sm:$0xff]
      %v4564 = vld [vmem:[%s4 + $0x80] sm:$0xff]
      %v4565 = vld [vmem:[%s4 + $0x88] sm:$0xff]
      %v4566 = vld [vmem:[%s4 + $0x90] sm:$0xff]
      %v4567 = vld [vmem:[%s4 + $0x98] sm:$0xff]
      %v4568 = vld [vmem:[%s4 + $0xa0] sm:$0xff]
      %v4569 = vld [vmem:[%s4 + $0xa8] sm:$0xff]
      %v4570 = vld [vmem:[%s4 + $0xb0] sm:$0xff]
      %v4571 = vld [vmem:[%s4 + $0xb8] sm:$0xff]
      %v4572 = vld [vmem:[%s4 + $0xc0] sm:$0xff]
      %v4573 = vld [vmem:[%s4 + $0xc8] sm:$0xff]
      %v4574 = vld [vmem:[%s4 + $0xd0] sm:$0xff]
      %v4575 = vld [vmem:[%s4 + $0xd8] sm:$0xff]
      %v4576 = vld [vmem:[%s4 + $0xe0] sm:$0xff]
      %v4577 = vld [vmem:[%s4 + $0xe8] sm:$0xff]
      %v4578 = vld [vmem:[%s4 + $0xf0] sm:$0xff]
      %v4579 = vld [vmem:[%s4 + $0xf8] sm:$0xff]
      %v4580 = vld [vmem:[%s4 + $0x100] sm:$0xff]
      %v4581 = vld [vmem:[%s4 + $0x108] sm:$0xff]
      %v4582 = vld [vmem:[%s4 + $0x110] sm:$0xff]
      %v4583 = vld [vmem:[%s4 + $0x118] sm:$0xff]
      %v4584 = vld [vmem:[%s4 + $0x120] sm:$0xff]
      %v4585 = vld [vmem:[%s4 + $0x128] sm:$0xff]
      %v4586 = vld [vmem:[%s4 + $0x130] sm:$0xff]
      %v4587 = vld [vmem:[%s4 + $0x138] sm:$0xff]
      %v4588 = vld [vmem:[%s4 + $0x140] sm:$0xff]
      %v4589 = vld [vmem:[%s4 + $0x148] sm:$0xff]
      %v4590 = vld [vmem:[%s4 + $0x150] sm:$0xff]
      %v4591 = vld [vmem:[%s4 + $0x158] sm:$0xff]
      %v4592 = vld [vmem:[%s4 + $0x160] sm:$0xff]
      %v4593 = vld [vmem:[%s4 + $0x168] sm:$0xff]
      %v4594 = vld [vmem:[%s4 + $0x170] sm:$0xff]
      %v4595 = vld [vmem:[%s4 + $0x178] sm:$0xff]
      %v4596 = vld [vmem:[%s4 + $0x180] sm:$0xff]
      %v4597 = vld [vmem:[%s4 + $0x188] sm:$0xff]
      %v4598 = vld [vmem:[%s4 + $0x190] sm:$0xff]
      %v4599 = vld [vmem:[%s4 + $0x198] sm:$0xff]
      %v4600 = vld [vmem:[%s4 + $0x1a0] sm:$0xff]
      %v4601 = vld [vmem:[%s4 + $0x1a8] sm:$0xff]
      %v4602 = vld [vmem:[%s4 + $0x1b0] sm:$0xff]
      %v4603 = vld [vmem:[%s4 + $0x1b8] sm:$0xff]
      %v4604 = vld [vmem:[%s4 + $0x1c0] sm:$0xff]
      %v4605 = vld [vmem:[%s4 + $0x1c8] sm:$0xff]
      %v4606 = vld [vmem:[%s4 + $0x1d0] sm:$0xff]
      %v4607 = vld [vmem:[%s4 + $0x1d8] sm:$0xff]
      %v4608 = vld [vmem:[%s4 + $0x1e0] sm:$0xff]
      %v4609 = vld [vmem:[%s4 + $0x1e8] sm:$0xff]
      %v4610 = vld [vmem:[%s4 + $0x1f0] sm:$0xff]
      %v4611 = vld [vmem:[%s4 + $0x1f8] sm:$0xff]
      %4613 = vset.pattern.permute.xlu0 0
      %4614 = vperm.xlu0 %4613, %v4548
      %v4615 = vpop.permute.xlu0 %4614
      %4618 = vset.pattern.permute.xlu0 0
      %4619 = vperm.xlu0 %4618, %v4549
      %v4620 = vpop.permute.xlu0 %4619
      %4623 = vset.pattern.permute.xlu0 0
      %4624 = vperm.xlu0 %4623, %v4550
      %v4625 = vpop.permute.xlu0 %4624
      %4628 = vset.pattern.permute.xlu0 0
      %4629 = vperm.xlu0 %4628, %v4551
      %v4630 = vpop.permute.xlu0 %4629
      %4633 = vset.pattern.permute.xlu0 0
      %4634 = vperm.xlu0 %4633, %v4552
      %v4635 = vpop.permute.xlu0 %4634
      %4638 = vset.pattern.permute.xlu0 0
      %4639 = vperm.xlu0 %4638, %v4553
      %v4640 = vpop.permute.xlu0 %4639
      %4643 = vset.pattern.permute.xlu0 0
      %4644 = vperm.xlu0 %4643, %v4554
      %v4645 = vpop.permute.xlu0 %4644
      %4648 = vset.pattern.permute.xlu0 0
      %4649 = vperm.xlu0 %4648, %v4555
      %v4650 = vpop.permute.xlu0 %4649
      %4653 = vset.pattern.permute.xlu0 0
      %4654 = vperm.xlu0 %4653, %v4556
      %v4655 = vpop.permute.xlu0 %4654
      %4658 = vset.pattern.permute.xlu0 0
      %4659 = vperm.xlu0 %4658, %v4557
      %v4660 = vpop.permute.xlu0 %4659
      %4663 = vset.pattern.permute.xlu0 0
      %4664 = vperm.xlu0 %4663, %v4558
      %v4665 = vpop.permute.xlu0 %4664
      %4668 = vset.pattern.permute.xlu0 0
      %4669 = vperm.xlu0 %4668, %v4559
      %v4670 = vpop.permute.xlu0 %4669
      %4673 = vset.pattern.permute.xlu0 0
      %4674 = vperm.xlu0 %4673, %v4560
      %v4675 = vpop.permute.xlu0 %4674
      %4678 = vset.pattern.permute.xlu0 0
      %4679 = vperm.xlu0 %4678, %v4561
      %v4680 = vpop.permute.xlu0 %4679
      %4683 = vset.pattern.permute.xlu0 0
      %4684 = vperm.xlu0 %4683, %v4562
      %v4685 = vpop.permute.xlu0 %4684
      %4688 = vset.pattern.permute.xlu0 0
      %4689 = vperm.xlu0 %4688, %v4563
      %v4690 = vpop.permute.xlu0 %4689
      %4693 = vset.pattern.permute.xlu0 0
      %4694 = vperm.xlu0 %4693, %v4564
      %v4695 = vpop.permute.xlu0 %4694
      %4698 = vset.pattern.permute.xlu0 0
      %4699 = vperm.xlu0 %4698, %v4565
      %v4700 = vpop.permute.xlu0 %4699
      %4703 = vset.pattern.permute.xlu0 0
      %4704 = vperm.xlu0 %4703, %v4566
      %v4705 = vpop.permute.xlu0 %4704
      %4708 = vset.pattern.permute.xlu0 0
      %4709 = vperm.xlu0 %4708, %v4567
      %v4710 = vpop.permute.xlu0 %4709
      %4713 = vset.pattern.permute.xlu0 0
      %4714 = vperm.xlu0 %4713, %v4568
      %v4715 = vpop.permute.xlu0 %4714
      %4718 = vset.pattern.permute.xlu0 0
      %4719 = vperm.xlu0 %4718, %v4569
      %v4720 = vpop.permute.xlu0 %4719
      %4723 = vset.pattern.permute.xlu0 0
      %4724 = vperm.xlu0 %4723, %v4570
      %v4725 = vpop.permute.xlu0 %4724
      %4728 = vset.pattern.permute.xlu0 0
      %4729 = vperm.xlu0 %4728, %v4571
      %v4730 = vpop.permute.xlu0 %4729
      %4733 = vset.pattern.permute.xlu0 0
      %4734 = vperm.xlu0 %4733, %v4572
      %v4735 = vpop.permute.xlu0 %4734
      %4738 = vset.pattern.permute.xlu0 0
      %4739 = vperm.xlu0 %4738, %v4573
      %v4740 = vpop.permute.xlu0 %4739
      %4743 = vset.pattern.permute.xlu0 0
      %4744 = vperm.xlu0 %4743, %v4574
      %v4745 = vpop.permute.xlu0 %4744
      %4748 = vset.pattern.permute.xlu0 0
      %4749 = vperm.xlu0 %4748, %v4575
      %v4750 = vpop.permute.xlu0 %4749
      %4753 = vset.pattern.permute.xlu0 0
      %4754 = vperm.xlu0 %4753, %v4576
      %v4755 = vpop.permute.xlu0 %4754
      %4758 = vset.pattern.permute.xlu0 0
      %4759 = vperm.xlu0 %4758, %v4577
      %v4760 = vpop.permute.xlu0 %4759
      %4763 = vset.pattern.permute.xlu0 0
      %4764 = vperm.xlu0 %4763, %v4578
      %v4765 = vpop.permute.xlu0 %4764
      %4768 = vset.pattern.permute.xlu0 0
      %4769 = vperm.xlu0 %4768, %v4579
      %v4770 = vpop.permute.xlu0 %4769
      %4773 = vset.pattern.permute.xlu0 0
      %4774 = vperm.xlu0 %4773, %v4580
      %v4775 = vpop.permute.xlu0 %4774
      %4778 = vset.pattern.permute.xlu0 0
      %4779 = vperm.xlu0 %4778, %v4581
      %v4780 = vpop.permute.xlu0 %4779
      %4783 = vset.pattern.permute.xlu0 0
      %4784 = vperm.xlu0 %4783, %v4582
      %v4785 = vpop.permute.xlu0 %4784
      %4788 = vset.pattern.permute.xlu0 0
      %4789 = vperm.xlu0 %4788, %v4583
      %v4790 = vpop.permute.xlu0 %4789
      %4793 = vset.pattern.permute.xlu0 0
      %4794 = vperm.xlu0 %4793, %v4584
      %v4795 = vpop.permute.xlu0 %4794
      %4798 = vset.pattern.permute.xlu0 0
      %4799 = vperm.xlu0 %4798, %v4585
      %v4800 = vpop.permute.xlu0 %4799
      %4803 = vset.pattern.permute.xlu0 0
      %4804 = vperm.xlu0 %4803, %v4586
      %v4805 = vpop.permute.xlu0 %4804
      %4808 = vset.pattern.permute.xlu0 0
      %4809 = vperm.xlu0 %4808, %v4587
      %v4810 = vpop.permute.xlu0 %4809
      %4813 = vset.pattern.permute.xlu0 0
      %4814 = vperm.xlu0 %4813, %v4588
      %v4815 = vpop.permute.xlu0 %4814
      %4818 = vset.pattern.permute.xlu0 0
      %4819 = vperm.xlu0 %4818, %v4589
      %v4820 = vpop.permute.xlu0 %4819
      %4823 = vset.pattern.permute.xlu0 0
      %4824 = vperm.xlu0 %4823, %v4590
      %v4825 = vpop.permute.xlu0 %4824
      %4828 = vset.pattern.permute.xlu0 0
      %4829 = vperm.xlu0 %4828, %v4591
      %v4830 = vpop.permute.xlu0 %4829
      %4833 = vset.pattern.permute.xlu0 0
      %4834 = vperm.xlu0 %4833, %v4592
      %v4835 = vpop.permute.xlu0 %4834
      %4838 = vset.pattern.permute.xlu0 0
      %4839 = vperm.xlu0 %4838, %v4593
      %v4840 = vpop.permute.xlu0 %4839
      %4843 = vset.pattern.permute.xlu0 0
      %4844 = vperm.xlu0 %4843, %v4594
      %v4845 = vpop.permute.xlu0 %4844
      %4848 = vset.pattern.permute.xlu0 0
      %4849 = vperm.xlu0 %4848, %v4595
      %v4850 = vpop.permute.xlu0 %4849
      %4853 = vset.pattern.permute.xlu0 0
      %4854 = vperm.xlu0 %4853, %v4596
      %v4855 = vpop.permute.xlu0 %4854
      %4858 = vset.pattern.permute.xlu0 0
      %4859 = vperm.xlu0 %4858, %v4597
      %v4860 = vpop.permute.xlu0 %4859
      %4863 = vset.pattern.permute.xlu0 0
      %4864 = vperm.xlu0 %4863, %v4598
      %v4865 = vpop.permute.xlu0 %4864
      %4868 = vset.pattern.permute.xlu0 0
      %4869 = vperm.xlu0 %4868, %v4599
      %v4870 = vpop.permute.xlu0 %4869
      %4873 = vset.pattern.permute.xlu0 0
      %4874 = vperm.xlu0 %4873, %v4600
      %v4875 = vpop.permute.xlu0 %4874
      %4878 = vset.pattern.permute.xlu0 0
      %4879 = vperm.xlu0 %4878, %v4601
      %v4880 = vpop.permute.xlu0 %4879
      %4883 = vset.pattern.permute.xlu0 0
      %4884 = vperm.xlu0 %4883, %v4602
      %v4885 = vpop.permute.xlu0 %4884
      %4888 = vset.pattern.permute.xlu0 0
      %4889 = vperm.xlu0 %4888, %v4603
      %v4890 = vpop.permute.xlu0 %4889
      %4893 = vset.pattern.permute.xlu0 0
      %4894 = vperm.xlu0 %4893, %v4604
      %v4895 = vpop.permute.xlu0 %4894
      %4898 = vset.pattern.permute.xlu0 0
      %4899 = vperm.xlu0 %4898, %v4605
      %v4900 = vpop.permute.xlu0 %4899
      %4903 = vset.pattern.permute.xlu0 0
      %4904 = vperm.xlu0 %4903, %v4606
      %v4905 = vpop.permute.xlu0 %4904
      %4908 = vset.pattern.permute.xlu0 0
      %4909 = vperm.xlu0 %4908, %v4607
      %v4910 = vpop.permute.xlu0 %4909
      %4913 = vset.pattern.permute.xlu0 0
      %4914 = vperm.xlu0 %4913, %v4608
      %v4915 = vpop.permute.xlu0 %4914
      %4918 = vset.pattern.permute.xlu0 0
      %4919 = vperm.xlu0 %4918, %v4609
      %v4920 = vpop.permute.xlu0 %4919
      %4923 = vset.pattern.permute.xlu0 0
      %4924 = vperm.xlu0 %4923, %v4610
      %v4925 = vpop.permute.xlu0 %4924
      %4928 = vset.pattern.permute.xlu0 0
      %4929 = vperm.xlu0 %4928, %v4611
      %v4930 = vpop.permute.xlu0 %4929
      %v4932 = vadd.f32 %v4484, %v4615
      %v4933 = vadd.f32 %v4485, %v4620
      %v4934 = vadd.f32 %v4486, %v4625
      %v4935 = vadd.f32 %v4487, %v4630
      %v4936 = vadd.f32 %v4488, %v4635
      %v4937 = vadd.f32 %v4489, %v4640
      %v4938 = vadd.f32 %v4490, %v4645
      %v4939 = vadd.f32 %v4491, %v4650
      %v4940 = vadd.f32 %v4492, %v4655
      %v4941 = vadd.f32 %v4493, %v4660
      %v4942 = vadd.f32 %v4494, %v4665
      %v4943 = vadd.f32 %v4495, %v4670
      %v4944 = vadd.f32 %v4496, %v4675
      %v4945 = vadd.f32 %v4497, %v4680
      %v4946 = vadd.f32 %v4498, %v4685
      %v4947 = vadd.f32 %v4499, %v4690
      %v4948 = vadd.f32 %v4500, %v4695
      %v4949 = vadd.f32 %v4501, %v4700
      %v4950 = vadd.f32 %v4502, %v4705
      %v4951 = vadd.f32 %v4503, %v4710
      %v4952 = vadd.f32 %v4504, %v4715
      %v4953 = vadd.f32 %v4505, %v4720
      %v4954 = vadd.f32 %v4506, %v4725
      %v4955 = vadd.f32 %v4507, %v4730
      %v4956 = vadd.f32 %v4508, %v4735
      %v4957 = vadd.f32 %v4509, %v4740
      %v4958 = vadd.f32 %v4510, %v4745
      %v4959 = vadd.f32 %v4511, %v4750
      %v4960 = vadd.f32 %v4512, %v4755
      %v4961 = vadd.f32 %v4513, %v4760
      %v4962 = vadd.f32 %v4514, %v4765
      %v4963 = vadd.f32 %v4515, %v4770
      %v4964 = vadd.f32 %v4516, %v4775
      %v4965 = vadd.f32 %v4517, %v4780
      %v4966 = vadd.f32 %v4518, %v4785
      %v4967 = vadd.f32 %v4519, %v4790
      %v4968 = vadd.f32 %v4520, %v4795
      %v4969 = vadd.f32 %v4521, %v4800
      %v4970 = vadd.f32 %v4522, %v4805
      %v4971 = vadd.f32 %v4523, %v4810
      %v4972 = vadd.f32 %v4524, %v4815
      %v4973 = vadd.f32 %v4525, %v4820
      %v4974 = vadd.f32 %v4526, %v4825
      %v4975 = vadd.f32 %v4527, %v4830
      %v4976 = vadd.f32 %v4528, %v4835
      %v4977 = vadd.f32 %v4529, %v4840
      %v4978 = vadd.f32 %v4530, %v4845
      %v4979 = vadd.f32 %v4531, %v4850
      %v4980 = vadd.f32 %v4532, %v4855
      %v4981 = vadd.f32 %v4533, %v4860
      %v4982 = vadd.f32 %v4534, %v4865
      %v4983 = vadd.f32 %v4535, %v4870
      %v4984 = vadd.f32 %v4536, %v4875
      %v4985 = vadd.f32 %v4537, %v4880
      %v4986 = vadd.f32 %v4538, %v4885
      %v4987 = vadd.f32 %v4539, %v4890
      %v4988 = vadd.f32 %v4540, %v4895
      %v4989 = vadd.f32 %v4541, %v4900
      %v4990 = vadd.f32 %v4542, %v4905
      %v4991 = vadd.f32 %v4543, %v4910
      %v4992 = vadd.f32 %v4544, %v4915
      %v4993 = vadd.f32 %v4545, %v4920
      %v4994 = vadd.f32 %v4546, %v4925
      %v4995 = vadd.f32 %v4547, %v4930
      %v4996 = vmax.f32 %v4932, 0.0
      %v4997 = vmax.f32 %v4933, 0.0
      %v4998 = vmax.f32 %v4934, 0.0
      %v4999 = vmax.f32 %v4935, 0.0
      %v5000 = vmax.f32 %v4936, 0.0
      %v5001 = vmax.f32 %v4937, 0.0
      %v5002 = vmax.f32 %v4938, 0.0
      %v5003 = vmax.f32 %v4939, 0.0
      %v5004 = vmax.f32 %v4940, 0.0
      %v5005 = vmax.f32 %v4941, 0.0
      %v5006 = vmax.f32 %v4942, 0.0
      %v5007 = vmax.f32 %v4943, 0.0
      %v5008 = vmax.f32 %v4944, 0.0
      %v5009 = vmax.f32 %v4945, 0.0
      %v5010 = vmax.f32 %v4946, 0.0
      %v5011 = vmax.f32 %v4947, 0.0
      %v5012 = vmax.f32 %v4948, 0.0
      %v5013 = vmax.f32 %v4949, 0.0
      %v5014 = vmax.f32 %v4950, 0.0
      %v5015 = vmax.f32 %v4951, 0.0
      %v5016 = vmax.f32 %v4952, 0.0
      %v5017 = vmax.f32 %v4953, 0.0
      %v5018 = vmax.f32 %v4954, 0.0
      %v5019 = vmax.f32 %v4955, 0.0
      %v5020 = vmax.f32 %v4956, 0.0
      %v5021 = vmax.f32 %v4957, 0.0
      %v5022 = vmax.f32 %v4958, 0.0
      %v5023 = vmax.f32 %v4959, 0.0
      %v5024 = vmax.f32 %v4960, 0.0
      %v5025 = vmax.f32 %v4961, 0.0
      %v5026 = vmax.f32 %v4962, 0.0
      %v5027 = vmax.f32 %v4963, 0.0
      %v5028 = vmax.f32 %v4964, 0.0
      %v5029 = vmax.f32 %v4965, 0.0
      %v5030 = vmax.f32 %v4966, 0.0
      %v5031 = vmax.f32 %v4967, 0.0
      %v5032 = vmax.f32 %v4968, 0.0
      %v5033 = vmax.f32 %v4969, 0.0
      %v5034 = vmax.f32 %v4970, 0.0
      %v5035 = vmax.f32 %v4971, 0.0
      %v5036 = vmax.f32 %v4972, 0.0
      %v5037 = vmax.f32 %v4973, 0.0
      %v5038 = vmax.f32 %v4974, 0.0
      %v5039 = vmax.f32 %v4975, 0.0
      %v5040 = vmax.f32 %v4976, 0.0
      %v5041 = vmax.f32 %v4977, 0.0
      %v5042 = vmax.f32 %v4978, 0.0
      %v5043 = vmax.f32 %v4979, 0.0
      %v5044 = vmax.f32 %v4980, 0.0
      %v5045 = vmax.f32 %v4981, 0.0
      %v5046 = vmax.f32 %v4982, 0.0
      %v5047 = vmax.f32 %v4983, 0.0
      %v5048 = vmax.f32 %v4984, 0.0
      %v5049 = vmax.f32 %v4985, 0.0
      %v5050 = vmax.f32 %v4986, 0.0
      %v5051 = vmax.f32 %v4987, 0.0
      %v5052 = vmax.f32 %v4988, 0.0
      %v5053 = vmax.f32 %v4989, 0.0
      %v5054 = vmax.f32 %v4990, 0.0
      %v5055 = vmax.f32 %v4991, 0.0
      %v5056 = vmax.f32 %v4992, 0.0
      %v5057 = vmax.f32 %v4993, 0.0
      %v5058 = vmax.f32 %v4994, 0.0
      %v5059 = vmax.f32 %v4995, 0.0
      %v5060 = vsel %vm1533, %v4996, 0.0
      %5061 = vadd.xlane.f32.xlu0 %v5060
      %v5062 = vpop.xlane.xlu0 %5061
      %v5063 = vsel %vm1533, %v4997, 0.0
      %5064 = vadd.xlane.f32.xlu0 %v5063
      %v5065 = vpop.xlane.xlu0 %5064
      %v5066 = vsel %vm1533, %v4998, 0.0
      %5067 = vadd.xlane.f32.xlu0 %v5066
      %v5068 = vpop.xlane.xlu0 %5067
      %v5069 = vsel %vm1533, %v4999, 0.0
      %5070 = vadd.xlane.f32.xlu0 %v5069
      %v5071 = vpop.xlane.xlu0 %5070
      %v5072 = vsel %vm1533, %v5000, 0.0
      %5073 = vadd.xlane.f32.xlu0 %v5072
      %v5074 = vpop.xlane.xlu0 %5073
      %v5075 = vsel %vm1533, %v5001, 0.0
      %5076 = vadd.xlane.f32.xlu0 %v5075
      %v5077 = vpop.xlane.xlu0 %5076
      %v5078 = vsel %vm1533, %v5002, 0.0
      %5079 = vadd.xlane.f32.xlu0 %v5078
      %v5080 = vpop.xlane.xlu0 %5079
      %v5081 = vsel %vm1533, %v5003, 0.0
      %5082 = vadd.xlane.f32.xlu0 %v5081
      %v5083 = vpop.xlane.xlu0 %5082
      %v5084 = vsel %vm1533, %v5004, 0.0
      %5085 = vadd.xlane.f32.xlu0 %v5084
      %v5086 = vpop.xlane.xlu0 %5085
      %v5087 = vsel %vm1533, %v5005, 0.0
      %5088 = vadd.xlane.f32.xlu0 %v5087
      %v5089 = vpop.xlane.xlu0 %5088
      %v5090 = vsel %vm1533, %v5006, 0.0
      %5091 = vadd.xlane.f32.xlu0 %v5090
      %v5092 = vpop.xlane.xlu0 %5091
      %v5093 = vsel %vm1533, %v5007, 0.0
      %5094 = vadd.xlane.f32.xlu0 %v5093
      %v5095 = vpop.xlane.xlu0 %5094
      %v5096 = vsel %vm1533, %v5008, 0.0
      %5097 = vadd.xlane.f32.xlu0 %v5096
      %v5098 = vpop.xlane.xlu0 %5097
      %v5099 = vsel %vm1533, %v5009, 0.0
      %5100 = vadd.xlane.f32.xlu0 %v5099
      %v5101 = vpop.xlane.xlu0 %5100
      %v5102 = vsel %vm1533, %v5010, 0.0
      %5103 = vadd.xlane.f32.xlu0 %v5102
      %v5104 = vpop.xlane.xlu0 %5103
      %v5105 = vsel %vm1533, %v5011, 0.0
      %5106 = vadd.xlane.f32.xlu0 %v5105
      %v5107 = vpop.xlane.xlu0 %5106
      %v5108 = vsel %vm1533, %v5012, 0.0
      %5109 = vadd.xlane.f32.xlu0 %v5108
      %v5110 = vpop.xlane.xlu0 %5109
      %v5111 = vsel %vm1533, %v5013, 0.0
      %5112 = vadd.xlane.f32.xlu0 %v5111
      %v5113 = vpop.xlane.xlu0 %5112
      %v5114 = vsel %vm1533, %v5014, 0.0
      %5115 = vadd.xlane.f32.xlu0 %v5114
      %v5116 = vpop.xlane.xlu0 %5115
      %v5117 = vsel %vm1533, %v5015, 0.0
      %5118 = vadd.xlane.f32.xlu0 %v5117
      %v5119 = vpop.xlane.xlu0 %5118
      %v5120 = vsel %vm1533, %v5016, 0.0
      %5121 = vadd.xlane.f32.xlu0 %v5120
      %v5122 = vpop.xlane.xlu0 %5121
      %v5123 = vsel %vm1533, %v5017, 0.0
      %5124 = vadd.xlane.f32.xlu0 %v5123
      %v5125 = vpop.xlane.xlu0 %5124
      %v5126 = vsel %vm1533, %v5018, 0.0
      %5127 = vadd.xlane.f32.xlu0 %v5126
      %v5128 = vpop.xlane.xlu0 %5127
      %v5129 = vsel %vm1533, %v5019, 0.0
      %5130 = vadd.xlane.f32.xlu0 %v5129
      %v5131 = vpop.xlane.xlu0 %5130
      %v5132 = vsel %vm1533, %v5020, 0.0
      %5133 = vadd.xlane.f32.xlu0 %v5132
      %v5134 = vpop.xlane.xlu0 %5133
      %v5135 = vsel %vm1533, %v5021, 0.0
      %5136 = vadd.xlane.f32.xlu0 %v5135
      %v5137 = vpop.xlane.xlu0 %5136
      %v5138 = vsel %vm1533, %v5022, 0.0
      %5139 = vadd.xlane.f32.xlu0 %v5138
      %v5140 = vpop.xlane.xlu0 %5139
      %v5141 = vsel %vm1533, %v5023, 0.0
      %5142 = vadd.xlane.f32.xlu0 %v5141
      %v5143 = vpop.xlane.xlu0 %5142
      %v5144 = vsel %vm1533, %v5024, 0.0
      %5145 = vadd.xlane.f32.xlu0 %v5144
      %v5146 = vpop.xlane.xlu0 %5145
      %v5147 = vsel %vm1533, %v5025, 0.0
      %5148 = vadd.xlane.f32.xlu0 %v5147
      %v5149 = vpop.xlane.xlu0 %5148
      %v5150 = vsel %vm1533, %v5026, 0.0
      %5151 = vadd.xlane.f32.xlu0 %v5150
      %v5152 = vpop.xlane.xlu0 %5151
      %v5153 = vsel %vm1533, %v5027, 0.0
      %5154 = vadd.xlane.f32.xlu0 %v5153
      %v5155 = vpop.xlane.xlu0 %5154
      %v5156 = vsel %vm1533, %v5028, 0.0
      %5157 = vadd.xlane.f32.xlu0 %v5156
      %v5158 = vpop.xlane.xlu0 %5157
      %v5159 = vsel %vm1533, %v5029, 0.0
      %5160 = vadd.xlane.f32.xlu0 %v5159
      %v5161 = vpop.xlane.xlu0 %5160
      %v5162 = vsel %vm1533, %v5030, 0.0
      %5163 = vadd.xlane.f32.xlu0 %v5162
      %v5164 = vpop.xlane.xlu0 %5163
      %v5165 = vsel %vm1533, %v5031, 0.0
      %5166 = vadd.xlane.f32.xlu0 %v5165
      %v5167 = vpop.xlane.xlu0 %5166
      %v5168 = vsel %vm1533, %v5032, 0.0
      %5169 = vadd.xlane.f32.xlu0 %v5168
      %v5170 = vpop.xlane.xlu0 %5169
      %v5171 = vsel %vm1533, %v5033, 0.0
      %5172 = vadd.xlane.f32.xlu0 %v5171
      %v5173 = vpop.xlane.xlu0 %5172
      %v5174 = vsel %vm1533, %v5034, 0.0
      %5175 = vadd.xlane.f32.xlu0 %v5174
      %v5176 = vpop.xlane.xlu0 %5175
      %v5177 = vsel %vm1533, %v5035, 0.0
      %5178 = vadd.xlane.f32.xlu0 %v5177
      %v5179 = vpop.xlane.xlu0 %5178
      %v5180 = vsel %vm1533, %v5036, 0.0
      %5181 = vadd.xlane.f32.xlu0 %v5180
      %v5182 = vpop.xlane.xlu0 %5181
      %v5183 = vsel %vm1533, %v5037, 0.0
      %5184 = vadd.xlane.f32.xlu0 %v5183
      %v5185 = vpop.xlane.xlu0 %5184
      %v5186 = vsel %vm1533, %v5038, 0.0
      %5187 = vadd.xlane.f32.xlu0 %v5186
      %v5188 = vpop.xlane.xlu0 %5187
      %v5189 = vsel %vm1533, %v5039, 0.0
      %5190 = vadd.xlane.f32.xlu0 %v5189
      %v5191 = vpop.xlane.xlu0 %5190
      %v5192 = vsel %vm1533, %v5040, 0.0
      %5193 = vadd.xlane.f32.xlu0 %v5192
      %v5194 = vpop.xlane.xlu0 %5193
      %v5195 = vsel %vm1533, %v5041, 0.0
      %5196 = vadd.xlane.f32.xlu0 %v5195
      %v5197 = vpop.xlane.xlu0 %5196
      %v5198 = vsel %vm1533, %v5042, 0.0
      %5199 = vadd.xlane.f32.xlu0 %v5198
      %v5200 = vpop.xlane.xlu0 %5199
      %v5201 = vsel %vm1533, %v5043, 0.0
      %5202 = vadd.xlane.f32.xlu0 %v5201
      %v5203 = vpop.xlane.xlu0 %5202
      %v5204 = vsel %vm1533, %v5044, 0.0
      %5205 = vadd.xlane.f32.xlu0 %v5204
      %v5206 = vpop.xlane.xlu0 %5205
      %v5207 = vsel %vm1533, %v5045, 0.0
      %5208 = vadd.xlane.f32.xlu0 %v5207
      %v5209 = vpop.xlane.xlu0 %5208
      %v5210 = vsel %vm1533, %v5046, 0.0
      %5211 = vadd.xlane.f32.xlu0 %v5210
      %v5212 = vpop.xlane.xlu0 %5211
      %v5213 = vsel %vm1533, %v5047, 0.0
      %5214 = vadd.xlane.f32.xlu0 %v5213
      %v5215 = vpop.xlane.xlu0 %5214
      %v5216 = vsel %vm1533, %v5048, 0.0
      %5217 = vadd.xlane.f32.xlu0 %v5216
      %v5218 = vpop.xlane.xlu0 %5217
      %v5219 = vsel %vm1533, %v5049, 0.0
      %5220 = vadd.xlane.f32.xlu0 %v5219
      %v5221 = vpop.xlane.xlu0 %5220
      %v5222 = vsel %vm1533, %v5050, 0.0
      %5223 = vadd.xlane.f32.xlu0 %v5222
      %v5224 = vpop.xlane.xlu0 %5223
      %v5225 = vsel %vm1533, %v5051, 0.0
      %5226 = vadd.xlane.f32.xlu0 %v5225
      %v5227 = vpop.xlane.xlu0 %5226
      %v5228 = vsel %vm1533, %v5052, 0.0
      %5229 = vadd.xlane.f32.xlu0 %v5228
      %v5230 = vpop.xlane.xlu0 %5229
      %v5231 = vsel %vm1533, %v5053, 0.0
      %5232 = vadd.xlane.f32.xlu0 %v5231
      %v5233 = vpop.xlane.xlu0 %5232
      %v5234 = vsel %vm1533, %v5054, 0.0
      %5235 = vadd.xlane.f32.xlu0 %v5234
      %v5236 = vpop.xlane.xlu0 %5235
      %v5237 = vsel %vm1533, %v5055, 0.0
      %5238 = vadd.xlane.f32.xlu0 %v5237
      %v5239 = vpop.xlane.xlu0 %5238
      %v5240 = vsel %vm1533, %v5056, 0.0
      %5241 = vadd.xlane.f32.xlu0 %v5240
      %v5242 = vpop.xlane.xlu0 %5241
      %v5243 = vsel %vm1533, %v5057, 0.0
      %5244 = vadd.xlane.f32.xlu0 %v5243
      %v5245 = vpop.xlane.xlu0 %5244
      %v5246 = vsel %vm1533, %v5058, 0.0
      %5247 = vadd.xlane.f32.xlu0 %v5246
      %v5248 = vpop.xlane.xlu0 %5247
      %v5249 = vsel %vm1533, %v5059, 0.0
      %5250 = vadd.xlane.f32.xlu0 %v5249
      %v5251 = vpop.xlane.xlu0 %5250
      %v5252 = vrcp.pop 8.0
      %v5253 = vmul.f32 %v5062, %v5252
      %v5254 = vmul.f32 %v5065, %v5252
      %v5255 = vmul.f32 %v5068, %v5252
      %v5256 = vmul.f32 %v5071, %v5252
      %v5257 = vmul.f32 %v5074, %v5252
      %v5258 = vmul.f32 %v5077, %v5252
      %v5259 = vmul.f32 %v5080, %v5252
      %v5260 = vmul.f32 %v5083, %v5252
      %v5261 = vmul.f32 %v5086, %v5252
      %v5262 = vmul.f32 %v5089, %v5252
      %v5263 = vmul.f32 %v5092, %v5252
      %v5264 = vmul.f32 %v5095, %v5252
      %v5265 = vmul.f32 %v5098, %v5252
      %v5266 = vmul.f32 %v5101, %v5252
      %v5267 = vmul.f32 %v5104, %v5252
      %v5268 = vmul.f32 %v5107, %v5252
      %v5269 = vmul.f32 %v5110, %v5252
      %v5270 = vmul.f32 %v5113, %v5252
      %v5271 = vmul.f32 %v5116, %v5252
      %v5272 = vmul.f32 %v5119, %v5252
      %v5273 = vmul.f32 %v5122, %v5252
      %v5274 = vmul.f32 %v5125, %v5252
      %v5275 = vmul.f32 %v5128, %v5252
      %v5276 = vmul.f32 %v5131, %v5252
      %v5277 = vmul.f32 %v5134, %v5252
      %v5278 = vmul.f32 %v5137, %v5252
      %v5279 = vmul.f32 %v5140, %v5252
      %v5280 = vmul.f32 %v5143, %v5252
      %v5281 = vmul.f32 %v5146, %v5252
      %v5282 = vmul.f32 %v5149, %v5252
      %v5283 = vmul.f32 %v5152, %v5252
      %v5284 = vmul.f32 %v5155, %v5252
      %v5285 = vmul.f32 %v5158, %v5252
      %v5286 = vmul.f32 %v5161, %v5252
      %v5287 = vmul.f32 %v5164, %v5252
      %v5288 = vmul.f32 %v5167, %v5252
      %v5289 = vmul.f32 %v5170, %v5252
      %v5290 = vmul.f32 %v5173, %v5252
      %v5291 = vmul.f32 %v5176, %v5252
      %v5292 = vmul.f32 %v5179, %v5252
      %v5293 = vmul.f32 %v5182, %v5252
      %v5294 = vmul.f32 %v5185, %v5252
      %v5295 = vmul.f32 %v5188, %v5252
      %v5296 = vmul.f32 %v5191, %v5252
      %v5297 = vmul.f32 %v5194, %v5252
      %v5298 = vmul.f32 %v5197, %v5252
      %v5299 = vmul.f32 %v5200, %v5252
      %v5300 = vmul.f32 %v5203, %v5252
      %v5301 = vmul.f32 %v5206, %v5252
      %v5302 = vmul.f32 %v5209, %v5252
      %v5303 = vmul.f32 %v5212, %v5252
      %v5304 = vmul.f32 %v5215, %v5252
      %v5305 = vmul.f32 %v5218, %v5252
      %v5306 = vmul.f32 %v5221, %v5252
      %v5307 = vmul.f32 %v5224, %v5252
      %v5308 = vmul.f32 %v5227, %v5252
      %v5309 = vmul.f32 %v5230, %v5252
      %v5310 = vmul.f32 %v5233, %v5252
      %v5311 = vmul.f32 %v5236, %v5252
      %v5312 = vmul.f32 %v5239, %v5252
      %v5313 = vmul.f32 %v5242, %v5252
      %v5314 = vmul.f32 %v5245, %v5252
      %v5315 = vmul.f32 %v5248, %v5252
      %v5316 = vmul.f32 %v5251, %v5252
      %v5317 = vld [vmem:[%s5] sm:$0xff]
      %v5318 = vld [vmem:[%s5 + $0x8] sm:$0xff]
      %v5319 = vld [vmem:[%s5 + $0x10] sm:$0xff]
      %v5320 = vld [vmem:[%s5 + $0x18] sm:$0xff]
      %v5321 = vld [vmem:[%s5 + $0x20] sm:$0xff]
      %v5322 = vld [vmem:[%s5 + $0x28] sm:$0xff]
      %v5323 = vld [vmem:[%s5 + $0x30] sm:$0xff]
      %v5324 = vld [vmem:[%s5 + $0x38] sm:$0xff]
      %v5325 = vld [vmem:[%s5 + $0x40] sm:$0xff]
      %v5326 = vld [vmem:[%s5 + $0x48] sm:$0xff]
      %v5327 = vld [vmem:[%s5 + $0x50] sm:$0xff]
      %v5328 = vld [vmem:[%s5 + $0x58] sm:$0xff]
      %v5329 = vld [vmem:[%s5 + $0x60] sm:$0xff]
      %v5330 = vld [vmem:[%s5 + $0x68] sm:$0xff]
      %v5331 = vld [vmem:[%s5 + $0x70] sm:$0xff]
      %v5332 = vld [vmem:[%s5 + $0x78] sm:$0xff]
      %v5333 = vld [vmem:[%s5 + $0x80] sm:$0xff]
      %v5334 = vld [vmem:[%s5 + $0x88] sm:$0xff]
      %v5335 = vld [vmem:[%s5 + $0x90] sm:$0xff]
      %v5336 = vld [vmem:[%s5 + $0x98] sm:$0xff]
      %v5337 = vld [vmem:[%s5 + $0xa0] sm:$0xff]
      %v5338 = vld [vmem:[%s5 + $0xa8] sm:$0xff]
      %v5339 = vld [vmem:[%s5 + $0xb0] sm:$0xff]
      %v5340 = vld [vmem:[%s5 + $0xb8] sm:$0xff]
      %v5341 = vld [vmem:[%s5 + $0xc0] sm:$0xff]
      %v5342 = vld [vmem:[%s5 + $0xc8] sm:$0xff]
      %v5343 = vld [vmem:[%s5 + $0xd0] sm:$0xff]
      %v5344 = vld [vmem:[%s5 + $0xd8] sm:$0xff]
      %v5345 = vld [vmem:[%s5 + $0xe0] sm:$0xff]
      %v5346 = vld [vmem:[%s5 + $0xe8] sm:$0xff]
      %v5347 = vld [vmem:[%s5 + $0xf0] sm:$0xff]
      %v5348 = vld [vmem:[%s5 + $0xf8] sm:$0xff]
      %v5349 = vld [vmem:[%s5 + $0x100] sm:$0xff]
      %v5350 = vld [vmem:[%s5 + $0x108] sm:$0xff]
      %v5351 = vld [vmem:[%s5 + $0x110] sm:$0xff]
      %v5352 = vld [vmem:[%s5 + $0x118] sm:$0xff]
      %v5353 = vld [vmem:[%s5 + $0x120] sm:$0xff]
      %v5354 = vld [vmem:[%s5 + $0x128] sm:$0xff]
      %v5355 = vld [vmem:[%s5 + $0x130] sm:$0xff]
      %v5356 = vld [vmem:[%s5 + $0x138] sm:$0xff]
      %v5357 = vld [vmem:[%s5 + $0x140] sm:$0xff]
      %v5358 = vld [vmem:[%s5 + $0x148] sm:$0xff]
      %v5359 = vld [vmem:[%s5 + $0x150] sm:$0xff]
      %v5360 = vld [vmem:[%s5 + $0x158] sm:$0xff]
      %v5361 = vld [vmem:[%s5 + $0x160] sm:$0xff]
      %v5362 = vld [vmem:[%s5 + $0x168] sm:$0xff]
      %v5363 = vld [vmem:[%s5 + $0x170] sm:$0xff]
      %v5364 = vld [vmem:[%s5 + $0x178] sm:$0xff]
      %v5365 = vld [vmem:[%s5 + $0x180] sm:$0xff]
      %v5366 = vld [vmem:[%s5 + $0x188] sm:$0xff]
      %v5367 = vld [vmem:[%s5 + $0x190] sm:$0xff]
      %v5368 = vld [vmem:[%s5 + $0x198] sm:$0xff]
      %v5369 = vld [vmem:[%s5 + $0x1a0] sm:$0xff]
      %v5370 = vld [vmem:[%s5 + $0x1a8] sm:$0xff]
      %v5371 = vld [vmem:[%s5 + $0x1b0] sm:$0xff]
      %v5372 = vld [vmem:[%s5 + $0x1b8] sm:$0xff]
      %v5373 = vld [vmem:[%s5 + $0x1c0] sm:$0xff]
      %v5374 = vld [vmem:[%s5 + $0x1c8] sm:$0xff]
      %v5375 = vld [vmem:[%s5 + $0x1d0] sm:$0xff]
      %v5376 = vld [vmem:[%s5 + $0x1d8] sm:$0xff]
      %v5377 = vld [vmem:[%s5 + $0x1e0] sm:$0xff]
      %v5378 = vld [vmem:[%s5 + $0x1e8] sm:$0xff]
      %v5379 = vld [vmem:[%s5 + $0x1f0] sm:$0xff]
      %v5380 = vld [vmem:[%s5 + $0x1f8] sm:$0xff]
      %v5381 = vld [vmem:[%s5 + $0x200] sm:$0xff]
      %v5382 = vld [vmem:[%s5 + $0x208] sm:$0xff]
      %v5383 = vld [vmem:[%s5 + $0x210] sm:$0xff]
      %v5384 = vld [vmem:[%s5 + $0x218] sm:$0xff]
      %v5385 = vld [vmem:[%s5 + $0x220] sm:$0xff]
      %v5386 = vld [vmem:[%s5 + $0x228] sm:$0xff]
      %v5387 = vld [vmem:[%s5 + $0x230] sm:$0xff]
      %v5388 = vld [vmem:[%s5 + $0x238] sm:$0xff]
      %v5389 = vld [vmem:[%s5 + $0x240] sm:$0xff]
      %v5390 = vld [vmem:[%s5 + $0x248] sm:$0xff]
      %v5391 = vld [vmem:[%s5 + $0x250] sm:$0xff]
      %v5392 = vld [vmem:[%s5 + $0x258] sm:$0xff]
      %v5393 = vld [vmem:[%s5 + $0x260] sm:$0xff]
      %v5394 = vld [vmem:[%s5 + $0x268] sm:$0xff]
      %v5395 = vld [vmem:[%s5 + $0x270] sm:$0xff]
      %v5396 = vld [vmem:[%s5 + $0x278] sm:$0xff]
      %v5397 = vld [vmem:[%s5 + $0x280] sm:$0xff]
      %v5398 = vld [vmem:[%s5 + $0x288] sm:$0xff]
      %v5399 = vld [vmem:[%s5 + $0x290] sm:$0xff]
      %v5400 = vld [vmem:[%s5 + $0x298] sm:$0xff]
      %v5401 = vld [vmem:[%s5 + $0x2a0] sm:$0xff]
      %v5402 = vld [vmem:[%s5 + $0x2a8] sm:$0xff]
      %v5403 = vld [vmem:[%s5 + $0x2b0] sm:$0xff]
      %v5404 = vld [vmem:[%s5 + $0x2b8] sm:$0xff]
      %v5405 = vld [vmem:[%s5 + $0x2c0] sm:$0xff]
      %v5406 = vld [vmem:[%s5 + $0x2c8] sm:$0xff]
      %v5407 = vld [vmem:[%s5 + $0x2d0] sm:$0xff]
      %v5408 = vld [vmem:[%s5 + $0x2d8] sm:$0xff]
      %v5409 = vld [vmem:[%s5 + $0x2e0] sm:$0xff]
      %v5410 = vld [vmem:[%s5 + $0x2e8] sm:$0xff]
      %v5411 = vld [vmem:[%s5 + $0x2f0] sm:$0xff]
      %v5412 = vld [vmem:[%s5 + $0x2f8] sm:$0xff]
      %v5413 = vld [vmem:[%s5 + $0x300] sm:$0xff]
      %v5414 = vld [vmem:[%s5 + $0x308] sm:$0xff]
      %v5415 = vld [vmem:[%s5 + $0x310] sm:$0xff]
      %v5416 = vld [vmem:[%s5 + $0x318] sm:$0xff]
      %v5417 = vld [vmem:[%s5 + $0x320] sm:$0xff]
      %v5418 = vld [vmem:[%s5 + $0x328] sm:$0xff]
      %v5419 = vld [vmem:[%s5 + $0x330] sm:$0xff]
      %v5420 = vld [vmem:[%s5 + $0x338] sm:$0xff]
      %v5421 = vld [vmem:[%s5 + $0x340] sm:$0xff]
      %v5422 = vld [vmem:[%s5 + $0x348] sm:$0xff]
      %v5423 = vld [vmem:[%s5 + $0x350] sm:$0xff]
      %v5424 = vld [vmem:[%s5 + $0x358] sm:$0xff]
      %v5425 = vld [vmem:[%s5 + $0x360] sm:$0xff]
      %v5426 = vld [vmem:[%s5 + $0x368] sm:$0xff]
      %v5427 = vld [vmem:[%s5 + $0x370] sm:$0xff]
      %v5428 = vld [vmem:[%s5 + $0x378] sm:$0xff]
      %v5429 = vld [vmem:[%s5 + $0x380] sm:$0xff]
      %v5430 = vld [vmem:[%s5 + $0x388] sm:$0xff]
      %v5431 = vld [vmem:[%s5 + $0x390] sm:$0xff]
      %v5432 = vld [vmem:[%s5 + $0x398] sm:$0xff]
      %v5433 = vld [vmem:[%s5 + $0x3a0] sm:$0xff]
      %v5434 = vld [vmem:[%s5 + $0x3a8] sm:$0xff]
      %v5435 = vld [vmem:[%s5 + $0x3b0] sm:$0xff]
      %v5436 = vld [vmem:[%s5 + $0x3b8] sm:$0xff]
      %v5437 = vld [vmem:[%s5 + $0x3c0] sm:$0xff]
      %v5438 = vld [vmem:[%s5 + $0x3c8] sm:$0xff]
      %v5439 = vld [vmem:[%s5 + $0x3d0] sm:$0xff]
      %v5440 = vld [vmem:[%s5 + $0x3d8] sm:$0xff]
      %v5441 = vld [vmem:[%s5 + $0x3e0] sm:$0xff]
      %v5442 = vld [vmem:[%s5 + $0x3e8] sm:$0xff]
      %v5443 = vld [vmem:[%s5 + $0x3f0] sm:$0xff]
      %v5444 = vld [vmem:[%s5 + $0x3f8] sm:$0xff]
      %v5445 = vld [vmem:[%s6] sm:$0xff]
      %v5446 = vld [vmem:[%s6 + $0x8] sm:$0xff]
      %v5447 = vld [vmem:[%s6 + $0x10] sm:$0xff]
      %v5448 = vld [vmem:[%s6 + $0x18] sm:$0xff]
      %v5449 = vld [vmem:[%s6 + $0x20] sm:$0xff]
      %v5450 = vld [vmem:[%s6 + $0x28] sm:$0xff]
      %v5451 = vld [vmem:[%s6 + $0x30] sm:$0xff]
      %v5452 = vld [vmem:[%s6 + $0x38] sm:$0xff]
      %v5453 = vld [vmem:[%s6 + $0x40] sm:$0xff]
      %v5454 = vld [vmem:[%s6 + $0x48] sm:$0xff]
      %v5455 = vld [vmem:[%s6 + $0x50] sm:$0xff]
      %v5456 = vld [vmem:[%s6 + $0x58] sm:$0xff]
      %v5457 = vld [vmem:[%s6 + $0x60] sm:$0xff]
      %v5458 = vld [vmem:[%s6 + $0x68] sm:$0xff]
      %v5459 = vld [vmem:[%s6 + $0x70] sm:$0xff]
      %v5460 = vld [vmem:[%s6 + $0x78] sm:$0xff]
      %v5461 = vld [vmem:[%s6 + $0x80] sm:$0xff]
      %v5462 = vld [vmem:[%s6 + $0x88] sm:$0xff]
      %v5463 = vld [vmem:[%s6 + $0x90] sm:$0xff]
      %v5464 = vld [vmem:[%s6 + $0x98] sm:$0xff]
      %v5465 = vld [vmem:[%s6 + $0xa0] sm:$0xff]
      %v5466 = vld [vmem:[%s6 + $0xa8] sm:$0xff]
      %v5467 = vld [vmem:[%s6 + $0xb0] sm:$0xff]
      %v5468 = vld [vmem:[%s6 + $0xb8] sm:$0xff]
      %v5469 = vld [vmem:[%s6 + $0xc0] sm:$0xff]
      %v5470 = vld [vmem:[%s6 + $0xc8] sm:$0xff]
      %v5471 = vld [vmem:[%s6 + $0xd0] sm:$0xff]
      %v5472 = vld [vmem:[%s6 + $0xd8] sm:$0xff]
      %v5473 = vld [vmem:[%s6 + $0xe0] sm:$0xff]
      %v5474 = vld [vmem:[%s6 + $0xe8] sm:$0xff]
      %v5475 = vld [vmem:[%s6 + $0xf0] sm:$0xff]
      %v5476 = vld [vmem:[%s6 + $0xf8] sm:$0xff]
      %5477 = vmatprep.subr.mxu0 0.0
      %5478 = vmatpush1.msra.mxu0 %v5268
      %5479 = vmatprep.subr.mxu0 0.0
      %5480 = vmatpush1.msra.mxu0 %v5267
      %5481 = vmatprep.subr.mxu0 0.0
      %5482 = vmatpush1.msra.mxu0 %v5266
      %5483 = vmatprep.subr.mxu0 0.0
      %5484 = vmatpush1.msra.mxu0 %v5265
      %5485 = vmatprep.subr.mxu0 0.0
      %5486 = vmatpush1.msra.mxu0 %v5264
      %5487 = vmatprep.subr.mxu0 0.0
      %5488 = vmatpush1.msra.mxu0 %v5263
      %5489 = vmatprep.subr.mxu0 0.0
      %5490 = vmatpush1.msra.mxu0 %v5262
      %5491 = vmatprep.subr.mxu0 0.0
      %5492 = vmatpush1.msra.mxu0 %v5261
      %5493 = vmatprep.subr.mxu0 0.0
      %5494 = vmatpush1.msra.mxu0 %v5260
      %5495 = vmatprep.subr.mxu0 0.0
      %5496 = vmatpush1.msra.mxu0 %v5259
      %5497 = vmatprep.subr.mxu0 0.0
      %5498 = vmatpush1.msra.mxu0 %v5258
      %5499 = vmatprep.subr.mxu0 0.0
      %5500 = vmatpush1.msra.mxu0 %v5257
      %5501 = vmatprep.subr.mxu0 0.0
      %5502 = vmatpush1.msra.mxu0 %v5256
      %5503 = vmatprep.subr.mxu0 0.0
      %5504 = vmatpush1.msra.mxu0 %v5255
      %5505 = vmatprep.subr.mxu0 0.0
      %5506 = vmatpush1.msra.mxu0 %v5254
      %5507 = vmatprep.subr.mxu0 0.0
      %5508 = vmatpush1.msra.mxu0 %v5253
      %5509 = vmatprep.subr.mxu0 0.0
      %5510 = vmatpush2.msra.mxu0 %v5284
      %5511 = vmatprep.subr.mxu0 0.0
      %5512 = vmatpush2.msra.mxu0 %v5283
      %5513 = vmatprep.subr.mxu0 0.0
      %5514 = vmatpush2.msra.mxu0 %v5282
      %5515 = vmatprep.subr.mxu0 0.0
      %5516 = vmatpush2.msra.mxu0 %v5281
      %5517 = vmatprep.subr.mxu0 0.0
      %5518 = vmatpush2.msra.mxu0 %v5280
      %5519 = vmatprep.subr.mxu0 0.0
      %5520 = vmatpush2.msra.mxu0 %v5279
      %5521 = vmatprep.subr.mxu0 0.0
      %5522 = vmatpush2.msra.mxu0 %v5278
      %5523 = vmatprep.subr.mxu0 0.0
      %5524 = vmatpush2.msra.mxu0 %v5277
      %5525 = vmatprep.subr.mxu0 0.0
      %5526 = vmatpush2.msra.mxu0 %v5276
      %5527 = vmatprep.subr.mxu0 0.0
      %5528 = vmatpush2.msra.mxu0 %v5275
      %5529 = vmatprep.subr.mxu0 0.0
      %5530 = vmatpush2.msra.mxu0 %v5274
      %5531 = vmatprep.subr.mxu0 0.0
      %5532 = vmatpush2.msra.mxu0 %v5273
      %5533 = vmatprep.subr.mxu0 0.0
      %5534 = vmatpush2.msra.mxu0 %v5272
      %5535 = vmatprep.subr.mxu0 0.0
      %5536 = vmatpush2.msra.mxu0 %v5271
      %5537 = vmatprep.subr.mxu0 0.0
      %5538 = vmatpush2.msra.mxu0 %v5270
      %5539 = vmatprep.subr.mxu0 0.0
      %5540 = vmatpush2.msra.mxu0 %v5269
      %5541 = vmatprep.mubr.f32.mxu0 %v5318
      %5542 = vmatmul.mubr.f32.gmra.mxu0 %v5317
      %v5543 = vpop.f32.mrf.mxu0
      %v5544 = vadd.f32 %v5445, %v5543
      %v5545 = vpop.f32.mrf.mxu0
      %5546 = vmatprep.mubr.f32.mxu0 %v5322
      %5547 = vmatmul.mubr.f32.gmra.mxu0 %v5321
      %v5548 = vpop.f32.mrf.mxu0
      %v5549 = vadd.f32 %v5446, %v5548
      %v5550 = vpop.f32.mrf.mxu0
      %5551 = vmatprep.mubr.f32.mxu0 %v5326
      %5552 = vmatmul.mubr.f32.gmra.mxu0 %v5325
      %v5553 = vpop.f32.mrf.mxu0
      %v5554 = vadd.f32 %v5447, %v5553
      %v5555 = vpop.f32.mrf.mxu0
      %5556 = vmatprep.mubr.f32.mxu0 %v5330
      %5557 = vmatmul.mubr.f32.gmra.mxu0 %v5329
      %v5558 = vpop.f32.mrf.mxu0
      %v5559 = vadd.f32 %v5448, %v5558
      %v5560 = vpop.f32.mrf.mxu0
      %5561 = vmatprep.mubr.f32.mxu0 %v5334
      %5562 = vmatmul.mubr.f32.gmra.mxu0 %v5333
      %v5563 = vpop.f32.mrf.mxu0
      %v5564 = vadd.f32 %v5449, %v5563
      %v5565 = vpop.f32.mrf.mxu0
      %5566 = vmatprep.mubr.f32.mxu0 %v5338
      %5567 = vmatmul.mubr.f32.gmra.mxu0 %v5337
      %v5568 = vpop.f32.mrf.mxu0
      %v5569 = vadd.f32 %v5450, %v5568
      %v5570 = vpop.f32.mrf.mxu0
      %5571 = vmatprep.mubr.f32.mxu0 %v5342
      %5572 = vmatmul.mubr.f32.gmra.mxu0 %v5341
      %v5573 = vpop.f32.mrf.mxu0
      %v5574 = vadd.f32 %v5451, %v5573
      %v5575 = vpop.f32.mrf.mxu0
      %5576 = vmatprep.mubr.f32.mxu0 %v5346
      %5577 = vmatmul.mubr.f32.gmra.mxu0 %v5345
      %v5578 = vpop.f32.mrf.mxu0
      %v5579 = vadd.f32 %v5452, %v5578
      %v5580 = vpop.f32.mrf.mxu0
      %5581 = vmatprep.mubr.f32.mxu0 %v5350
      %5582 = vmatmul.mubr.f32.gmra.mxu0 %v5349
      %v5583 = vpop.f32.mrf.mxu0
      %v5584 = vadd.f32 %v5453, %v5583
      %v5585 = vpop.f32.mrf.mxu0
      %5586 = vmatprep.mubr.f32.mxu0 %v5354
      %5587 = vmatmul.mubr.f32.gmra.mxu0 %v5353
      %v5588 = vpop.f32.mrf.mxu0
      %v5589 = vadd.f32 %v5454, %v5588
      %v5590 = vpop.f32.mrf.mxu0
      %5591 = vmatprep.mubr.f32.mxu0 %v5358
      %5592 = vmatmul.mubr.f32.gmra.mxu0 %v5357
      %v5593 = vpop.f32.mrf.mxu0
      %v5594 = vadd.f32 %v5455, %v5593
      %v5595 = vpop.f32.mrf.mxu0
      %5596 = vmatprep.mubr.f32.mxu0 %v5362
      %5597 = vmatmul.mubr.f32.gmra.mxu0 %v5361
      %v5598 = vpop.f32.mrf.mxu0
      %v5599 = vadd.f32 %v5456, %v5598
      %v5600 = vpop.f32.mrf.mxu0
      %5601 = vmatprep.mubr.f32.mxu0 %v5366
      %5602 = vmatmul.mubr.f32.gmra.mxu0 %v5365
      %v5603 = vpop.f32.mrf.mxu0
      %v5604 = vadd.f32 %v5457, %v5603
      %v5605 = vpop.f32.mrf.mxu0
      %5606 = vmatprep.mubr.f32.mxu0 %v5370
      %5607 = vmatmul.mubr.f32.gmra.mxu0 %v5369
      %v5608 = vpop.f32.mrf.mxu0
      %v5609 = vadd.f32 %v5458, %v5608
      %v5610 = vpop.f32.mrf.mxu0
      %5611 = vmatprep.mubr.f32.mxu0 %v5374
      %5612 = vmatmul.mubr.f32.gmra.mxu0 %v5373
      %v5613 = vpop.f32.mrf.mxu0
      %v5614 = vadd.f32 %v5459, %v5613
      %v5615 = vpop.f32.mrf.mxu0
      %5616 = vmatprep.mubr.f32.mxu0 %v5378
      %5617 = vmatmul.mubr.f32.gmra.mxu0 %v5377
      %v5618 = vpop.f32.mrf.mxu0
      %v5619 = vadd.f32 %v5460, %v5618
      %v5620 = vpop.f32.mrf.mxu0
      %5621 = vmatprep.mubr.f32.mxu0 %v5382
      %5622 = vmatmul.mubr.f32.gmra.mxu0 %v5381
      %v5623 = vpop.f32.mrf.mxu0
      %v5624 = vadd.f32 %v5461, %v5623
      %v5625 = vpop.f32.mrf.mxu0
      %5626 = vmatprep.mubr.f32.mxu0 %v5386
      %5627 = vmatmul.mubr.f32.gmra.mxu0 %v5385
      %v5628 = vpop.f32.mrf.mxu0
      %v5629 = vadd.f32 %v5462, %v5628
      %v5630 = vpop.f32.mrf.mxu0
      %5631 = vmatprep.mubr.f32.mxu0 %v5390
      %5632 = vmatmul.mubr.f32.gmra.mxu0 %v5389
      %v5633 = vpop.f32.mrf.mxu0
      %v5634 = vadd.f32 %v5463, %v5633
      %v5635 = vpop.f32.mrf.mxu0
      %5636 = vmatprep.mubr.f32.mxu0 %v5394
      %5637 = vmatmul.mubr.f32.gmra.mxu0 %v5393
      %v5638 = vpop.f32.mrf.mxu0
      %v5639 = vadd.f32 %v5464, %v5638
      %v5640 = vpop.f32.mrf.mxu0
      %5641 = vmatprep.mubr.f32.mxu0 %v5398
      %5642 = vmatmul.mubr.f32.gmra.mxu0 %v5397
      %v5643 = vpop.f32.mrf.mxu0
      %v5644 = vadd.f32 %v5465, %v5643
      %v5645 = vpop.f32.mrf.mxu0
      %5646 = vmatprep.mubr.f32.mxu0 %v5402
      %5647 = vmatmul.mubr.f32.gmra.mxu0 %v5401
      %v5648 = vpop.f32.mrf.mxu0
      %v5649 = vadd.f32 %v5466, %v5648
      %v5650 = vpop.f32.mrf.mxu0
      %5651 = vmatprep.mubr.f32.mxu0 %v5406
      %5652 = vmatmul.mubr.f32.gmra.mxu0 %v5405
      %v5653 = vpop.f32.mrf.mxu0
      %v5654 = vadd.f32 %v5467, %v5653
      %v5655 = vpop.f32.mrf.mxu0
      %5656 = vmatprep.mubr.f32.mxu0 %v5410
      %5657 = vmatmul.mubr.f32.gmra.mxu0 %v5409
      %v5658 = vpop.f32.mrf.mxu0
      %v5659 = vadd.f32 %v5468, %v5658
      %v5660 = vpop.f32.mrf.mxu0
      %5661 = vmatprep.mubr.f32.mxu0 %v5414
      %5662 = vmatmul.mubr.f32.gmra.mxu0 %v5413
      %v5663 = vpop.f32.mrf.mxu0
      %v5664 = vadd.f32 %v5469, %v5663
      %v5665 = vpop.f32.mrf.mxu0
      %5666 = vmatprep.mubr.f32.mxu0 %v5418
      %5667 = vmatmul.mubr.f32.gmra.mxu0 %v5417
      %v5668 = vpop.f32.mrf.mxu0
      %v5669 = vadd.f32 %v5470, %v5668
      %v5670 = vpop.f32.mrf.mxu0
      %5671 = vmatprep.mubr.f32.mxu0 %v5422
      %5672 = vmatmul.mubr.f32.gmra.mxu0 %v5421
      %v5673 = vpop.f32.mrf.mxu0
      %v5674 = vadd.f32 %v5471, %v5673
      %v5675 = vpop.f32.mrf.mxu0
      %5676 = vmatprep.mubr.f32.mxu0 %v5426
      %5677 = vmatmul.mubr.f32.gmra.mxu0 %v5425
      %v5678 = vpop.f32.mrf.mxu0
      %v5679 = vadd.f32 %v5472, %v5678
      %v5680 = vpop.f32.mrf.mxu0
      %5681 = vmatprep.mubr.f32.mxu0 %v5430
      %5682 = vmatmul.mubr.f32.gmra.mxu0 %v5429
      %v5683 = vpop.f32.mrf.mxu0
      %v5684 = vadd.f32 %v5473, %v5683
      %v5685 = vpop.f32.mrf.mxu0
      %5686 = vmatprep.mubr.f32.mxu0 %v5434
      %5687 = vmatmul.mubr.f32.gmra.mxu0 %v5433
      %v5688 = vpop.f32.mrf.mxu0
      %v5689 = vadd.f32 %v5474, %v5688
      %v5690 = vpop.f32.mrf.mxu0
      %5691 = vmatprep.mubr.f32.mxu0 %v5438
      %5692 = vmatmul.mubr.f32.gmra.mxu0 %v5437
      %v5693 = vpop.f32.mrf.mxu0
      %v5694 = vadd.f32 %v5475, %v5693
      %v5695 = vpop.f32.mrf.mxu0
      %5696 = vmatprep.mubr.f32.mxu0 %v5442
      %5697 = vmatmul.mubr.f32.gmra.mxu0 %v5441
      %v5698 = vpop.f32.mrf.mxu0
      %v5699 = vadd.f32 %v5476, %v5698
      %v5700 = vpop.f32.mrf.mxu0
      %5701 = vdwg.mxu0
      %5702 = vmatprep.subr.mxu0 0.0
      %5703 = vmatpush1.msra.mxu0 %v5300
      %5704 = vmatprep.subr.mxu0 0.0
      %5705 = vmatpush1.msra.mxu0 %v5299
      %5706 = vmatprep.subr.mxu0 0.0
      %5707 = vmatpush1.msra.mxu0 %v5298
      %5708 = vmatprep.subr.mxu0 0.0
      %5709 = vmatpush1.msra.mxu0 %v5297
      %5710 = vmatprep.subr.mxu0 0.0
      %5711 = vmatpush1.msra.mxu0 %v5296
      %5712 = vmatprep.subr.mxu0 0.0
      %5713 = vmatpush1.msra.mxu0 %v5295
      %5714 = vmatprep.subr.mxu0 0.0
      %5715 = vmatpush1.msra.mxu0 %v5294
      %5716 = vmatprep.subr.mxu0 0.0
      %5717 = vmatpush1.msra.mxu0 %v5293
      %5718 = vmatprep.subr.mxu0 0.0
      %5719 = vmatpush1.msra.mxu0 %v5292
      %5720 = vmatprep.subr.mxu0 0.0
      %5721 = vmatpush1.msra.mxu0 %v5291
      %5722 = vmatprep.subr.mxu0 0.0
      %5723 = vmatpush1.msra.mxu0 %v5290
      %5724 = vmatprep.subr.mxu0 0.0
      %5725 = vmatpush1.msra.mxu0 %v5289
      %5726 = vmatprep.subr.mxu0 0.0
      %5727 = vmatpush1.msra.mxu0 %v5288
      %5728 = vmatprep.subr.mxu0 0.0
      %5729 = vmatpush1.msra.mxu0 %v5287
      %5730 = vmatprep.subr.mxu0 0.0
      %5731 = vmatpush1.msra.mxu0 %v5286
      %5732 = vmatprep.subr.mxu0 0.0
      %5733 = vmatpush1.msra.mxu0 %v5285
      %5734 = vmatprep.subr.mxu0 0.0
      %5735 = vmatpush2.msra.mxu0 %v5316
      %5736 = vmatprep.subr.mxu0 0.0
      %5737 = vmatpush2.msra.mxu0 %v5315
      %5738 = vmatprep.subr.mxu0 0.0
      %5739 = vmatpush2.msra.mxu0 %v5314
      %5740 = vmatprep.subr.mxu0 0.0
      %5741 = vmatpush2.msra.mxu0 %v5313
      %5742 = vmatprep.subr.mxu0 0.0
      %5743 = vmatpush2.msra.mxu0 %v5312
      %5744 = vmatprep.subr.mxu0 0.0
      %5745 = vmatpush2.msra.mxu0 %v5311
      %5746 = vmatprep.subr.mxu0 0.0
      %5747 = vmatpush2.msra.mxu0 %v5310
      %5748 = vmatprep.subr.mxu0 0.0
      %5749 = vmatpush2.msra.mxu0 %v5309
      %5750 = vmatprep.subr.mxu0 0.0
      %5751 = vmatpush2.msra.mxu0 %v5308
      %5752 = vmatprep.subr.mxu0 0.0
      %5753 = vmatpush2.msra.mxu0 %v5307
      %5754 = vmatprep.subr.mxu0 0.0
      %5755 = vmatpush2.msra.mxu0 %v5306
      %5756 = vmatprep.subr.mxu0 0.0
      %5757 = vmatpush2.msra.mxu0 %v5305
      %5758 = vmatprep.subr.mxu0 0.0
      %5759 = vmatpush2.msra.mxu0 %v5304
      %5760 = vmatprep.subr.mxu0 0.0
      %5761 = vmatpush2.msra.mxu0 %v5303
      %5762 = vmatprep.subr.mxu0 0.0
      %5763 = vmatpush2.msra.mxu0 %v5302
      %5764 = vmatprep.subr.mxu0 0.0
      %5765 = vmatpush2.msra.mxu0 %v5301
      %5766 = vmatprep.mubr.f32.mxu0 %v5320
      %5767 = vmatmul.mubr.f32.gmra.mxu0 %v5319
      %v5768 = vpop.f32.mrf.mxu0
      %v5769 = vadd.f32 %v5544, %v5768
      %v5770 = vpop.f32.mrf.mxu0
      %5771 = vmatprep.mubr.f32.mxu0 %v5324
      %5772 = vmatmul.mubr.f32.gmra.mxu0 %v5323
      %v5773 = vpop.f32.mrf.mxu0
      %v5774 = vadd.f32 %v5549, %v5773
      %v5775 = vpop.f32.mrf.mxu0
      %5776 = vmatprep.mubr.f32.mxu0 %v5328
      %5777 = vmatmul.mubr.f32.gmra.mxu0 %v5327
      %v5778 = vpop.f32.mrf.mxu0
      %v5779 = vadd.f32 %v5554, %v5778
      %v5780 = vpop.f32.mrf.mxu0
      %5781 = vmatprep.mubr.f32.mxu0 %v5332
      %5782 = vmatmul.mubr.f32.gmra.mxu0 %v5331
      %v5783 = vpop.f32.mrf.mxu0
      %v5784 = vadd.f32 %v5559, %v5783
      %v5785 = vpop.f32.mrf.mxu0
      %5786 = vmatprep.mubr.f32.mxu0 %v5336
      %5787 = vmatmul.mubr.f32.gmra.mxu0 %v5335
      %v5788 = vpop.f32.mrf.mxu0
      %v5789 = vadd.f32 %v5564, %v5788
      %v5790 = vpop.f32.mrf.mxu0
      %5791 = vmatprep.mubr.f32.mxu0 %v5340
      %5792 = vmatmul.mubr.f32.gmra.mxu0 %v5339
      %v5793 = vpop.f32.mrf.mxu0
      %v5794 = vadd.f32 %v5569, %v5793
      %v5795 = vpop.f32.mrf.mxu0
      %5796 = vmatprep.mubr.f32.mxu0 %v5344
      %5797 = vmatmul.mubr.f32.gmra.mxu0 %v5343
      %v5798 = vpop.f32.mrf.mxu0
      %v5799 = vadd.f32 %v5574, %v5798
      %v5800 = vpop.f32.mrf.mxu0
      %5801 = vmatprep.mubr.f32.mxu0 %v5348
      %5802 = vmatmul.mubr.f32.gmra.mxu0 %v5347
      %v5803 = vpop.f32.mrf.mxu0
      %v5804 = vadd.f32 %v5579, %v5803
      %v5805 = vpop.f32.mrf.mxu0
      %5806 = vmatprep.mubr.f32.mxu0 %v5352
      %5807 = vmatmul.mubr.f32.gmra.mxu0 %v5351
      %v5808 = vpop.f32.mrf.mxu0
      %v5809 = vadd.f32 %v5584, %v5808
      %v5810 = vpop.f32.mrf.mxu0
      %5811 = vmatprep.mubr.f32.mxu0 %v5356
      %5812 = vmatmul.mubr.f32.gmra.mxu0 %v5355
      %v5813 = vpop.f32.mrf.mxu0
      %v5814 = vadd.f32 %v5589, %v5813
      %v5815 = vpop.f32.mrf.mxu0
      %5816 = vmatprep.mubr.f32.mxu0 %v5360
      %5817 = vmatmul.mubr.f32.gmra.mxu0 %v5359
      %v5818 = vpop.f32.mrf.mxu0
      %v5819 = vadd.f32 %v5594, %v5818
      %v5820 = vpop.f32.mrf.mxu0
      %5821 = vmatprep.mubr.f32.mxu0 %v5364
      %5822 = vmatmul.mubr.f32.gmra.mxu0 %v5363
      %v5823 = vpop.f32.mrf.mxu0
      %v5824 = vadd.f32 %v5599, %v5823
      %v5825 = vpop.f32.mrf.mxu0
      %5826 = vmatprep.mubr.f32.mxu0 %v5368
      %5827 = vmatmul.mubr.f32.gmra.mxu0 %v5367
      %v5828 = vpop.f32.mrf.mxu0
      %v5829 = vadd.f32 %v5604, %v5828
      %v5830 = vpop.f32.mrf.mxu0
      %5831 = vmatprep.mubr.f32.mxu0 %v5372
      %5832 = vmatmul.mubr.f32.gmra.mxu0 %v5371
      %v5833 = vpop.f32.mrf.mxu0
      %v5834 = vadd.f32 %v5609, %v5833
      %v5835 = vpop.f32.mrf.mxu0
      %5836 = vmatprep.mubr.f32.mxu0 %v5376
      %5837 = vmatmul.mubr.f32.gmra.mxu0 %v5375
      %v5838 = vpop.f32.mrf.mxu0
      %v5839 = vadd.f32 %v5614, %v5838
      %v5840 = vpop.f32.mrf.mxu0
      %5841 = vmatprep.mubr.f32.mxu0 %v5380
      %5842 = vmatmul.mubr.f32.gmra.mxu0 %v5379
      %v5843 = vpop.f32.mrf.mxu0
      %v5844 = vadd.f32 %v5619, %v5843
      %v5845 = vpop.f32.mrf.mxu0
      %5846 = vmatprep.mubr.f32.mxu0 %v5384
      %5847 = vmatmul.mubr.f32.gmra.mxu0 %v5383
      %v5848 = vpop.f32.mrf.mxu0
      %v5849 = vadd.f32 %v5624, %v5848
      %v5850 = vpop.f32.mrf.mxu0
      %5851 = vmatprep.mubr.f32.mxu0 %v5388
      %5852 = vmatmul.mubr.f32.gmra.mxu0 %v5387
      %v5853 = vpop.f32.mrf.mxu0
      %v5854 = vadd.f32 %v5629, %v5853
      %v5855 = vpop.f32.mrf.mxu0
      %5856 = vmatprep.mubr.f32.mxu0 %v5392
      %5857 = vmatmul.mubr.f32.gmra.mxu0 %v5391
      %v5858 = vpop.f32.mrf.mxu0
      %v5859 = vadd.f32 %v5634, %v5858
      %v5860 = vpop.f32.mrf.mxu0
      %5861 = vmatprep.mubr.f32.mxu0 %v5396
      %5862 = vmatmul.mubr.f32.gmra.mxu0 %v5395
      %v5863 = vpop.f32.mrf.mxu0
      %v5864 = vadd.f32 %v5639, %v5863
      %v5865 = vpop.f32.mrf.mxu0
      %5866 = vmatprep.mubr.f32.mxu0 %v5400
      %5867 = vmatmul.mubr.f32.gmra.mxu0 %v5399
      %v5868 = vpop.f32.mrf.mxu0
      %v5869 = vadd.f32 %v5644, %v5868
      %v5870 = vpop.f32.mrf.mxu0
      %5871 = vmatprep.mubr.f32.mxu0 %v5404
      %5872 = vmatmul.mubr.f32.gmra.mxu0 %v5403
      %v5873 = vpop.f32.mrf.mxu0
      %v5874 = vadd.f32 %v5649, %v5873
      %v5875 = vpop.f32.mrf.mxu0
      %5876 = vmatprep.mubr.f32.mxu0 %v5408
      %5877 = vmatmul.mubr.f32.gmra.mxu0 %v5407
      %v5878 = vpop.f32.mrf.mxu0
      %v5879 = vadd.f32 %v5654, %v5878
      %v5880 = vpop.f32.mrf.mxu0
      %5881 = vmatprep.mubr.f32.mxu0 %v5412
      %5882 = vmatmul.mubr.f32.gmra.mxu0 %v5411
      %v5883 = vpop.f32.mrf.mxu0
      %v5884 = vadd.f32 %v5659, %v5883
      %v5885 = vpop.f32.mrf.mxu0
      %5886 = vmatprep.mubr.f32.mxu0 %v5416
      %5887 = vmatmul.mubr.f32.gmra.mxu0 %v5415
      %v5888 = vpop.f32.mrf.mxu0
      %v5889 = vadd.f32 %v5664, %v5888
      %v5890 = vpop.f32.mrf.mxu0
      %5891 = vmatprep.mubr.f32.mxu0 %v5420
      %5892 = vmatmul.mubr.f32.gmra.mxu0 %v5419
      %v5893 = vpop.f32.mrf.mxu0
      %v5894 = vadd.f32 %v5669, %v5893
      %v5895 = vpop.f32.mrf.mxu0
      %5896 = vmatprep.mubr.f32.mxu0 %v5424
      %5897 = vmatmul.mubr.f32.gmra.mxu0 %v5423
      %v5898 = vpop.f32.mrf.mxu0
      %v5899 = vadd.f32 %v5674, %v5898
      %v5900 = vpop.f32.mrf.mxu0
      %5901 = vmatprep.mubr.f32.mxu0 %v5428
      %5902 = vmatmul.mubr.f32.gmra.mxu0 %v5427
      %v5903 = vpop.f32.mrf.mxu0
      %v5904 = vadd.f32 %v5679, %v5903
      %v5905 = vpop.f32.mrf.mxu0
      %5906 = vmatprep.mubr.f32.mxu0 %v5432
      %5907 = vmatmul.mubr.f32.gmra.mxu0 %v5431
      %v5908 = vpop.f32.mrf.mxu0
      %v5909 = vadd.f32 %v5684, %v5908
      %v5910 = vpop.f32.mrf.mxu0
      %5911 = vmatprep.mubr.f32.mxu0 %v5436
      %5912 = vmatmul.mubr.f32.gmra.mxu0 %v5435
      %v5913 = vpop.f32.mrf.mxu0
      %v5914 = vadd.f32 %v5689, %v5913
      %v5915 = vpop.f32.mrf.mxu0
      %5916 = vmatprep.mubr.f32.mxu0 %v5440
      %5917 = vmatmul.mubr.f32.gmra.mxu0 %v5439
      %v5918 = vpop.f32.mrf.mxu0
      %v5919 = vadd.f32 %v5694, %v5918
      %v5920 = vpop.f32.mrf.mxu0
      %5921 = vmatprep.mubr.f32.mxu0 %v5444
      %5922 = vmatmul.mubr.f32.gmra.mxu0 %v5443
      %v5923 = vpop.f32.mrf.mxu0
      %v5924 = vadd.f32 %v5699, %v5923
      %v5925 = vpop.f32.mrf.mxu0
      %5926 = vdwg.mxu0
      %v5927 = vld [vmem:[%s10] sm:$0xff]
      %v5928 = vld [vmem:[%s10 + $0x8] sm:$0xff]
      %v5929 = vld [vmem:[%s10 + $0x10] sm:$0xff]
      %v5930 = vld [vmem:[%s10 + $0x18] sm:$0xff]
      %v5931 = vld [vmem:[%s10 + $0x20] sm:$0xff]
      %v5932 = vld [vmem:[%s10 + $0x28] sm:$0xff]
      %v5933 = vld [vmem:[%s10 + $0x30] sm:$0xff]
      %v5934 = vld [vmem:[%s10 + $0x38] sm:$0xff]
      %v5935 = vld [vmem:[%s10 + $0x40] sm:$0xff]
      %v5936 = vld [vmem:[%s10 + $0x48] sm:$0xff]
      %v5937 = vld [vmem:[%s10 + $0x50] sm:$0xff]
      %v5938 = vld [vmem:[%s10 + $0x58] sm:$0xff]
      %v5939 = vld [vmem:[%s10 + $0x60] sm:$0xff]
      %v5940 = vld [vmem:[%s10 + $0x68] sm:$0xff]
      %v5941 = vld [vmem:[%s10 + $0x70] sm:$0xff]
      %v5942 = vld [vmem:[%s10 + $0x78] sm:$0xff]
      %v5943 = vld [vmem:[%s10 + $0x80] sm:$0xff]
      %v5944 = vld [vmem:[%s10 + $0x88] sm:$0xff]
      %v5945 = vld [vmem:[%s10 + $0x90] sm:$0xff]
      %v5946 = vld [vmem:[%s10 + $0x98] sm:$0xff]
      %v5947 = vld [vmem:[%s10 + $0xa0] sm:$0xff]
      %v5948 = vld [vmem:[%s10 + $0xa8] sm:$0xff]
      %v5949 = vld [vmem:[%s10 + $0xb0] sm:$0xff]
      %v5950 = vld [vmem:[%s10 + $0xb8] sm:$0xff]
      %v5951 = vld [vmem:[%s10 + $0xc0] sm:$0xff]
      %v5952 = vld [vmem:[%s10 + $0xc8] sm:$0xff]
      %v5953 = vld [vmem:[%s10 + $0xd0] sm:$0xff]
      %v5954 = vld [vmem:[%s10 + $0xd8] sm:$0xff]
      %v5955 = vld [vmem:[%s10 + $0xe0] sm:$0xff]
      %v5956 = vld [vmem:[%s10 + $0xe8] sm:$0xff]
      %v5957 = vld [vmem:[%s10 + $0xf0] sm:$0xff]
      %v5958 = vld [vmem:[%s10 + $0xf8] sm:$0xff]
      %v5959 = vld [vmem:[%s10 + $0x100] sm:$0xff]
      %v5960 = vld [vmem:[%s10 + $0x108] sm:$0xff]
      %v5961 = vld [vmem:[%s10 + $0x110] sm:$0xff]
      %v5962 = vld [vmem:[%s10 + $0x118] sm:$0xff]
      %v5963 = vld [vmem:[%s10 + $0x120] sm:$0xff]
      %v5964 = vld [vmem:[%s10 + $0x128] sm:$0xff]
      %v5965 = vld [vmem:[%s10 + $0x130] sm:$0x1]
      %v5966 = vld [vmem:[%s10 + $0x138] sm:$0x1]
      %5967 = vmatprep.subr.mxu0 0.0
      %5968 = vmatpush1.msra.mxu0 %v5844
      %5969 = vmatprep.subr.mxu0 0.0
      %5970 = vmatpush1.msra.mxu0 %v5839
      %5971 = vmatprep.subr.mxu0 0.0
      %5972 = vmatpush1.msra.mxu0 %v5834
      %5973 = vmatprep.subr.mxu0 0.0
      %5974 = vmatpush1.msra.mxu0 %v5829
      %5975 = vmatprep.subr.mxu0 0.0
      %5976 = vmatpush1.msra.mxu0 %v5824
      %5977 = vmatprep.subr.mxu0 0.0
      %5978 = vmatpush1.msra.mxu0 %v5819
      %5979 = vmatprep.subr.mxu0 0.0
      %5980 = vmatpush1.msra.mxu0 %v5814
      %5981 = vmatprep.subr.mxu0 0.0
      %5982 = vmatpush1.msra.mxu0 %v5809
      %5983 = vmatprep.subr.mxu0 0.0
      %5984 = vmatpush1.msra.mxu0 %v5804
      %5985 = vmatprep.subr.mxu0 0.0
      %5986 = vmatpush1.msra.mxu0 %v5799
      %5987 = vmatprep.subr.mxu0 0.0
      %5988 = vmatpush1.msra.mxu0 %v5794
      %5989 = vmatprep.subr.mxu0 0.0
      %5990 = vmatpush1.msra.mxu0 %v5789
      %5991 = vmatprep.subr.mxu0 0.0
      %5992 = vmatpush1.msra.mxu0 %v5784
      %5993 = vmatprep.subr.mxu0 0.0
      %5994 = vmatpush1.msra.mxu0 %v5779
      %5995 = vmatprep.subr.mxu0 0.0
      %5996 = vmatpush1.msra.mxu0 %v5774
      %5997 = vmatprep.subr.mxu0 0.0
      %5998 = vmatpush1.msra.mxu0 %v5769
      %5999 = vmatprep.subr.mxu0 0.0
      %6000 = vmatpush2.msra.mxu0 %v5924
      %6001 = vmatprep.subr.mxu0 0.0
      %6002 = vmatpush2.msra.mxu0 %v5919
      %6003 = vmatprep.subr.mxu0 0.0
      %6004 = vmatpush2.msra.mxu0 %v5914
      %6005 = vmatprep.subr.mxu0 0.0
      %6006 = vmatpush2.msra.mxu0 %v5909
      %6007 = vmatprep.subr.mxu0 0.0
      %6008 = vmatpush2.msra.mxu0 %v5904
      %6009 = vmatprep.subr.mxu0 0.0
      %6010 = vmatpush2.msra.mxu0 %v5899
      %6011 = vmatprep.subr.mxu0 0.0
      %6012 = vmatpush2.msra.mxu0 %v5894
      %6013 = vmatprep.subr.mxu0 0.0
      %6014 = vmatpush2.msra.mxu0 %v5889
      %6015 = vmatprep.subr.mxu0 0.0
      %6016 = vmatpush2.msra.mxu0 %v5884
      %6017 = vmatprep.subr.mxu0 0.0
      %6018 = vmatpush2.msra.mxu0 %v5879
      %6019 = vmatprep.subr.mxu0 0.0
      %6020 = vmatpush2.msra.mxu0 %v5874
      %6021 = vmatprep.subr.mxu0 0.0
      %6022 = vmatpush2.msra.mxu0 %v5869
      %6023 = vmatprep.subr.mxu0 0.0
      %6024 = vmatpush2.msra.mxu0 %v5864
      %6025 = vmatprep.subr.mxu0 0.0
      %6026 = vmatpush2.msra.mxu0 %v5859
      %6027 = vmatprep.subr.mxu0 0.0
      %6028 = vmatpush2.msra.mxu0 %v5854
      %6029 = vmatprep.subr.mxu0 0.0
      %6030 = vmatpush2.msra.mxu0 %v5849
      %6031 = vmatprep.mubr.f32.mxu0 %v5928
      %6032 = vmatmul.mubr.f32.gmra.mxu0 %v5927
      %v6033 = vpop.f32.mrf.mxu0
      %v6034 = vadd.f32 0.0, %v6033
      %v6035 = vpop.f32.mrf.mxu0
      %6036 = vmatprep.mubr.f32.mxu0 %v5930
      %6037 = vmatmul.mubr.f32.gmra.mxu0 %v5929
      %v6038 = vpop.f32.mrf.mxu0
      %v6039 = vadd.f32 0.0, %v6038
      %v6040 = vpop.f32.mrf.mxu0
      %6041 = vmatprep.mubr.f32.mxu0 %v5932
      %6042 = vmatmul.mubr.f32.gmra.mxu0 %v5931
      %v6043 = vpop.f32.mrf.mxu0
      %v6044 = vadd.f32 0.0, %v6043
      %v6045 = vpop.f32.mrf.mxu0
      %6046 = vmatprep.mubr.f32.mxu0 %v5934
      %6047 = vmatmul.mubr.f32.gmra.mxu0 %v5933
      %v6048 = vpop.f32.mrf.mxu0
      %v6049 = vadd.f32 0.0, %v6048
      %v6050 = vpop.f32.mrf.mxu0
      %6051 = vmatprep.mubr.f32.mxu0 %v5936
      %6052 = vmatmul.mubr.f32.gmra.mxu0 %v5935
      %v6053 = vpop.f32.mrf.mxu0
      %v6054 = vadd.f32 0.0, %v6053
      %v6055 = vpop.f32.mrf.mxu0
      %6056 = vmatprep.mubr.f32.mxu0 %v5938
      %6057 = vmatmul.mubr.f32.gmra.mxu0 %v5937
      %v6058 = vpop.f32.mrf.mxu0
      %v6059 = vadd.f32 0.0, %v6058
      %v6060 = vpop.f32.mrf.mxu0
      %6061 = vmatprep.mubr.f32.mxu0 %v5940
      %6062 = vmatmul.mubr.f32.gmra.mxu0 %v5939
      %v6063 = vpop.f32.mrf.mxu0
      %v6064 = vadd.f32 0.0, %v6063
      %v6065 = vpop.f32.mrf.mxu0
      %6066 = vmatprep.mubr.f32.mxu0 %v5942
      %6067 = vmatmul.mubr.f32.gmra.mxu0 %v5941
      %v6068 = vpop.f32.mrf.mxu0
      %v6069 = vadd.f32 0.0, %v6068
      %v6070 = vpop.f32.mrf.mxu0
      %6071 = vmatprep.mubr.f32.mxu0 %v5944
      %6072 = vmatmul.mubr.f32.gmra.mxu0 %v5943
      %v6073 = vpop.f32.mrf.mxu0
      %v6074 = vadd.f32 0.0, %v6073
      %v6075 = vpop.f32.mrf.mxu0
      %6076 = vmatprep.mubr.f32.mxu0 %v5946
      %6077 = vmatmul.mubr.f32.gmra.mxu0 %v5945
      %v6078 = vpop.f32.mrf.mxu0
      %v6079 = vadd.f32 0.0, %v6078
      %v6080 = vpop.f32.mrf.mxu0
      %6081 = vmatprep.mubr.f32.mxu0 %v5948
      %6082 = vmatmul.mubr.f32.gmra.mxu0 %v5947
      %v6083 = vpop.f32.mrf.mxu0
      %v6084 = vadd.f32 0.0, %v6083
      %v6085 = vpop.f32.mrf.mxu0
      %6086 = vmatprep.mubr.f32.mxu0 %v5950
      %6087 = vmatmul.mubr.f32.gmra.mxu0 %v5949
      %v6088 = vpop.f32.mrf.mxu0
      %v6089 = vadd.f32 0.0, %v6088
      %v6090 = vpop.f32.mrf.mxu0
      %6091 = vmatprep.mubr.f32.mxu0 %v5952
      %6092 = vmatmul.mubr.f32.gmra.mxu0 %v5951
      %v6093 = vpop.f32.mrf.mxu0
      %v6094 = vadd.f32 0.0, %v6093
      %v6095 = vpop.f32.mrf.mxu0
      %6096 = vmatprep.mubr.f32.mxu0 %v5954
      %6097 = vmatmul.mubr.f32.gmra.mxu0 %v5953
      %v6098 = vpop.f32.mrf.mxu0
      %v6099 = vadd.f32 0.0, %v6098
      %v6100 = vpop.f32.mrf.mxu0
      %6101 = vmatprep.mubr.f32.mxu0 %v5956
      %6102 = vmatmul.mubr.f32.gmra.mxu0 %v5955
      %v6103 = vpop.f32.mrf.mxu0
      %v6104 = vadd.f32 0.0, %v6103
      %v6105 = vpop.f32.mrf.mxu0
      %6106 = vmatprep.mubr.f32.mxu0 %v5958
      %6107 = vmatmul.mubr.f32.gmra.mxu0 %v5957
      %v6108 = vpop.f32.mrf.mxu0
      %v6109 = vadd.f32 0.0, %v6108
      %v6110 = vpop.f32.mrf.mxu0
      %6111 = vmatprep.mubr.f32.mxu0 %v5960
      %6112 = vmatmul.mubr.f32.gmra.mxu0 %v5959
      %v6113 = vpop.f32.mrf.mxu0
      %v6114 = vadd.f32 0.0, %v6113
      %v6115 = vpop.f32.mrf.mxu0
      %6116 = vmatprep.mubr.f32.mxu0 %v5962
      %6117 = vmatmul.mubr.f32.gmra.mxu0 %v5961
      %v6118 = vpop.f32.mrf.mxu0
      %v6119 = vadd.f32 0.0, %v6118
      %v6120 = vpop.f32.mrf.mxu0
      %6121 = vmatprep.mubr.f32.mxu0 %v5964
      %6122 = vmatmul.mubr.f32.gmra.mxu0 %v5963
      %v6123 = vpop.f32.mrf.mxu0
      %v6124 = vadd.f32 0.0, %v6123
      %v6125 = vpop.f32.mrf.mxu0
      %6126 = vmatprep.mubr.f32.mxu0 %v5966
      %6127 = vmatmul.mubr.f32.gmra.mxu0 %v5965
      %v6128 = vpop.f32.mrf.mxu0
      %v6129 = vadd.f32 0.0, %v6128
      %v6130 = vpop.f32.mrf.mxu0
      %6131 = vdwg.mxu0
      %v6132 = vld [vmem:[%s11] sm:$0xff]
      %v6133 = vld [vmem:[%s11 + $0x8] sm:$0xff]
      %v6134 = vld [vmem:[%s11 + $0x10] sm:$0xff]
      %v6135 = vld [vmem:[%s11 + $0x18] sm:$0xff]
      %v6136 = vld [vmem:[%s11 + $0x20] sm:$0xff]
      %v6137 = vld [vmem:[%s11 + $0x28] sm:$0xff]
      %v6138 = vld [vmem:[%s11 + $0x30] sm:$0xff]
      %v6139 = vld [vmem:[%s11 + $0x38] sm:$0xff]
      %v6140 = vld [vmem:[%s11 + $0x40] sm:$0xff]
      %v6141 = vld [vmem:[%s11 + $0x48] sm:$0xff]
      %v6142 = vld [vmem:[%s11 + $0x50] sm:$0xff]
      %v6143 = vld [vmem:[%s11 + $0x58] sm:$0xff]
      %v6144 = vld [vmem:[%s11 + $0x60] sm:$0xff]
      %v6145 = vld [vmem:[%s11 + $0x68] sm:$0xff]
      %v6146 = vld [vmem:[%s11 + $0x70] sm:$0xff]
      %v6147 = vld [vmem:[%s11 + $0x78] sm:$0xff]
      %v6148 = vld [vmem:[%s11 + $0x80] sm:$0xff]
      %v6149 = vld [vmem:[%s11 + $0x88] sm:$0xff]
      %v6150 = vld [vmem:[%s11 + $0x90] sm:$0xff]
      %v6151 = vld [vmem:[%s11 + $0x98] sm:$0xff]
      %v6152 = vld [vmem:[%s11 + $0xa0] sm:$0xff]
      %v6153 = vld [vmem:[%s11 + $0xa8] sm:$0xff]
      %v6154 = vld [vmem:[%s11 + $0xb0] sm:$0xff]
      %v6155 = vld [vmem:[%s11 + $0xb8] sm:$0xff]
      %v6156 = vld [vmem:[%s11 + $0xc0] sm:$0xff]
      %v6157 = vld [vmem:[%s11 + $0xc8] sm:$0xff]
      %v6158 = vld [vmem:[%s11 + $0xd0] sm:$0xff]
      %v6159 = vld [vmem:[%s11 + $0xd8] sm:$0xff]
      %v6160 = vld [vmem:[%s11 + $0xe0] sm:$0xff]
      %v6161 = vld [vmem:[%s11 + $0xe8] sm:$0xff]
      %v6162 = vld [vmem:[%s11 + $0xf0] sm:$0xff]
      %v6163 = vld [vmem:[%s11 + $0xf8] sm:$0xff]
      %v6164 = vld [vmem:[%s11 + $0x100] sm:$0xff]
      %v6165 = vld [vmem:[%s11 + $0x108] sm:$0xff]
      %v6166 = vld [vmem:[%s11 + $0x110] sm:$0xff]
      %v6167 = vld [vmem:[%s11 + $0x118] sm:$0xff]
      %v6168 = vld [vmem:[%s11 + $0x120] sm:$0xff]
      %v6169 = vld [vmem:[%s11 + $0x128] sm:$0xff]
      %v6170 = vld [vmem:[%s11 + $0x130] sm:$0x1]
      %v6171 = vld [vmem:[%s11 + $0x138] sm:$0x1]
      %v6172 = vld [vmem:[%s9] sm:$0xff]
      %v6173 = vld [vmem:[%s9 + $0x8] sm:$0xff]
      %v6174 = vld [vmem:[%s9 + $0x10] sm:$0xff]
      %v6175 = vld [vmem:[%s9 + $0x18] sm:$0xff]
      %v6176 = vld [vmem:[%s9 + $0x20] sm:$0xff]
      %v6177 = vld [vmem:[%s9 + $0x28] sm:$0xff]
      %v6178 = vld [vmem:[%s9 + $0x30] sm:$0xff]
      %v6179 = vld [vmem:[%s9 + $0x38] sm:$0xff]
      %v6180 = vld [vmem:[%s9 + $0x40] sm:$0xff]
      %v6181 = vld [vmem:[%s9 + $0x48] sm:$0xff]
      %v6182 = vld [vmem:[%s9 + $0x50] sm:$0xff]
      %v6183 = vld [vmem:[%s9 + $0x58] sm:$0xff]
      %v6184 = vld [vmem:[%s9 + $0x60] sm:$0xff]
      %v6185 = vld [vmem:[%s9 + $0x68] sm:$0xff]
      %v6186 = vld [vmem:[%s9 + $0x70] sm:$0xff]
      %v6187 = vld [vmem:[%s9 + $0x78] sm:$0xff]
      %v6188 = vld [vmem:[%s9 + $0x80] sm:$0xff]
      %v6189 = vld [vmem:[%s9 + $0x88] sm:$0xff]
      %v6190 = vld [vmem:[%s9 + $0x90] sm:$0xff]
      %v6191 = vld [vmem:[%s9 + $0x98] sm:$0xff]
      %v6192 = vld [vmem:[%s9 + $0xa0] sm:$0xff]
      %v6193 = vld [vmem:[%s9 + $0xa8] sm:$0xff]
      %v6194 = vld [vmem:[%s9 + $0xb0] sm:$0xff]
      %v6195 = vld [vmem:[%s9 + $0xb8] sm:$0xff]
      %v6196 = vld [vmem:[%s9 + $0xc0] sm:$0xff]
      %v6197 = vld [vmem:[%s9 + $0xc8] sm:$0xff]
      %v6198 = vld [vmem:[%s9 + $0xd0] sm:$0xff]
      %v6199 = vld [vmem:[%s9 + $0xd8] sm:$0xff]
      %v6200 = vld [vmem:[%s9 + $0xe0] sm:$0xff]
      %v6201 = vld [vmem:[%s9 + $0xe8] sm:$0xff]
      %v6202 = vld [vmem:[%s9 + $0xf0] sm:$0xff]
      %v6203 = vld [vmem:[%s9 + $0xf8] sm:$0xff]
      %6204 = vmatprep.subr.mxu0 0.0
      %6205 = vmatpush1.msra.mxu0 %v6187
      %6206 = vmatprep.subr.mxu0 0.0
      %6207 = vmatpush1.msra.mxu0 %v6186
      %6208 = vmatprep.subr.mxu0 0.0
      %6209 = vmatpush1.msra.mxu0 %v6185
      %6210 = vmatprep.subr.mxu0 0.0
      %6211 = vmatpush1.msra.mxu0 %v6184
      %6212 = vmatprep.subr.mxu0 0.0
      %6213 = vmatpush1.msra.mxu0 %v6183
      %6214 = vmatprep.subr.mxu0 0.0
      %6215 = vmatpush1.msra.mxu0 %v6182
      %6216 = vmatprep.subr.mxu0 0.0
      %6217 = vmatpush1.msra.mxu0 %v6181
      %6218 = vmatprep.subr.mxu0 0.0
      %6219 = vmatpush1.msra.mxu0 %v6180
      %6220 = vmatprep.subr.mxu0 0.0
      %6221 = vmatpush1.msra.mxu0 %v6179
      %6222 = vmatprep.subr.mxu0 0.0
      %6223 = vmatpush1.msra.mxu0 %v6178
      %6224 = vmatprep.subr.mxu0 0.0
      %6225 = vmatpush1.msra.mxu0 %v6177
      %6226 = vmatprep.subr.mxu0 0.0
      %6227 = vmatpush1.msra.mxu0 %v6176
      %6228 = vmatprep.subr.mxu0 0.0
      %6229 = vmatpush1.msra.mxu0 %v6175
      %6230 = vmatprep.subr.mxu0 0.0
      %6231 = vmatpush1.msra.mxu0 %v6174
      %6232 = vmatprep.subr.mxu0 0.0
      %6233 = vmatpush1.msra.mxu0 %v6173
      %6234 = vmatprep.subr.mxu0 0.0
      %6235 = vmatpush1.msra.mxu0 %v6172
      %6236 = vmatprep.subr.mxu0 0.0
      %6237 = vmatpush2.msra.mxu0 %v6203
      %6238 = vmatprep.subr.mxu0 0.0
      %6239 = vmatpush2.msra.mxu0 %v6202
      %6240 = vmatprep.subr.mxu0 0.0
      %6241 = vmatpush2.msra.mxu0 %v6201
      %6242 = vmatprep.subr.mxu0 0.0
      %6243 = vmatpush2.msra.mxu0 %v6200
      %6244 = vmatprep.subr.mxu0 0.0
      %6245 = vmatpush2.msra.mxu0 %v6199
      %6246 = vmatprep.subr.mxu0 0.0
      %6247 = vmatpush2.msra.mxu0 %v6198
      %6248 = vmatprep.subr.mxu0 0.0
      %6249 = vmatpush2.msra.mxu0 %v6197
      %6250 = vmatprep.subr.mxu0 0.0
      %6251 = vmatpush2.msra.mxu0 %v6196
      %6252 = vmatprep.subr.mxu0 0.0
      %6253 = vmatpush2.msra.mxu0 %v6195
      %6254 = vmatprep.subr.mxu0 0.0
      %6255 = vmatpush2.msra.mxu0 %v6194
      %6256 = vmatprep.subr.mxu0 0.0
      %6257 = vmatpush2.msra.mxu0 %v6193
      %6258 = vmatprep.subr.mxu0 0.0
      %6259 = vmatpush2.msra.mxu0 %v6192
      %6260 = vmatprep.subr.mxu0 0.0
      %6261 = vmatpush2.msra.mxu0 %v6191
      %6262 = vmatprep.subr.mxu0 0.0
      %6263 = vmatpush2.msra.mxu0 %v6190
      %6264 = vmatprep.subr.mxu0 0.0
      %6265 = vmatpush2.msra.mxu0 %v6189
      %6266 = vmatprep.subr.mxu0 0.0
      %6267 = vmatpush2.msra.mxu0 %v6188
      %6268 = vmatprep.mubr.f32.mxu0 %v6133
      %6269 = vmatmul.mubr.f32.gmra.mxu0 %v6132
      %v6270 = vpop.f32.mrf.mxu0
      %v6271 = vadd.f32 0.0, %v6270
      %v6272 = vpop.f32.mrf.mxu0
      %6273 = vmatprep.mubr.f32.mxu0 %v6135
      %6274 = vmatmul.mubr.f32.gmra.mxu0 %v6134
      %v6275 = vpop.f32.mrf.mxu0
      %v6276 = vadd.f32 0.0, %v6275
      %v6277 = vpop.f32.mrf.mxu0
      %6278 = vmatprep.mubr.f32.mxu0 %v6137
      %6279 = vmatmul.mubr.f32.gmra.mxu0 %v6136
      %v6280 = vpop.f32.mrf.mxu0
      %v6281 = vadd.f32 0.0, %v6280
      %v6282 = vpop.f32.mrf.mxu0
      %6283 = vmatprep.mubr.f32.mxu0 %v6139
      %6284 = vmatmul.mubr.f32.gmra.mxu0 %v6138
      %v6285 = vpop.f32.mrf.mxu0
      %v6286 = vadd.f32 0.0, %v6285
      %v6287 = vpop.f32.mrf.mxu0
      %6288 = vmatprep.mubr.f32.mxu0 %v6141
      %6289 = vmatmul.mubr.f32.gmra.mxu0 %v6140
      %v6290 = vpop.f32.mrf.mxu0
      %v6291 = vadd.f32 0.0, %v6290
      %v6292 = vpop.f32.mrf.mxu0
      %6293 = vmatprep.mubr.f32.mxu0 %v6143
      %6294 = vmatmul.mubr.f32.gmra.mxu0 %v6142
      %v6295 = vpop.f32.mrf.mxu0
      %v6296 = vadd.f32 0.0, %v6295
      %v6297 = vpop.f32.mrf.mxu0
      %6298 = vmatprep.mubr.f32.mxu0 %v6145
      %6299 = vmatmul.mubr.f32.gmra.mxu0 %v6144
      %v6300 = vpop.f32.mrf.mxu0
      %v6301 = vadd.f32 0.0, %v6300
      %v6302 = vpop.f32.mrf.mxu0
      %6303 = vmatprep.mubr.f32.mxu0 %v6147
      %6304 = vmatmul.mubr.f32.gmra.mxu0 %v6146
      %v6305 = vpop.f32.mrf.mxu0
      %v6306 = vadd.f32 0.0, %v6305
      %v6307 = vpop.f32.mrf.mxu0
      %6308 = vmatprep.mubr.f32.mxu0 %v6149
      %6309 = vmatmul.mubr.f32.gmra.mxu0 %v6148
      %v6310 = vpop.f32.mrf.mxu0
      %v6311 = vadd.f32 0.0, %v6310
      %v6312 = vpop.f32.mrf.mxu0
      %6313 = vmatprep.mubr.f32.mxu0 %v6151
      %6314 = vmatmul.mubr.f32.gmra.mxu0 %v6150
      %v6315 = vpop.f32.mrf.mxu0
      %v6316 = vadd.f32 0.0, %v6315
      %v6317 = vpop.f32.mrf.mxu0
      %6318 = vmatprep.mubr.f32.mxu0 %v6153
      %6319 = vmatmul.mubr.f32.gmra.mxu0 %v6152
      %v6320 = vpop.f32.mrf.mxu0
      %v6321 = vadd.f32 0.0, %v6320
      %v6322 = vpop.f32.mrf.mxu0
      %6323 = vmatprep.mubr.f32.mxu0 %v6155
      %6324 = vmatmul.mubr.f32.gmra.mxu0 %v6154
      %v6325 = vpop.f32.mrf.mxu0
      %v6326 = vadd.f32 0.0, %v6325
      %v6327 = vpop.f32.mrf.mxu0
      %6328 = vmatprep.mubr.f32.mxu0 %v6157
      %6329 = vmatmul.mubr.f32.gmra.mxu0 %v6156
      %v6330 = vpop.f32.mrf.mxu0
      %v6331 = vadd.f32 0.0, %v6330
      %v6332 = vpop.f32.mrf.mxu0
      %6333 = vmatprep.mubr.f32.mxu0 %v6159
      %6334 = vmatmul.mubr.f32.gmra.mxu0 %v6158
      %v6335 = vpop.f32.mrf.mxu0
      %v6336 = vadd.f32 0.0, %v6335
      %v6337 = vpop.f32.mrf.mxu0
      %6338 = vmatprep.mubr.f32.mxu0 %v6161
      %6339 = vmatmul.mubr.f32.gmra.mxu0 %v6160
      %v6340 = vpop.f32.mrf.mxu0
      %v6341 = vadd.f32 0.0, %v6340
      %v6342 = vpop.f32.mrf.mxu0
      %6343 = vmatprep.mubr.f32.mxu0 %v6163
      %6344 = vmatmul.mubr.f32.gmra.mxu0 %v6162
      %v6345 = vpop.f32.mrf.mxu0
      %v6346 = vadd.f32 0.0, %v6345
      %v6347 = vpop.f32.mrf.mxu0
      %6348 = vmatprep.mubr.f32.mxu0 %v6165
      %6349 = vmatmul.mubr.f32.gmra.mxu0 %v6164
      %v6350 = vpop.f32.mrf.mxu0
      %v6351 = vadd.f32 0.0, %v6350
      %v6352 = vpop.f32.mrf.mxu0
      %6353 = vmatprep.mubr.f32.mxu0 %v6167
      %6354 = vmatmul.mubr.f32.gmra.mxu0 %v6166
      %v6355 = vpop.f32.mrf.mxu0
      %v6356 = vadd.f32 0.0, %v6355
      %v6357 = vpop.f32.mrf.mxu0
      %6358 = vmatprep.mubr.f32.mxu0 %v6169
      %6359 = vmatmul.mubr.f32.gmra.mxu0 %v6168
      %v6360 = vpop.f32.mrf.mxu0
      %v6361 = vadd.f32 0.0, %v6360
      %v6362 = vpop.f32.mrf.mxu0
      %6363 = vmatprep.mubr.f32.mxu0 %v6171
      %6364 = vmatmul.mubr.f32.gmra.mxu0 %v6170
      %v6365 = vpop.f32.mrf.mxu0
      %v6366 = vadd.f32 0.0, %v6365
      %v6367 = vpop.f32.mrf.mxu0
      %6368 = vdwg.mxu0
      %6370 = vset.pattern.permute.xlu0 0
      %6371 = vperm.xlu0 %6370, %v6034
      %v6372 = vpop.permute.xlu0 %6371
      %6375 = vset.pattern.permute.xlu0 0
      %6376 = vperm.xlu0 %6375, %v6039
      %v6377 = vpop.permute.xlu0 %6376
      %6380 = vset.pattern.permute.xlu0 0
      %6381 = vperm.xlu0 %6380, %v6044
      %v6382 = vpop.permute.xlu0 %6381
      %6385 = vset.pattern.permute.xlu0 0
      %6386 = vperm.xlu0 %6385, %v6049
      %v6387 = vpop.permute.xlu0 %6386
      %6390 = vset.pattern.permute.xlu0 0
      %6391 = vperm.xlu0 %6390, %v6054
      %v6392 = vpop.permute.xlu0 %6391
      %6395 = vset.pattern.permute.xlu0 0
      %6396 = vperm.xlu0 %6395, %v6059
      %v6397 = vpop.permute.xlu0 %6396
      %6400 = vset.pattern.permute.xlu0 0
      %6401 = vperm.xlu0 %6400, %v6064
      %v6402 = vpop.permute.xlu0 %6401
      %6405 = vset.pattern.permute.xlu0 0
      %6406 = vperm.xlu0 %6405, %v6069
      %v6407 = vpop.permute.xlu0 %6406
      %6410 = vset.pattern.permute.xlu0 0
      %6411 = vperm.xlu0 %6410, %v6074
      %v6412 = vpop.permute.xlu0 %6411
      %6415 = vset.pattern.permute.xlu0 0
      %6416 = vperm.xlu0 %6415, %v6079
      %v6417 = vpop.permute.xlu0 %6416
      %6420 = vset.pattern.permute.xlu0 0
      %6421 = vperm.xlu0 %6420, %v6084
      %v6422 = vpop.permute.xlu0 %6421
      %6425 = vset.pattern.permute.xlu0 0
      %6426 = vperm.xlu0 %6425, %v6089
      %v6427 = vpop.permute.xlu0 %6426
      %6430 = vset.pattern.permute.xlu0 0
      %6431 = vperm.xlu0 %6430, %v6094
      %v6432 = vpop.permute.xlu0 %6431
      %6435 = vset.pattern.permute.xlu0 0
      %6436 = vperm.xlu0 %6435, %v6099
      %v6437 = vpop.permute.xlu0 %6436
      %6440 = vset.pattern.permute.xlu0 0
      %6441 = vperm.xlu0 %6440, %v6104
      %v6442 = vpop.permute.xlu0 %6441
      %6445 = vset.pattern.permute.xlu0 0
      %6446 = vperm.xlu0 %6445, %v6109
      %v6447 = vpop.permute.xlu0 %6446
      %6450 = vset.pattern.permute.xlu0 0
      %6451 = vperm.xlu0 %6450, %v6114
      %v6452 = vpop.permute.xlu0 %6451
      %6455 = vset.pattern.permute.xlu0 0
      %6456 = vperm.xlu0 %6455, %v6119
      %v6457 = vpop.permute.xlu0 %6456
      %6460 = vset.pattern.permute.xlu0 0
      %6461 = vperm.xlu0 %6460, %v6124
      %v6462 = vpop.permute.xlu0 %6461
      %6465 = vset.pattern.permute.xlu0 0
      %6466 = vperm.xlu0 %6465, %v6129
      %v6467 = vpop.permute.xlu0 %6466
      %v6469 = vadd.f32 %v6372, %v6271
      %v6470 = vadd.f32 %v6377, %v6276
      %v6471 = vadd.f32 %v6382, %v6281
      %v6472 = vadd.f32 %v6387, %v6286
      %v6473 = vadd.f32 %v6392, %v6291
      %v6474 = vadd.f32 %v6397, %v6296
      %v6475 = vadd.f32 %v6402, %v6301
      %v6476 = vadd.f32 %v6407, %v6306
      %v6477 = vadd.f32 %v6412, %v6311
      %v6478 = vadd.f32 %v6417, %v6316
      %v6479 = vadd.f32 %v6422, %v6321
      %v6480 = vadd.f32 %v6427, %v6326
      %v6481 = vadd.f32 %v6432, %v6331
      %v6482 = vadd.f32 %v6437, %v6336
      %v6483 = vadd.f32 %v6442, %v6341
      %v6484 = vadd.f32 %v6447, %v6346
      %v6485 = vadd.f32 %v6452, %v6351
      %v6486 = vadd.f32 %v6457, %v6356
      %v6487 = vadd.f32 %v6462, %v6361
      %v6488 = vadd.f32 %v6467, %v6366
      %v6489 = vld [vmem:[%s12] sm:$0xff]
      %v6490 = vld [vmem:[%s12 + $0x8] sm:$0xff]
      %v6491 = vld [vmem:[%s12 + $0x10] sm:$0xff]
      %v6492 = vld [vmem:[%s12 + $0x18] sm:$0xff]
      %v6493 = vld [vmem:[%s12 + $0x20] sm:$0xff]
      %v6494 = vld [vmem:[%s12 + $0x28] sm:$0xff]
      %v6495 = vld [vmem:[%s12 + $0x30] sm:$0xff]
      %v6496 = vld [vmem:[%s12 + $0x38] sm:$0xff]
      %v6497 = vld [vmem:[%s12 + $0x40] sm:$0xff]
      %v6498 = vld [vmem:[%s12 + $0x48] sm:$0xff]
      %v6499 = vld [vmem:[%s12 + $0x50] sm:$0xff]
      %v6500 = vld [vmem:[%s12 + $0x58] sm:$0xff]
      %v6501 = vld [vmem:[%s12 + $0x60] sm:$0xff]
      %v6502 = vld [vmem:[%s12 + $0x68] sm:$0xff]
      %v6503 = vld [vmem:[%s12 + $0x70] sm:$0xff]
      %v6504 = vld [vmem:[%s12 + $0x78] sm:$0xff]
      %v6505 = vld [vmem:[%s12 + $0x80] sm:$0xff]
      %v6506 = vld [vmem:[%s12 + $0x88] sm:$0xff]
      %v6507 = vld [vmem:[%s12 + $0x90] sm:$0xff]
      %v6508 = vld [vmem:[%s12 + $0x98] sm:$0x1]
      %6510 = vset.pattern.permute.xlu0 0
      %6511 = vperm.xlu0 %6510, %v6489
      %v6512 = vpop.permute.xlu0 %6511
      %6515 = vset.pattern.permute.xlu0 0
      %6516 = vperm.xlu0 %6515, %v6490
      %v6517 = vpop.permute.xlu0 %6516
      %6520 = vset.pattern.permute.xlu0 0
      %6521 = vperm.xlu0 %6520, %v6491
      %v6522 = vpop.permute.xlu0 %6521
      %6525 = vset.pattern.permute.xlu0 0
      %6526 = vperm.xlu0 %6525, %v6492
      %v6527 = vpop.permute.xlu0 %6526
      %6530 = vset.pattern.permute.xlu0 0
      %6531 = vperm.xlu0 %6530, %v6493
      %v6532 = vpop.permute.xlu0 %6531
      %6535 = vset.pattern.permute.xlu0 0
      %6536 = vperm.xlu0 %6535, %v6494
      %v6537 = vpop.permute.xlu0 %6536
      %6540 = vset.pattern.permute.xlu0 0
      %6541 = vperm.xlu0 %6540, %v6495
      %v6542 = vpop.permute.xlu0 %6541
      %6545 = vset.pattern.permute.xlu0 0
      %6546 = vperm.xlu0 %6545, %v6496
      %v6547 = vpop.permute.xlu0 %6546
      %6550 = vset.pattern.permute.xlu0 0
      %6551 = vperm.xlu0 %6550, %v6497
      %v6552 = vpop.permute.xlu0 %6551
      %6555 = vset.pattern.permute.xlu0 0
      %6556 = vperm.xlu0 %6555, %v6498
      %v6557 = vpop.permute.xlu0 %6556
      %6560 = vset.pattern.permute.xlu0 0
      %6561 = vperm.xlu0 %6560, %v6499
      %v6562 = vpop.permute.xlu0 %6561
      %6565 = vset.pattern.permute.xlu0 0
      %6566 = vperm.xlu0 %6565, %v6500
      %v6567 = vpop.permute.xlu0 %6566
      %6570 = vset.pattern.permute.xlu0 0
      %6571 = vperm.xlu0 %6570, %v6501
      %v6572 = vpop.permute.xlu0 %6571
      %6575 = vset.pattern.permute.xlu0 0
      %6576 = vperm.xlu0 %6575, %v6502
      %v6577 = vpop.permute.xlu0 %6576
      %6580 = vset.pattern.permute.xlu0 0
      %6581 = vperm.xlu0 %6580, %v6503
      %v6582 = vpop.permute.xlu0 %6581
      %6585 = vset.pattern.permute.xlu0 0
      %6586 = vperm.xlu0 %6585, %v6504
      %v6587 = vpop.permute.xlu0 %6586
      %6590 = vset.pattern.permute.xlu0 0
      %6591 = vperm.xlu0 %6590, %v6505
      %v6592 = vpop.permute.xlu0 %6591
      %6595 = vset.pattern.permute.xlu0 0
      %6596 = vperm.xlu0 %6595, %v6506
      %v6597 = vpop.permute.xlu0 %6596
      %6600 = vset.pattern.permute.xlu0 0
      %6601 = vperm.xlu0 %6600, %v6507
      %v6602 = vpop.permute.xlu0 %6601
      %6605 = vset.pattern.permute.xlu0 0
      %6606 = vperm.xlu0 %6605, %v6508
      %v6607 = vpop.permute.xlu0 %6606
      %v6609 = vadd.f32 %v6469, %v6512
      %v6610 = vadd.f32 %v6470, %v6517
      %v6611 = vadd.f32 %v6471, %v6522
      %v6612 = vadd.f32 %v6472, %v6527
      %v6613 = vadd.f32 %v6473, %v6532
      %v6614 = vadd.f32 %v6474, %v6537
      %v6615 = vadd.f32 %v6475, %v6542
      %v6616 = vadd.f32 %v6476, %v6547
      %v6617 = vadd.f32 %v6477, %v6552
      %v6618 = vadd.f32 %v6478, %v6557
      %v6619 = vadd.f32 %v6479, %v6562
      %v6620 = vadd.f32 %v6480, %v6567
      %v6621 = vadd.f32 %v6481, %v6572
      %v6622 = vadd.f32 %v6482, %v6577
      %v6623 = vadd.f32 %v6483, %v6582
      %v6624 = vadd.f32 %v6484, %v6587
      %v6625 = vadd.f32 %v6485, %v6592
      %v6626 = vadd.f32 %v6486, %v6597
      %v6627 = vadd.f32 %v6487, %v6602
      %v6628 = vadd.f32 %v6488, %v6607
      %6629 = vst.msk [vmem:[%s437] sm:$0xff] %vm887, %v6609
      %6630 = vst.msk [vmem:[%s437 + $0x8] sm:$0xff] %vm887, %v6610
      %6631 = vst.msk [vmem:[%s437 + $0x10] sm:$0xff] %vm887, %v6611
      %6632 = vst.msk [vmem:[%s437 + $0x18] sm:$0xff] %vm887, %v6612
      %6633 = vst.msk [vmem:[%s437 + $0x20] sm:$0xff] %vm887, %v6613
      %6634 = vst.msk [vmem:[%s437 + $0x28] sm:$0xff] %vm887, %v6614
      %6635 = vst.msk [vmem:[%s437 + $0x30] sm:$0xff] %vm887, %v6615
      %6636 = vst.msk [vmem:[%s437 + $0x38] sm:$0xff] %vm887, %v6616
      %6637 = vst.msk [vmem:[%s437 + $0x40] sm:$0xff] %vm887, %v6617
      %6638 = vst.msk [vmem:[%s437 + $0x48] sm:$0xff] %vm887, %v6618
      %6639 = vst.msk [vmem:[%s437 + $0x50] sm:$0xff] %vm887, %v6619
      %6640 = vst.msk [vmem:[%s437 + $0x58] sm:$0xff] %vm887, %v6620
      %6641 = vst.msk [vmem:[%s437 + $0x60] sm:$0xff] %vm887, %v6621
      %6642 = vst.msk [vmem:[%s437 + $0x68] sm:$0xff] %vm887, %v6622
      %6643 = vst.msk [vmem:[%s437 + $0x70] sm:$0xff] %vm887, %v6623
      %6644 = vst.msk [vmem:[%s437 + $0x78] sm:$0xff] %vm887, %v6624
      %6645 = vst.msk [vmem:[%s437 + $0x80] sm:$0xff] %vm887, %v6625
      %6646 = vst.msk [vmem:[%s437 + $0x88] sm:$0xff] %vm887, %v6626
      %6647 = vst.msk [vmem:[%s437 + $0x90] sm:$0xff] %vm887, %v6627
      %vm6648 = vcmask 24576
      %6649 = vst.msk [vmem:[%s437 + $0x98] sm:$0x1] %vm6648, %v6628
      %p6650 = scmp.lt.s32.totalorder %s24, 1
      %s6651 = scalar_select %p6650, %s24, 1
      %s6652 = smul.addr %s6651, 20
      %s6653 = smul.addr %s6652, 8
      %s6654 = scalar_lea.vmem %s13, %s6653
      // Predicated region
      $region73: #{tpu_custom_call.1} parent=71 // pred_check
        %p6655 = pneg %p320
      $region74: #{tpu_custom_call.1} parent=71 // pred_check_branch
        %6657 = sbr.rel (%p6655) target = $region76
      $region75: #{tpu_custom_call.1} parent=71 // pred_region
        _
      $region76: #{tpu_custom_call.1} parent=71 // pred_fallthru
        _
    $region72: #{tpu_custom_call.1} parent=5 // pred_fallthru
      _
    %p6658 = scmp.le.s32.totalorder 2, %s19
    // Predicated region
    $region77: #{tpu_custom_call.1} parent=5 // pred_check
      %p6659 = pneg %p6658
    $region78: #{tpu_custom_call.1} parent=5 // pred_check_branch
      %6661 = sbr.rel (%p6659) target = $region80
    $region79: #{tpu_custom_call.1} parent=5 // pred_region
      %s6662 = ssub.s32 %s19, 2
      // Predicated region
      $region81: #{tpu_custom_call.1} parent=79 // pred_check
        %p6663 = pneg %p326
      $region82: #{tpu_custom_call.1} parent=79 // pred_check_branch
        %6665 = sbr.rel (%p6663) target = $region84
      $region83: #{tpu_custom_call.1} parent=79 // pred_region
        %p6666 = scmp.lt.s32.totalorder %s25, 1
        %s6667 = scalar_select %p6666, %s25, 1
        %s6668 = smul.addr %s6667, 20
        %s6669 = smul.addr %s6668, 8
        %s6670 = scalar_lea.vmem %s13, %s6669
      $region84: #{tpu_custom_call.1} parent=79 // pred_fallthru
        _
    $region80: #{tpu_custom_call.1} parent=5 // pred_fallthru
      _
  $region6: #{tpu_custom_call.1} parent=0 // loop_footer
    %s23 = sadd.s32 1, %s19
  $region7: #{tpu_custom_call.1} parent=0 // loop_footer_branch
    %18 = sbr.rel target = $region3
  $region8: #{tpu_custom_call.1} parent=0 // loop_exit
    _

</llo_original>
